<compile_context>
chip_gen: v7x
topology: tpu7x:2x2x1
jax: 0.10.0
libtpu: 0.0.40
codegen_flags: <defaults>
</compile_context>

<pallas_src>
import jax
import jax.numpy as jnp
from jax import lax
from jax.experimental import pallas as pl
from jax.experimental.pallas import tpu as pltpu

LN_EPS = 1e-6
_ISSUE_UNROLL = 8          # row-DMA issue unroll (divides every tile size)


def _dual_embed_kernel(src_ids_ref,              # SMEM  (2*B*S_pad,)    int32
                       seg_ref,                  # VMEM  (ts, 1)         int32
                       word0_hbm, word1_hbm,     # HBM   (vocab, H)      word dtype
                       pos_ref,                  # VMEM  (S_pad, H)      resident
                       segtab_ref,               # VMEM  (seg_vocab, H)
                       gamma_ref, beta_ref,      # VMEM  (1, H)          f32
                       out_ref,                  # VMEM  (ts, H)
                       wbuf, sem):               # VMEM (2*ts, H); DMA sems (2,)
    s = pl.program_id(0)                         # stream (0 / 1)
    b = pl.program_id(1)                         # batch row
    j = pl.program_id(2)                         # sequence tile
    nb = pl.num_programs(1)
    nst = pl.num_programs(2)
    ts = out_ref.shape[0]
    s_pad = nst * ts
    n_tok = nb * s_pad                           # per-stream flat id count

    # ---- word-row gather: per-row HBM->VMEM DMAs, all signalling the slot's
    # ---- single DMA semaphore (aggregate wait later). -----------------------
    def issue_tile(jt, slot):
        id_base = s * n_tok + b * s_pad + jt * ts
        buf_base = pl.multiple_of(slot * ts, 8)

        def gather_from(tbl):
            @pl.loop(0, ts // _ISSUE_UNROLL)
            def _(u):
                t0 = pl.multiple_of(u * _ISSUE_UNROLL, _ISSUE_UNROLL)
                for q in range(_ISSUE_UNROLL):   # manual 8-wide unroll
                    t = t0 + q
                    row = src_ids_ref[id_base + t]
                    pltpu.make_async_copy(
                        tbl.at[pl.ds(row, 1), :],
                        wbuf.at[pl.ds(buf_base + t, 1), :],
                        sem.at[slot]).start()

        @pl.when(s == 0)
        def _():
            gather_from(word0_hbm)

        @pl.when(s != 0)
        def _():
            gather_from(word1_hbm)

    slot = j & 1

    # Prime the pipeline at the first tile of each (stream, batch) chain.
    @pl.when(j == 0)
    def _():
        issue_tile(0, 0)

    # Prefetch the NEXT tile's rows into the other slot: the gather latency
    # hides behind this tile's VPU work + writeback.
    @pl.when(j + 1 < nst)
    def _():
        issue_tile(j + 1, 1 - slot)

    # ---- pos + seg contribution on the VPU while the gather DMAs fly --------
    seq0 = pl.multiple_of(j * ts, 8)
    acc = pos_ref[pl.ds(seq0, ts), :].astype(jnp.float32)        # (ts, H)
    seg = seg_ref[...]                                           # (ts, 1)
    for k in range(segtab_ref.shape[0]):                         # short static chain
        acc = jnp.where(seg == k,
                        acc + segtab_ref[k:k + 1, :].astype(jnp.float32),
                        acc)

    # ---- one aggregate wait sized to the whole (ts, H) slot ------------------
    cur = pl.multiple_of(slot * ts, 8)
    slot_view = wbuf.at[pl.ds(cur, ts), :]
    pltpu.make_async_copy(slot_view, slot_view, sem.at[slot]).wait()

    emb = acc + wbuf[pl.ds(cur, ts), :].astype(jnp.float32)

    # ---- LayerNorm over the hidden dim (f32 statistics) ----------------------
    mean = jnp.mean(emb, axis=-1, keepdims=True)
    cen = emb - mean
    var = jnp.mean(cen * cen, axis=-1, keepdims=True)
    norm = cen * lax.rsqrt(var + LN_EPS)
    out_ref[...] = (norm * gamma_ref[...] + beta_ref[...]).astype(out_ref.dtype)


def _plan_tiles(seq_len, hidden, word_bytes, pos_bytes, out_bytes,
                tile_cap=512, vmem_budget=44 << 20):
    """Pick (tile, padded_seq, n_tiles, vmem_estimate).

    Targets ~512-token tiles, pads the sequence to a multiple of the tile and
    shrinks the tile if the per-core VMEM footprint would exceed the budget
    (conservative for v7x's 64 MiB physical VMEM)."""
    rup = lambda x, m: ((x + m - 1) // m) * m
    cap = max(8, rup(min(tile_cap, seq_len), 8))
    nst = pl.cdiv(seq_len, cap)
    while True:
        ts = rup(pl.cdiv(seq_len, nst), 8)
        s_pad = nst * ts
        est = (2 * s_pad * hidden * pos_bytes      # resident pos (pipeline bufs)
               + 2 * ts * hidden * out_bytes       # output blocks
               + 2 * ts * hidden * word_bytes      # gather double buffer
               + 2 * ts * 4                        # segment-id blocks
               + 64 * hidden * 4)                  # seg table + gamma/beta (approx)
        if est <= vmem_budget or ts <= 8:
            return ts, s_pad, nst, est
        nst += 1


def dual_embedding(src_pair, seg_pair, params_0, params_1, *,
                   tie_weights=False, out_dtype=None, tile_cap=512):
    """Mirrors DualEmbedding.forward (eval mode).

    src_pair / seg_pair: tuples of int32 [B, S] arrays (one per stream).
    Table dtypes drive the storage format (pass bf16 tables for bf16 storage);
    LayerNorm statistics are always computed in f32.
    Returns (emb_0, emb_1), each [B, S, H] in `out_dtype` (default: word dtype).
    """
    if tie_weights:
        # Matches the reference: `self.embedding_0 = self.embedding_1`.
        params_0 = params_1

    src0, src1 = src_pair
    seg0, seg1 = seg_pair
    B, S = src0.shape
    word0, word1 = params_0["word"], params_1["word"]
    H = word0.shape[1]
    word_dtype = word0.dtype
    if out_dtype is None:
        out_dtype = word_dtype

    itemsz = lambda d: jnp.dtype(d).itemsize
    ts, S_pad, nst, vmem_est = _plan_tiles(
        S, H, itemsz(word_dtype), itemsz(word_dtype), itemsz(out_dtype),
        tile_cap=tile_cap)
    pad = S_pad - S

    def pad_seq(x):
        return jnp.pad(x, ((0, 0), (0, pad))) if pad else x

    # Token ids -> flat SMEM scalar-prefetch vector (addressing only).
    # TODO(synk): for B*S >~ 100k tokens keep the id array in HBM (pl.ANY) and
    # DMA per-tile id slices into SMEM instead of scalar-prefetching all of it.
    src_flat = jnp.concatenate([pad_seq(src0).reshape(-1),
                                pad_seq(src1).reshape(-1)]).astype(jnp.int32)

    # Segment ids as a (ts, 1) VMEM column per tile (for the vector select).
    seg_ids = jnp.stack([pad_seq(seg0), pad_seq(seg1)]
                        ).reshape(2, B, S_pad, 1).astype(jnp.int32)

    # Resident positional rows per stream: only rows 0..S-1, zero-padded.
    def pos_rows(p):
        rows = p["pos"][:S].astype(word_dtype)
        return jnp.pad(rows, ((0, S_pad - S), (0, 0))) if pad else rows
    pos_tab = jnp.stack([pos_rows(params_0), pos_rows(params_1)])

    seg_tab = jnp.stack([params_0["seg"], params_1["seg"]]).astype(word_dtype)
    gamma = jnp.stack([params_0["gamma"], params_1["gamma"]]).astype(jnp.float32)
    beta = jnp.stack([params_0["beta"], params_1["beta"]]).astype(jnp.float32)
    seg_vocab = seg_tab.shape[1]

    word0 = word0.astype(word_dtype)
    word1 = word1.astype(word_dtype)

    tile_map = lambda s, b, j, ids: (s, b, j, 0)
    strm_map = lambda s, b, j, ids: (s, 0, 0)

    vmem_limit = int(min(max(int(vmem_est * 1.5) + (4 << 20), 32 << 20), 60 << 20))

    out = pl.pallas_call(
        _dual_embed_kernel,
        out_shape=jax.ShapeDtypeStruct((2, B, S_pad, H), out_dtype),
        grid_spec=pltpu.PrefetchScalarGridSpec(
            num_scalar_prefetch=1,
            grid=(2, B, nst),
            in_specs=[
                pl.BlockSpec((None, None, ts, 1), tile_map),     # segment ids
                pl.BlockSpec(memory_space=pl.ANY),               # word table 0 (HBM)
                pl.BlockSpec(memory_space=pl.ANY),               # word table 1 (HBM)
                pl.BlockSpec((None, S_pad, H), strm_map),        # resident pos rows
                pl.BlockSpec((None, seg_vocab, H), strm_map),    # segment table
                pl.BlockSpec((None, 1, H), strm_map),            # gamma
                pl.BlockSpec((None, 1, H), strm_map),            # beta
            ],
            out_specs=pl.BlockSpec((None, None, ts, H), tile_map),
            scratch_shapes=[
                pltpu.VMEM((2 * ts, H), word_dtype),             # gather double buffer
                pltpu.SemaphoreType.DMA((2,)),                   # one sem per slot
            ]),
        compiler_params=pltpu.CompilerParams(
            dimension_semantics=("parallel", "parallel", "arbitrary"),
            vmem_limit_bytes=vmem_limit),
    )(src_flat, seg_ids, word0, word1, pos_tab, seg_tab, gamma, beta)

    # TODO(synk): training-mode dropout (pltpu stateful PRNG) omitted; eval -> identity.
    return out[0, :, :S, :], out[1, :, :S, :]


def make_stream_params(key, vocab_size, max_seq, hidden, seg_vocab=8,
                       dtype=jnp.float32):
    kw, kp, ks = jax.random.split(key, 3)
    return {
        "word": (0.02 * jax.random.normal(kw, (vocab_size, hidden),
                                          jnp.float32)).astype(dtype),
        "pos": (0.02 * jax.random.normal(kp, (max_seq, hidden),
                                         jnp.float32)).astype(dtype),
        "seg": (0.02 * jax.random.normal(ks, (seg_vocab, hidden),
                                         jnp.float32)).astype(dtype),
        "gamma": jnp.ones((1, hidden), jnp.float32),
        "beta": jnp.zeros((1, hidden), jnp.float32),
    }


def ref_stream(src, seg, p):
    """Plain-JAX reference (word_pos_seg embedding + LayerNorm, eval)."""
    S_ = src.shape[1]
    w = p["word"].astype(jnp.float32)
    pos = p["pos"].astype(jnp.float32)
    st = p["seg"].astype(jnp.float32)
    e = w[src] + pos[:S_][None, :, :] + st[seg]
    mu = e.mean(-1, keepdims=True)
    var = ((e - mu) ** 2).mean(-1, keepdims=True)
    n = (e - mu) / jnp.sqrt(var + LN_EPS)
    return n * p["gamma"][0].astype(jnp.float32) + p["beta"][0].astype(jnp.float32)


if __name__ == "__main__":
    key = jax.random.PRNGKey(0)
    k0, k1, ks0, ks1, kg0, kg1, ks2, kg2 = jax.random.split(key, 8)

    B, H, VOCAB, MAX_SEQ = 2, 32, 64, 32
    params_0 = make_stream_params(k0, VOCAB, MAX_SEQ, H)
    params_1 = make_stream_params(k1, VOCAB, MAX_SEQ, H)

    # ---- case 1: single-tile path (S = 8) ------------------------------------
    S = 8
    src_0 = jax.random.randint(ks0, (B, S), 0, VOCAB, dtype=jnp.int32)
    src_1 = jax.random.randint(ks1, (B, S), 0, VOCAB, dtype=jnp.int32)
    seg_0 = jax.random.randint(kg0, (B, S), 0, 3, dtype=jnp.int32)
    seg_1 = jax.random.randint(kg1, (B, S), 0, 3, dtype=jnp.int32)

    emb_0, emb_1 = dual_embedding((src_0, src_1), (seg_0, seg_1),
                                  params_0, params_1)
    jax.block_until_ready((emb_0, emb_1))
    assert emb_0.shape == (B, S, H) and emb_1.shape == (B, S, H)
    assert jnp.allclose(emb_0, ref_stream(src_0, seg_0, params_0), atol=1e-5), \
        "stream 0 mismatch"
    assert jnp.allclose(emb_1, ref_stream(src_1, seg_1, params_1), atol=1e-5), \
        "stream 1 mismatch"

    # ---- case 2: multi-tile chain + padded tail (S = 20, forced tile = 8) ----
    S2 = 20
    src_2 = jax.random.randint(ks2, (B, S2), 0, VOCAB, dtype=jnp.int32)
    seg_2 = jax.random.randint(kg2, (B, S2), 0, 3, dtype=jnp.int32)
    m0, m1 = dual_embedding((src_2, src_2), (seg_2, seg_2),
                            params_0, params_1, tile_cap=8)
    jax.block_until_ready((m0, m1))
    assert m0.shape == (B, S2, H)
    assert jnp.allclose(m0, ref_stream(src_2, seg_2, params_0), atol=1e-5), \
        "multi-tile stream 0 mismatch"
    assert jnp.allclose(m1, ref_stream(src_2, seg_2, params_1), atol=1e-5), \
        "multi-tile stream 1 mismatch"

    # ---- case 3: tie_weights (embedding_0 := embedding_1) --------------------
    t0, t1 = dual_embedding((src_0, src_1), (seg_0, seg_1),
                            params_0, params_1, tie_weights=True)
    jax.block_until_ready((t0, t1))
    assert jnp.allclose(t0, ref_stream(src_0, seg_0, params_1), atol=1e-5), \
        "tied stream 0 mismatch"
    assert jnp.allclose(t1, ref_stream(src_1, seg_1, params_1), atol=1e-5), \
        "tied stream 1 mismatch"

    # ---- case 4: bf16 table / output storage (halved HBM traffic) ------------
    def to_bf16(p):
        q = dict(p)
        for name in ("word", "pos", "seg"):
            q[name] = p[name].astype(jnp.bfloat16)
        return q
    p0_bf, p1_bf = to_bf16(params_0), to_bf16(params_1)
    b0, b1 = dual_embedding((src_0, src_1), (seg_0, seg_1), p0_bf, p1_bf)
    jax.block_until_ready((b0, b1))
    assert b0.dtype == jnp.bfloat16
    assert jnp.allclose(b0.astype(jnp.float32), ref_stream(src_0, seg_0, p0_bf),
                        atol=2e-2), "bf16 stream 0 mismatch"
    assert jnp.allclose(b1.astype(jnp.float32), ref_stream(src_1, seg_1, p1_bf),
                        atol=2e-2), "bf16 stream 1 mismatch"

    print("KERNEL_OK")
</pallas_src>

<mosaic_0001>
module attributes {stable_mosaic.version = 11 : i64} {
  func.func @_dual_embed_kernel(%arg0: i32, %arg1: i32, %arg2: i32, %arg3: memref<32xi32, #tpu.memory_space<smem>>, %arg4: memref<1x1x8x1xi32, #tpu.memory_space<vmem>>, %arg5: memref<64x32xf32, #tpu.memory_space<any>>, %arg6: memref<64x32xf32, #tpu.memory_space<any>>, %arg7: memref<1x8x32xf32, #tpu.memory_space<vmem>>, %arg8: memref<1x8x32xf32, #tpu.memory_space<vmem>>, %arg9: memref<1x1x32xf32, #tpu.memory_space<vmem>>, %arg10: memref<1x1x32xf32, #tpu.memory_space<vmem>>, %arg11: memref<1x1x8x32xf32, #tpu.memory_space<vmem>>, %arg12: memref<16x32xf32, #tpu.memory_space<vmem>>, %arg13: memref<2x!tpu.dma_semaphore, #tpu.memory_space<semaphore_mem>>) attributes {dimension_semantics = [#tpu.dimension_semantics<parallel>, #tpu.dimension_semantics<parallel>, #tpu.dimension_semantics<arbitrary>], iteration_bounds = array<i64: 2, 2, 1>, scalar_prefetch = 1 : i64, scratch_operands = 2 : i64, tpu.core_type = #tpu.core_type<tc>, window_params = [{transform_indices = @transform_0, window_bounds = array<i64: 1, 1, 8, 1>}, {}, {}, {transform_indices = @transform_3, window_bounds = array<i64: 1, 8, 32>}, {transform_indices = @transform_4, window_bounds = array<i64: 1, 8, 32>}, {transform_indices = @transform_5, window_bounds = array<i64: 1, 1, 32>}, {transform_indices = @transform_6, window_bounds = array<i64: 1, 1, 32>}, {transform_indices = @transform_7, window_bounds = array<i64: 1, 1, 8, 32>}]} {
    %c1_i32 = arith.constant 1 : i32
    %0 = arith.andi %arg2, %c1_i32 : i32
    %c0_i32 = arith.constant 0 : i32
    %1 = arith.cmpi eq, %arg2, %c0_i32 : i32
    %2 = arith.extui %1 : i1 to i32
    %c0_i32_0 = arith.constant 0 : i32
    %3 = arith.cmpi ne, %2, %c0_i32_0 : i32
    scf.if %3 {
      %c16_i32 = arith.constant 16 : i32
      %123 = arith.muli %arg0, %c16_i32 : i32
      %c8_i32_46 = arith.constant 8 : i32
      %124 = arith.muli %arg1, %c8_i32_46 : i32
      %125 = arith.addi %123, %124 : i32
      %c0_i32_47 = arith.constant 0 : i32
      %126 = arith.addi %125, %c0_i32_47 : i32
      %c0_i32_48 = arith.constant 0 : i32
      %127 = tpu.assume_multiple %c0_i32_48, 8 : i32
      %c0_i32_49 = arith.constant 0 : i32
      %128 = arith.cmpi eq, %arg0, %c0_i32_49 : i32
      %129 = arith.extui %128 : i1 to i32
      %c0_i32_50 = arith.constant 0 : i32
      %130 = arith.cmpi ne, %129, %c0_i32_50 : i32
      scf.if %130 {
        %c0_i32_53 = arith.constant 0 : i32
        %c1_i32_54 = arith.constant 1 : i32
        %134 = arith.muli %c0_i32_53, %c1_i32_54 : i32
        %c0_i32_55 = arith.constant 0 : i32
        %135 = arith.addi %c0_i32_55, %134 : i32
        %c8_i32_56 = arith.constant 8 : i32
        %136 = arith.muli %135, %c8_i32_56 : i32
        %137 = tpu.assume_multiple %136, 8 : i32
        %c0_i32_57 = arith.constant 0 : i32
        %138 = arith.addi %137, %c0_i32_57 : i32
        %139 = arith.addi %126, %138 : i32
        %140 = arith.index_cast %139 : i32 to index
        %141 = memref.load %arg3[%140] : memref<32xi32, #tpu.memory_space<smem>>
        %142 = arith.addi %127, %138 : i32
        %c0_i32_58 = arith.constant 0 : i32
        %c0_i32_59 = arith.constant 0 : i32
        %143 = tpu.memref_slice %arg5[%141, %c0_i32_59] : memref<64x32xf32, #tpu.memory_space<any>> -> memref<1x32xf32, #tpu.memory_space<any>>
        %c0_i32_60 = arith.constant 0 : i32
        %144 = tpu.memref_slice %arg12[%142, %c0_i32_60] : memref<16x32xf32, #tpu.memory_space<vmem>> -> memref<1x32xf32, #tpu.memory_space<vmem>>
        %145 = tpu.memref_slice %arg13[%c0_i32_58] : memref<2x!tpu.dma_semaphore, #tpu.memory_space<semaphore_mem>> -> memref<1x!tpu.dma_semaphore, #tpu.memory_space<semaphore_mem>>
        %146 = tpu.memref_squeeze %145 : memref<1x!tpu.dma_semaphore, #tpu.memory_space<semaphore_mem>> -> memref<!tpu.dma_semaphore, #tpu.memory_space<semaphore_mem>>
        tpu.enqueue_dma source(%143 : memref<1x32xf32, #tpu.memory_space<any>>) target(%144 : memref<1x32xf32, #tpu.memory_space<vmem>>) target_semaphore(%146 : memref<!tpu.dma_semaphore, #tpu.memory_space<semaphore_mem>>)
        %c1_i32_61 = arith.constant 1 : i32
        %147 = arith.addi %137, %c1_i32_61 : i32
        %148 = arith.addi %126, %147 : i32
        %149 = arith.index_cast %148 : i32 to index
        %150 = memref.load %arg3[%149] : memref<32xi32, #tpu.memory_space<smem>>
        %151 = arith.addi %127, %147 : i32
        %c0_i32_62 = arith.constant 0 : i32
        %c0_i32_63 = arith.constant 0 : i32
        %152 = tpu.memref_slice %arg5[%150, %c0_i32_63] : memref<64x32xf32, #tpu.memory_space<any>> -> memref<1x32xf32, #tpu.memory_space<any>>
        %c0_i32_64 = arith.constant 0 : i32
        %153 = tpu.memref_slice %arg12[%151, %c0_i32_64] : memref<16x32xf32, #tpu.memory_space<vmem>> -> memref<1x32xf32, #tpu.memory_space<vmem>>
        %154 = tpu.memref_slice %arg13[%c0_i32_62] : memref<2x!tpu.dma_semaphore, #tpu.memory_space<semaphore_mem>> -> memref<1x!tpu.dma_semaphore, #tpu.memory_space<semaphore_mem>>
        %155 = tpu.memref_squeeze %154 : memref<1x!tpu.dma_semaphore, #tpu.memory_space<semaphore_mem>> -> memref<!tpu.dma_semaphore, #tpu.memory_space<semaphore_mem>>
        tpu.enqueue_dma source(%152 : memref<1x32xf32, #tpu.memory_space<any>>) target(%153 : memref<1x32xf32, #tpu.memory_space<vmem>>) target_semaphore(%155 : memref<!tpu.dma_semaphore, #tpu.memory_space<semaphore_mem>>)
        %c2_i32_65 = arith.constant 2 : i32
        %156 = arith.addi %137, %c2_i32_65 : i32
        %157 = arith.addi %126, %156 : i32
        %158 = arith.index_cast %157 : i32 to index
        %159 = memref.load %arg3[%158] : memref<32xi32, #tpu.memory_space<smem>>
        %160 = arith.addi %127, %156 : i32
        %c0_i32_66 = arith.constant 0 : i32
        %c0_i32_67 = arith.constant 0 : i32
        %161 = tpu.memref_slice %arg5[%159, %c0_i32_67] : memref<64x32xf32, #tpu.memory_space<any>> -> memref<1x32xf32, #tpu.memory_space<any>>
        %c0_i32_68 = arith.constant 0 : i32
        %162 = tpu.memref_slice %arg12[%160, %c0_i32_68] : memref<16x32xf32, #tpu.memory_space<vmem>> -> memref<1x32xf32, #tpu.memory_space<vmem>>
        %163 = tpu.memref_slice %arg13[%c0_i32_66] : memref<2x!tpu.dma_semaphore, #tpu.memory_space<semaphore_mem>> -> memref<1x!tpu.dma_semaphore, #tpu.memory_space<semaphore_mem>>
        %164 = tpu.memref_squeeze %163 : memref<1x!tpu.dma_semaphore, #tpu.memory_space<semaphore_mem>> -> memref<!tpu.dma_semaphore, #tpu.memory_space<semaphore_mem>>
        tpu.enqueue_dma source(%161 : memref<1x32xf32, #tpu.memory_space<any>>) target(%162 : memref<1x32xf32, #tpu.memory_space<vmem>>) target_semaphore(%164 : memref<!tpu.dma_semaphore, #tpu.memory_space<semaphore_mem>>)
        %c3_i32_69 = arith.constant 3 : i32
        %165 = arith.addi %137, %c3_i32_69 : i32
        %166 = arith.addi %126, %165 : i32
        %167 = arith.index_cast %166 : i32 to index
        %168 = memref.load %arg3[%167] : memref<32xi32, #tpu.memory_space<smem>>
        %169 = arith.addi %127, %165 : i32
        %c0_i32_70 = arith.constant 0 : i32
        %c0_i32_71 = arith.constant 0 : i32
        %170 = tpu.memref_slice %arg5[%168, %c0_i32_71] : memref<64x32xf32, #tpu.memory_space<any>> -> memref<1x32xf32, #tpu.memory_space<any>>
        %c0_i32_72 = arith.constant 0 : i32
        %171 = tpu.memref_slice %arg12[%169, %c0_i32_72] : memref<16x32xf32, #tpu.memory_space<vmem>> -> memref<1x32xf32, #tpu.memory_space<vmem>>
        %172 = tpu.memref_slice %arg13[%c0_i32_70] : memref<2x!tpu.dma_semaphore, #tpu.memory_space<semaphore_mem>> -> memref<1x!tpu.dma_semaphore, #tpu.memory_space<semaphore_mem>>
        %173 = tpu.memref_squeeze %172 : memref<1x!tpu.dma_semaphore, #tpu.memory_space<semaphore_mem>> -> memref<!tpu.dma_semaphore, #tpu.memory_space<semaphore_mem>>
        tpu.enqueue_dma source(%170 : memref<1x32xf32, #tpu.memory_space<any>>) target(%171 : memref<1x32xf32, #tpu.memory_space<vmem>>) target_semaphore(%173 : memref<!tpu.dma_semaphore, #tpu.memory_space<semaphore_mem>>)
        %c4_i32_73 = arith.constant 4 : i32
        %174 = arith.addi %137, %c4_i32_73 : i32
        %175 = arith.addi %126, %174 : i32
        %176 = arith.index_cast %175 : i32 to index
        %177 = memref.load %arg3[%176] : memref<32xi32, #tpu.memory_space<smem>>
        %178 = arith.addi %127, %174 : i32
        %c0_i32_74 = arith.constant 0 : i32
        %c0_i32_75 = arith.constant 0 : i32
        %179 = tpu.memref_slice %arg5[%177, %c0_i32_75] : memref<64x32xf32, #tpu.memory_space<any>> -> memref<1x32xf32, #tpu.memory_space<any>>
        %c0_i32_76 = arith.constant 0 : i32
        %180 = tpu.memref_slice %arg12[%178, %c0_i32_76] : memref<16x32xf32, #tpu.memory_space<vmem>> -> memref<1x32xf32, #tpu.memory_space<vmem>>
        %181 = tpu.memref_slice %arg13[%c0_i32_74] : memref<2x!tpu.dma_semaphore, #tpu.memory_space<semaphore_mem>> -> memref<1x!tpu.dma_semaphore, #tpu.memory_space<semaphore_mem>>
        %182 = tpu.memref_squeeze %181 : memref<1x!tpu.dma_semaphore, #tpu.memory_space<semaphore_mem>> -> memref<!tpu.dma_semaphore, #tpu.memory_space<semaphore_mem>>
        tpu.enqueue_dma source(%179 : memref<1x32xf32, #tpu.memory_space<any>>) target(%180 : memref<1x32xf32, #tpu.memory_space<vmem>>) target_semaphore(%182 : memref<!tpu.dma_semaphore, #tpu.memory_space<semaphore_mem>>)
        %c5_i32_77 = arith.constant 5 : i32
        %183 = arith.addi %137, %c5_i32_77 : i32
        %184 = arith.addi %126, %183 : i32
        %185 = arith.index_cast %184 : i32 to index
        %186 = memref.load %arg3[%185] : memref<32xi32, #tpu.memory_space<smem>>
        %187 = arith.addi %127, %183 : i32
        %c0_i32_78 = arith.constant 0 : i32
        %c0_i32_79 = arith.constant 0 : i32
        %188 = tpu.memref_slice %arg5[%186, %c0_i32_79] : memref<64x32xf32, #tpu.memory_space<any>> -> memref<1x32xf32, #tpu.memory_space<any>>
        %c0_i32_80 = arith.constant 0 : i32
        %189 = tpu.memref_slice %arg12[%187, %c0_i32_80] : memref<16x32xf32, #tpu.memory_space<vmem>> -> memref<1x32xf32, #tpu.memory_space<vmem>>
        %190 = tpu.memref_slice %arg13[%c0_i32_78] : memref<2x!tpu.dma_semaphore, #tpu.memory_space<semaphore_mem>> -> memref<1x!tpu.dma_semaphore, #tpu.memory_space<semaphore_mem>>
        %191 = tpu.memref_squeeze %190 : memref<1x!tpu.dma_semaphore, #tpu.memory_space<semaphore_mem>> -> memref<!tpu.dma_semaphore, #tpu.memory_space<semaphore_mem>>
        tpu.enqueue_dma source(%188 : memref<1x32xf32, #tpu.memory_space<any>>) target(%189 : memref<1x32xf32, #tpu.memory_space<vmem>>) target_semaphore(%191 : memref<!tpu.dma_semaphore, #tpu.memory_space<semaphore_mem>>)
        %c6_i32_81 = arith.constant 6 : i32
        %192 = arith.addi %137, %c6_i32_81 : i32
        %193 = arith.addi %126, %192 : i32
        %194 = arith.index_cast %193 : i32 to index
        %195 = memref.load %arg3[%194] : memref<32xi32, #tpu.memory_space<smem>>
        %196 = arith.addi %127, %192 : i32
        %c0_i32_82 = arith.constant 0 : i32
        %c0_i32_83 = arith.constant 0 : i32
        %197 = tpu.memref_slice %arg5[%195, %c0_i32_83] : memref<64x32xf32, #tpu.memory_space<any>> -> memref<1x32xf32, #tpu.memory_space<any>>
        %c0_i32_84 = arith.constant 0 : i32
        %198 = tpu.memref_slice %arg12[%196, %c0_i32_84] : memref<16x32xf32, #tpu.memory_space<vmem>> -> memref<1x32xf32, #tpu.memory_space<vmem>>
        %199 = tpu.memref_slice %arg13[%c0_i32_82] : memref<2x!tpu.dma_semaphore, #tpu.memory_space<semaphore_mem>> -> memref<1x!tpu.dma_semaphore, #tpu.memory_space<semaphore_mem>>
        %200 = tpu.memref_squeeze %199 : memref<1x!tpu.dma_semaphore, #tpu.memory_space<semaphore_mem>> -> memref<!tpu.dma_semaphore, #tpu.memory_space<semaphore_mem>>
        tpu.enqueue_dma source(%197 : memref<1x32xf32, #tpu.memory_space<any>>) target(%198 : memref<1x32xf32, #tpu.memory_space<vmem>>) target_semaphore(%200 : memref<!tpu.dma_semaphore, #tpu.memory_space<semaphore_mem>>)
        %c7_i32_85 = arith.constant 7 : i32
        %201 = arith.addi %137, %c7_i32_85 : i32
        %202 = arith.addi %126, %201 : i32
        %203 = arith.index_cast %202 : i32 to index
        %204 = memref.load %arg3[%203] : memref<32xi32, #tpu.memory_space<smem>>
        %205 = arith.addi %127, %201 : i32
        %c0_i32_86 = arith.constant 0 : i32
        %c0_i32_87 = arith.constant 0 : i32
        %206 = tpu.memref_slice %arg5[%204, %c0_i32_87] : memref<64x32xf32, #tpu.memory_space<any>> -> memref<1x32xf32, #tpu.memory_space<any>>
        %c0_i32_88 = arith.constant 0 : i32
        %207 = tpu.memref_slice %arg12[%205, %c0_i32_88] : memref<16x32xf32, #tpu.memory_space<vmem>> -> memref<1x32xf32, #tpu.memory_space<vmem>>
        %208 = tpu.memref_slice %arg13[%c0_i32_86] : memref<2x!tpu.dma_semaphore, #tpu.memory_space<semaphore_mem>> -> memref<1x!tpu.dma_semaphore, #tpu.memory_space<semaphore_mem>>
        %209 = tpu.memref_squeeze %208 : memref<1x!tpu.dma_semaphore, #tpu.memory_space<semaphore_mem>> -> memref<!tpu.dma_semaphore, #tpu.memory_space<semaphore_mem>>
        tpu.enqueue_dma source(%206 : memref<1x32xf32, #tpu.memory_space<any>>) target(%207 : memref<1x32xf32, #tpu.memory_space<vmem>>) target_semaphore(%209 : memref<!tpu.dma_semaphore, #tpu.memory_space<semaphore_mem>>)
        %c1_i32_89 = arith.constant 1 : i32
      } else {
      }
      %c0_i32_51 = arith.constant 0 : i32
      %131 = arith.cmpi ne, %arg0, %c0_i32_51 : i32
      %132 = arith.extui %131 : i1 to i32
      %c0_i32_52 = arith.constant 0 : i32
      %133 = arith.cmpi ne, %132, %c0_i32_52 : i32
      scf.if %133 {
        %c0_i32_53 = arith.constant 0 : i32
        %c1_i32_54 = arith.constant 1 : i32
        %134 = arith.muli %c0_i32_53, %c1_i32_54 : i32
        %c0_i32_55 = arith.constant 0 : i32
        %135 = arith.addi %c0_i32_55, %134 : i32
        %c8_i32_56 = arith.constant 8 : i32
        %136 = arith.muli %135, %c8_i32_56 : i32
        %137 = tpu.assume_multiple %136, 8 : i32
        %c0_i32_57 = arith.constant 0 : i32
        %138 = arith.addi %137, %c0_i32_57 : i32
        %139 = arith.addi %126, %138 : i32
        %140 = arith.index_cast %139 : i32 to index
        %141 = memref.load %arg3[%140] : memref<32xi32, #tpu.memory_space<smem>>
        %142 = arith.addi %127, %138 : i32
        %c0_i32_58 = arith.constant 0 : i32
        %c0_i32_59 = arith.constant 0 : i32
        %143 = tpu.memref_slice %arg6[%141, %c0_i32_59] : memref<64x32xf32, #tpu.memory_space<any>> -> memref<1x32xf32, #tpu.memory_space<any>>
        %c0_i32_60 = arith.constant 0 : i32
        %144 = tpu.memref_slice %arg12[%142, %c0_i32_60] : memref<16x32xf32, #tpu.memory_space<vmem>> -> memref<1x32xf32, #tpu.memory_space<vmem>>
        %145 = tpu.memref_slice %arg13[%c0_i32_58] : memref<2x!tpu.dma_semaphore, #tpu.memory_space<semaphore_mem>> -> memref<1x!tpu.dma_semaphore, #tpu.memory_space<semaphore_mem>>
        %146 = tpu.memref_squeeze %145 : memref<1x!tpu.dma_semaphore, #tpu.memory_space<semaphore_mem>> -> memref<!tpu.dma_semaphore, #tpu.memory_space<semaphore_mem>>
        tpu.enqueue_dma source(%143 : memref<1x32xf32, #tpu.memory_space<any>>) target(%144 : memref<1x32xf32, #tpu.memory_space<vmem>>) target_semaphore(%146 : memref<!tpu.dma_semaphore, #tpu.memory_space<semaphore_mem>>)
        %c1_i32_61 = arith.constant 1 : i32
        %147 = arith.addi %137, %c1_i32_61 : i32
        %148 = arith.addi %126, %147 : i32
        %149 = arith.index_cast %148 : i32 to index
        %150 = memref.load %arg3[%149] : memref<32xi32, #tpu.memory_space<smem>>
        %151 = arith.addi %127, %147 : i32
        %c0_i32_62 = arith.constant 0 : i32
        %c0_i32_63 = arith.constant 0 : i32
        %152 = tpu.memref_slice %arg6[%150, %c0_i32_63] : memref<64x32xf32, #tpu.memory_space<any>> -> memref<1x32xf32, #tpu.memory_space<any>>
        %c0_i32_64 = arith.constant 0 : i32
        %153 = tpu.memref_slice %arg12[%151, %c0_i32_64] : memref<16x32xf32, #tpu.memory_space<vmem>> -> memref<1x32xf32, #tpu.memory_space<vmem>>
        %154 = tpu.memref_slice %arg13[%c0_i32_62] : memref<2x!tpu.dma_semaphore, #tpu.memory_space<semaphore_mem>> -> memref<1x!tpu.dma_semaphore, #tpu.memory_space<semaphore_mem>>
        %155 = tpu.memref_squeeze %154 : memref<1x!tpu.dma_semaphore, #tpu.memory_space<semaphore_mem>> -> memref<!tpu.dma_semaphore, #tpu.memory_space<semaphore_mem>>
        tpu.enqueue_dma source(%152 : memref<1x32xf32, #tpu.memory_space<any>>) target(%153 : memref<1x32xf32, #tpu.memory_space<vmem>>) target_semaphore(%155 : memref<!tpu.dma_semaphore, #tpu.memory_space<semaphore_mem>>)
        %c2_i32_65 = arith.constant 2 : i32
        %156 = arith.addi %137, %c2_i32_65 : i32
        %157 = arith.addi %126, %156 : i32
        %158 = arith.index_cast %157 : i32 to index
        %159 = memref.load %arg3[%158] : memref<32xi32, #tpu.memory_space<smem>>
        %160 = arith.addi %127, %156 : i32
        %c0_i32_66 = arith.constant 0 : i32
        %c0_i32_67 = arith.constant 0 : i32
        %161 = tpu.memref_slice %arg6[%159, %c0_i32_67] : memref<64x32xf32, #tpu.memory_space<any>> -> memref<1x32xf32, #tpu.memory_space<any>>
        %c0_i32_68 = arith.constant 0 : i32
        %162 = tpu.memref_slice %arg12[%160, %c0_i32_68] : memref<16x32xf32, #tpu.memory_space<vmem>> -> memref<1x32xf32, #tpu.memory_space<vmem>>
        %163 = tpu.memref_slice %arg13[%c0_i32_66] : memref<2x!tpu.dma_semaphore, #tpu.memory_space<semaphore_mem>> -> memref<1x!tpu.dma_semaphore, #tpu.memory_space<semaphore_mem>>
        %164 = tpu.memref_squeeze %163 : memref<1x!tpu.dma_semaphore, #tpu.memory_space<semaphore_mem>> -> memref<!tpu.dma_semaphore, #tpu.memory_space<semaphore_mem>>
        tpu.enqueue_dma source(%161 : memref<1x32xf32, #tpu.memory_space<any>>) target(%162 : memref<1x32xf32, #tpu.memory_space<vmem>>) target_semaphore(%164 : memref<!tpu.dma_semaphore, #tpu.memory_space<semaphore_mem>>)
        %c3_i32_69 = arith.constant 3 : i32
        %165 = arith.addi %137, %c3_i32_69 : i32
        %166 = arith.addi %126, %165 : i32
        %167 = arith.index_cast %166 : i32 to index
        %168 = memref.load %arg3[%167] : memref<32xi32, #tpu.memory_space<smem>>
        %169 = arith.addi %127, %165 : i32
        %c0_i32_70 = arith.constant 0 : i32
        %c0_i32_71 = arith.constant 0 : i32
        %170 = tpu.memref_slice %arg6[%168, %c0_i32_71] : memref<64x32xf32, #tpu.memory_space<any>> -> memref<1x32xf32, #tpu.memory_space<any>>
        %c0_i32_72 = arith.constant 0 : i32
        %171 = tpu.memref_slice %arg12[%169, %c0_i32_72] : memref<16x32xf32, #tpu.memory_space<vmem>> -> memref<1x32xf32, #tpu.memory_space<vmem>>
        %172 = tpu.memref_slice %arg13[%c0_i32_70] : memref<2x!tpu.dma_semaphore, #tpu.memory_space<semaphore_mem>> -> memref<1x!tpu.dma_semaphore, #tpu.memory_space<semaphore_mem>>
        %173 = tpu.memref_squeeze %172 : memref<1x!tpu.dma_semaphore, #tpu.memory_space<semaphore_mem>> -> memref<!tpu.dma_semaphore, #tpu.memory_space<semaphore_mem>>
        tpu.enqueue_dma source(%170 : memref<1x32xf32, #tpu.memory_space<any>>) target(%171 : memref<1x32xf32, #tpu.memory_space<vmem>>) target_semaphore(%173 : memref<!tpu.dma_semaphore, #tpu.memory_space<semaphore_mem>>)
        %c4_i32_73 = arith.constant 4 : i32
        %174 = arith.addi %137, %c4_i32_73 : i32
        %175 = arith.addi %126, %174 : i32
        %176 = arith.index_cast %175 : i32 to index
        %177 = memref.load %arg3[%176] : memref<32xi32, #tpu.memory_space<smem>>
        %178 = arith.addi %127, %174 : i32
        %c0_i32_74 = arith.constant 0 : i32
        %c0_i32_75 = arith.constant 0 : i32
        %179 = tpu.memref_slice %arg6[%177, %c0_i32_75] : memref<64x32xf32, #tpu.memory_space<any>> -> memref<1x32xf32, #tpu.memory_space<any>>
        %c0_i32_76 = arith.constant 0 : i32
        %180 = tpu.memref_slice %arg12[%178, %c0_i32_76] : memref<16x32xf32, #tpu.memory_space<vmem>> -> memref<1x32xf32, #tpu.memory_space<vmem>>
        %181 = tpu.memref_slice %arg13[%c0_i32_74] : memref<2x!tpu.dma_semaphore, #tpu.memory_space<semaphore_mem>> -> memref<1x!tpu.dma_semaphore, #tpu.memory_space<semaphore_mem>>
        %182 = tpu.memref_squeeze %181 : memref<1x!tpu.dma_semaphore, #tpu.memory_space<semaphore_mem>> -> memref<!tpu.dma_semaphore, #tpu.memory_space<semaphore_mem>>
        tpu.enqueue_dma source(%179 : memref<1x32xf32, #tpu.memory_space<any>>) target(%180 : memref<1x32xf32, #tpu.memory_space<vmem>>) target_semaphore(%182 : memref<!tpu.dma_semaphore, #tpu.memory_space<semaphore_mem>>)
        %c5_i32_77 = arith.constant 5 : i32
        %183 = arith.addi %137, %c5_i32_77 : i32
        %184 = arith.addi %126, %183 : i32
        %185 = arith.index_cast %184 : i32 to index
        %186 = memref.load %arg3[%185] : memref<32xi32, #tpu.memory_space<smem>>
        %187 = arith.addi %127, %183 : i32
        %c0_i32_78 = arith.constant 0 : i32
        %c0_i32_79 = arith.constant 0 : i32
        %188 = tpu.memref_slice %arg6[%186, %c0_i32_79] : memref<64x32xf32, #tpu.memory_space<any>> -> memref<1x32xf32, #tpu.memory_space<any>>
        %c0_i32_80 = arith.constant 0 : i32
        %189 = tpu.memref_slice %arg12[%187, %c0_i32_80] : memref<16x32xf32, #tpu.memory_space<vmem>> -> memref<1x32xf32, #tpu.memory_space<vmem>>
        %190 = tpu.memref_slice %arg13[%c0_i32_78] : memref<2x!tpu.dma_semaphore, #tpu.memory_space<semaphore_mem>> -> memref<1x!tpu.dma_semaphore, #tpu.memory_space<semaphore_mem>>
        %191 = tpu.memref_squeeze %190 : memref<1x!tpu.dma_semaphore, #tpu.memory_space<semaphore_mem>> -> memref<!tpu.dma_semaphore, #tpu.memory_space<semaphore_mem>>
        tpu.enqueue_dma source(%188 : memref<1x32xf32, #tpu.memory_space<any>>) target(%189 : memref<1x32xf32, #tpu.memory_space<vmem>>) target_semaphore(%191 : memref<!tpu.dma_semaphore, #tpu.memory_space<semaphore_mem>>)
        %c6_i32_81 = arith.constant 6 : i32
        %192 = arith.addi %137, %c6_i32_81 : i32
        %193 = arith.addi %126, %192 : i32
        %194 = arith.index_cast %193 : i32 to index
        %195 = memref.load %arg3[%194] : memref<32xi32, #tpu.memory_space<smem>>
        %196 = arith.addi %127, %192 : i32
        %c0_i32_82 = arith.constant 0 : i32
        %c0_i32_83 = arith.constant 0 : i32
        %197 = tpu.memref_slice %arg6[%195, %c0_i32_83] : memref<64x32xf32, #tpu.memory_space<any>> -> memref<1x32xf32, #tpu.memory_space<any>>
        %c0_i32_84 = arith.constant 0 : i32
        %198 = tpu.memref_slice %arg12[%196, %c0_i32_84] : memref<16x32xf32, #tpu.memory_space<vmem>> -> memref<1x32xf32, #tpu.memory_space<vmem>>
        %199 = tpu.memref_slice %arg13[%c0_i32_82] : memref<2x!tpu.dma_semaphore, #tpu.memory_space<semaphore_mem>> -> memref<1x!tpu.dma_semaphore, #tpu.memory_space<semaphore_mem>>
        %200 = tpu.memref_squeeze %199 : memref<1x!tpu.dma_semaphore, #tpu.memory_space<semaphore_mem>> -> memref<!tpu.dma_semaphore, #tpu.memory_space<semaphore_mem>>
        tpu.enqueue_dma source(%197 : memref<1x32xf32, #tpu.memory_space<any>>) target(%198 : memref<1x32xf32, #tpu.memory_space<vmem>>) target_semaphore(%200 : memref<!tpu.dma_semaphore, #tpu.memory_space<semaphore_mem>>)
        %c7_i32_85 = arith.constant 7 : i32
        %201 = arith.addi %137, %c7_i32_85 : i32
        %202 = arith.addi %126, %201 : i32
        %203 = arith.index_cast %202 : i32 to index
        %204 = memref.load %arg3[%203] : memref<32xi32, #tpu.memory_space<smem>>
        %205 = arith.addi %127, %201 : i32
        %c0_i32_86 = arith.constant 0 : i32
        %c0_i32_87 = arith.constant 0 : i32
        %206 = tpu.memref_slice %arg6[%204, %c0_i32_87] : memref<64x32xf32, #tpu.memory_space<any>> -> memref<1x32xf32, #tpu.memory_space<any>>
        %c0_i32_88 = arith.constant 0 : i32
        %207 = tpu.memref_slice %arg12[%205, %c0_i32_88] : memref<16x32xf32, #tpu.memory_space<vmem>> -> memref<1x32xf32, #tpu.memory_space<vmem>>
        %208 = tpu.memref_slice %arg13[%c0_i32_86] : memref<2x!tpu.dma_semaphore, #tpu.memory_space<semaphore_mem>> -> memref<1x!tpu.dma_semaphore, #tpu.memory_space<semaphore_mem>>
        %209 = tpu.memref_squeeze %208 : memref<1x!tpu.dma_semaphore, #tpu.memory_space<semaphore_mem>> -> memref<!tpu.dma_semaphore, #tpu.memory_space<semaphore_mem>>
        tpu.enqueue_dma source(%206 : memref<1x32xf32, #tpu.memory_space<any>>) target(%207 : memref<1x32xf32, #tpu.memory_space<vmem>>) target_semaphore(%209 : memref<!tpu.dma_semaphore, #tpu.memory_space<semaphore_mem>>)
        %c1_i32_89 = arith.constant 1 : i32
      } else {
      }
    } else {
    }
    %c1_i32_1 = arith.constant 1 : i32
    %4 = arith.addi %arg2, %c1_i32_1 : i32
    %c1_i32_2 = arith.constant 1 : i32
    %5 = arith.cmpi slt, %4, %c1_i32_2 : i32
    %6 = arith.extui %5 : i1 to i32
    %c0_i32_3 = arith.constant 0 : i32
    %7 = arith.cmpi ne, %6, %c0_i32_3 : i32
    scf.if %7 {
      %c1_i32_46 = arith.constant 1 : i32
      %123 = arith.addi %arg2, %c1_i32_46 : i32
      %c1_i32_47 = arith.constant 1 : i32
      %124 = arith.subi %c1_i32_47, %0 : i32
      %c16_i32 = arith.constant 16 : i32
      %125 = arith.muli %arg0, %c16_i32 : i32
      %c8_i32_48 = arith.constant 8 : i32
      %126 = arith.muli %arg1, %c8_i32_48 : i32
      %127 = arith.addi %125, %126 : i32
      %c8_i32_49 = arith.constant 8 : i32
      %128 = arith.muli %123, %c8_i32_49 : i32
      %129 = arith.addi %127, %128 : i32
      %c8_i32_50 = arith.constant 8 : i32
      %130 = arith.muli %124, %c8_i32_50 : i32
      %131 = tpu.assume_multiple %130, 8 : i32
      %c0_i32_51 = arith.constant 0 : i32
      %132 = arith.cmpi eq, %arg0, %c0_i32_51 : i32
      %133 = arith.extui %132 : i1 to i32
      %c0_i32_52 = arith.constant 0 : i32
      %134 = arith.cmpi ne, %133, %c0_i32_52 : i32
      scf.if %134 {
        %c0_i32_55 = arith.constant 0 : i32
        %c1_i32_56 = arith.constant 1 : i32
        %138 = arith.muli %c0_i32_55, %c1_i32_56 : i32
        %c0_i32_57 = arith.constant 0 : i32
        %139 = arith.addi %c0_i32_57, %138 : i32
        %c8_i32_58 = arith.constant 8 : i32
        %140 = arith.muli %139, %c8_i32_58 : i32
        %141 = tpu.assume_multiple %140, 8 : i32
        %c0_i32_59 = arith.constant 0 : i32
        %142 = arith.addi %141, %c0_i32_59 : i32
        %143 = arith.addi %129, %142 : i32
        %144 = arith.index_cast %143 : i32 to index
        %145 = memref.load %arg3[%144] : memref<32xi32, #tpu.memory_space<smem>>
        %146 = arith.addi %131, %142 : i32
        %c0_i32_60 = arith.constant 0 : i32
        %147 = tpu.memref_slice %arg5[%145, %c0_i32_60] : memref<64x32xf32, #tpu.memory_space<any>> -> memref<1x32xf32, #tpu.memory_space<any>>
        %c0_i32_61 = arith.constant 0 : i32
        %148 = tpu.memref_slice %arg12[%146, %c0_i32_61] : memref<16x32xf32, #tpu.memory_space<vmem>> -> memref<1x32xf32, #tpu.memory_space<vmem>>
        %149 = tpu.memref_slice %arg13[%124] : memref<2x!tpu.dma_semaphore, #tpu.memory_space<semaphore_mem>> -> memref<1x!tpu.dma_semaphore, #tpu.memory_space<semaphore_mem>>
        %150 = tpu.memref_squeeze %149 : memref<1x!tpu.dma_semaphore, #tpu.memory_space<semaphore_mem>> -> memref<!tpu.dma_semaphore, #tpu.memory_space<semaphore_mem>>
        tpu.enqueue_dma source(%147 : memref<1x32xf32, #tpu.memory_space<any>>) target(%148 : memref<1x32xf32, #tpu.memory_space<vmem>>) target_semaphore(%150 : memref<!tpu.dma_semaphore, #tpu.memory_space<semaphore_mem>>)
        %c1_i32_62 = arith.constant 1 : i32
        %151 = arith.addi %141, %c1_i32_62 : i32
        %152 = arith.addi %129, %151 : i32
        %153 = arith.index_cast %152 : i32 to index
        %154 = memref.load %arg3[%153] : memref<32xi32, #tpu.memory_space<smem>>
        %155 = arith.addi %131, %151 : i32
        %c0_i32_63 = arith.constant 0 : i32
        %156 = tpu.memref_slice %arg5[%154, %c0_i32_63] : memref<64x32xf32, #tpu.memory_space<any>> -> memref<1x32xf32, #tpu.memory_space<any>>
        %c0_i32_64 = arith.constant 0 : i32
        %157 = tpu.memref_slice %arg12[%155, %c0_i32_64] : memref<16x32xf32, #tpu.memory_space<vmem>> -> memref<1x32xf32, #tpu.memory_space<vmem>>
        %158 = tpu.memref_slice %arg13[%124] : memref<2x!tpu.dma_semaphore, #tpu.memory_space<semaphore_mem>> -> memref<1x!tpu.dma_semaphore, #tpu.memory_space<semaphore_mem>>
        %159 = tpu.memref_squeeze %158 : memref<1x!tpu.dma_semaphore, #tpu.memory_space<semaphore_mem>> -> memref<!tpu.dma_semaphore, #tpu.memory_space<semaphore_mem>>
        tpu.enqueue_dma source(%156 : memref<1x32xf32, #tpu.memory_space<any>>) target(%157 : memref<1x32xf32, #tpu.memory_space<vmem>>) target_semaphore(%159 : memref<!tpu.dma_semaphore, #tpu.memory_space<semaphore_mem>>)
        %c2_i32_65 = arith.constant 2 : i32
        %160 = arith.addi %141, %c2_i32_65 : i32
        %161 = arith.addi %129, %160 : i32
        %162 = arith.index_cast %161 : i32 to index
        %163 = memref.load %arg3[%162] : memref<32xi32, #tpu.memory_space<smem>>
        %164 = arith.addi %131, %160 : i32
        %c0_i32_66 = arith.constant 0 : i32
        %165 = tpu.memref_slice %arg5[%163, %c0_i32_66] : memref<64x32xf32, #tpu.memory_space<any>> -> memref<1x32xf32, #tpu.memory_space<any>>
        %c0_i32_67 = arith.constant 0 : i32
        %166 = tpu.memref_slice %arg12[%164, %c0_i32_67] : memref<16x32xf32, #tpu.memory_space<vmem>> -> memref<1x32xf32, #tpu.memory_space<vmem>>
        %167 = tpu.memref_slice %arg13[%124] : memref<2x!tpu.dma_semaphore, #tpu.memory_space<semaphore_mem>> -> memref<1x!tpu.dma_semaphore, #tpu.memory_space<semaphore_mem>>
        %168 = tpu.memref_squeeze %167 : memref<1x!tpu.dma_semaphore, #tpu.memory_space<semaphore_mem>> -> memref<!tpu.dma_semaphore, #tpu.memory_space<semaphore_mem>>
        tpu.enqueue_dma source(%165 : memref<1x32xf32, #tpu.memory_space<any>>) target(%166 : memref<1x32xf32, #tpu.memory_space<vmem>>) target_semaphore(%168 : memref<!tpu.dma_semaphore, #tpu.memory_space<semaphore_mem>>)
        %c3_i32_68 = arith.constant 3 : i32
        %169 = arith.addi %141, %c3_i32_68 : i32
        %170 = arith.addi %129, %169 : i32
        %171 = arith.index_cast %170 : i32 to index
        %172 = memref.load %arg3[%171] : memref<32xi32, #tpu.memory_space<smem>>
        %173 = arith.addi %131, %169 : i32
        %c0_i32_69 = arith.constant 0 : i32
        %174 = tpu.memref_slice %arg5[%172, %c0_i32_69] : memref<64x32xf32, #tpu.memory_space<any>> -> memref<1x32xf32, #tpu.memory_space<any>>
        %c0_i32_70 = arith.constant 0 : i32
        %175 = tpu.memref_slice %arg12[%173, %c0_i32_70] : memref<16x32xf32, #tpu.memory_space<vmem>> -> memref<1x32xf32, #tpu.memory_space<vmem>>
        %176 = tpu.memref_slice %arg13[%124] : memref<2x!tpu.dma_semaphore, #tpu.memory_space<semaphore_mem>> -> memref<1x!tpu.dma_semaphore, #tpu.memory_space<semaphore_mem>>
        %177 = tpu.memref_squeeze %176 : memref<1x!tpu.dma_semaphore, #tpu.memory_space<semaphore_mem>> -> memref<!tpu.dma_semaphore, #tpu.memory_space<semaphore_mem>>
        tpu.enqueue_dma source(%174 : memref<1x32xf32, #tpu.memory_space<any>>) target(%175 : memref<1x32xf32, #tpu.memory_space<vmem>>) target_semaphore(%177 : memref<!tpu.dma_semaphore, #tpu.memory_space<semaphore_mem>>)
        %c4_i32_71 = arith.constant 4 : i32
        %178 = arith.addi %141, %c4_i32_71 : i32
        %179 = arith.addi %129, %178 : i32
        %180 = arith.index_cast %179 : i32 to index
        %181 = memref.load %arg3[%180] : memref<32xi32, #tpu.memory_space<smem>>
        %182 = arith.addi %131, %178 : i32
        %c0_i32_72 = arith.constant 0 : i32
        %183 = tpu.memref_slice %arg5[%181, %c0_i32_72] : memref<64x32xf32, #tpu.memory_space<any>> -> memref<1x32xf32, #tpu.memory_space<any>>
        %c0_i32_73 = arith.constant 0 : i32
        %184 = tpu.memref_slice %arg12[%182, %c0_i32_73] : memref<16x32xf32, #tpu.memory_space<vmem>> -> memref<1x32xf32, #tpu.memory_space<vmem>>
        %185 = tpu.memref_slice %arg13[%124] : memref<2x!tpu.dma_semaphore, #tpu.memory_space<semaphore_mem>> -> memref<1x!tpu.dma_semaphore, #tpu.memory_space<semaphore_mem>>
        %186 = tpu.memref_squeeze %185 : memref<1x!tpu.dma_semaphore, #tpu.memory_space<semaphore_mem>> -> memref<!tpu.dma_semaphore, #tpu.memory_space<semaphore_mem>>
        tpu.enqueue_dma source(%183 : memref<1x32xf32, #tpu.memory_space<any>>) target(%184 : memref<1x32xf32, #tpu.memory_space<vmem>>) target_semaphore(%186 : memref<!tpu.dma_semaphore, #tpu.memory_space<semaphore_mem>>)
        %c5_i32_74 = arith.constant 5 : i32
        %187 = arith.addi %141, %c5_i32_74 : i32
        %188 = arith.addi %129, %187 : i32
        %189 = arith.index_cast %188 : i32 to index
        %190 = memref.load %arg3[%189] : memref<32xi32, #tpu.memory_space<smem>>
        %191 = arith.addi %131, %187 : i32
        %c0_i32_75 = arith.constant 0 : i32
        %192 = tpu.memref_slice %arg5[%190, %c0_i32_75] : memref<64x32xf32, #tpu.memory_space<any>> -> memref<1x32xf32, #tpu.memory_space<any>>
        %c0_i32_76 = arith.constant 0 : i32
        %193 = tpu.memref_slice %arg12[%191, %c0_i32_76] : memref<16x32xf32, #tpu.memory_space<vmem>> -> memref<1x32xf32, #tpu.memory_space<vmem>>
        %194 = tpu.memref_slice %arg13[%124] : memref<2x!tpu.dma_semaphore, #tpu.memory_space<semaphore_mem>> -> memref<1x!tpu.dma_semaphore, #tpu.memory_space<semaphore_mem>>
        %195 = tpu.memref_squeeze %194 : memref<1x!tpu.dma_semaphore, #tpu.memory_space<semaphore_mem>> -> memref<!tpu.dma_semaphore, #tpu.memory_space<semaphore_mem>>
        tpu.enqueue_dma source(%192 : memref<1x32xf32, #tpu.memory_space<any>>) target(%193 : memref<1x32xf32, #tpu.memory_space<vmem>>) target_semaphore(%195 : memref<!tpu.dma_semaphore, #tpu.memory_space<semaphore_mem>>)
        %c6_i32_77 = arith.constant 6 : i32
        %196 = arith.addi %141, %c6_i32_77 : i32
        %197 = arith.addi %129, %196 : i32
        %198 = arith.index_cast %197 : i32 to index
        %199 = memref.load %arg3[%198] : memref<32xi32, #tpu.memory_space<smem>>
        %200 = arith.addi %131, %196 : i32
        %c0_i32_78 = arith.constant 0 : i32
        %201 = tpu.memref_slice %arg5[%199, %c0_i32_78] : memref<64x32xf32, #tpu.memory_space<any>> -> memref<1x32xf32, #tpu.memory_space<any>>
        %c0_i32_79 = arith.constant 0 : i32
        %202 = tpu.memref_slice %arg12[%200, %c0_i32_79] : memref<16x32xf32, #tpu.memory_space<vmem>> -> memref<1x32xf32, #tpu.memory_space<vmem>>
        %203 = tpu.memref_slice %arg13[%124] : memref<2x!tpu.dma_semaphore, #tpu.memory_space<semaphore_mem>> -> memref<1x!tpu.dma_semaphore, #tpu.memory_space<semaphore_mem>>
        %204 = tpu.memref_squeeze %203 : memref<1x!tpu.dma_semaphore, #tpu.memory_space<semaphore_mem>> -> memref<!tpu.dma_semaphore, #tpu.memory_space<semaphore_mem>>
        tpu.enqueue_dma source(%201 : memref<1x32xf32, #tpu.memory_space<any>>) target(%202 : memref<1x32xf32, #tpu.memory_space<vmem>>) target_semaphore(%204 : memref<!tpu.dma_semaphore, #tpu.memory_space<semaphore_mem>>)
        %c7_i32_80 = arith.constant 7 : i32
        %205 = arith.addi %141, %c7_i32_80 : i32
        %206 = arith.addi %129, %205 : i32
        %207 = arith.index_cast %206 : i32 to index
        %208 = memref.load %arg3[%207] : memref<32xi32, #tpu.memory_space<smem>>
        %209 = arith.addi %131, %205 : i32
        %c0_i32_81 = arith.constant 0 : i32
        %210 = tpu.memref_slice %arg5[%208, %c0_i32_81] : memref<64x32xf32, #tpu.memory_space<any>> -> memref<1x32xf32, #tpu.memory_space<any>>
        %c0_i32_82 = arith.constant 0 : i32
        %211 = tpu.memref_slice %arg12[%209, %c0_i32_82] : memref<16x32xf32, #tpu.memory_space<vmem>> -> memref<1x32xf32, #tpu.memory_space<vmem>>
        %212 = tpu.memref_slice %arg13[%124] : memref<2x!tpu.dma_semaphore, #tpu.memory_space<semaphore_mem>> -> memref<1x!tpu.dma_semaphore, #tpu.memory_space<semaphore_mem>>
        %213 = tpu.memref_squeeze %212 : memref<1x!tpu.dma_semaphore, #tpu.memory_space<semaphore_mem>> -> memref<!tpu.dma_semaphore, #tpu.memory_space<semaphore_mem>>
        tpu.enqueue_dma source(%210 : memref<1x32xf32, #tpu.memory_space<any>>) target(%211 : memref<1x32xf32, #tpu.memory_space<vmem>>) target_semaphore(%213 : memref<!tpu.dma_semaphore, #tpu.memory_space<semaphore_mem>>)
        %c1_i32_83 = arith.constant 1 : i32
      } else {
      }
      %c0_i32_53 = arith.constant 0 : i32
      %135 = arith.cmpi ne, %arg0, %c0_i32_53 : i32
      %136 = arith.extui %135 : i1 to i32
      %c0_i32_54 = arith.constant 0 : i32
      %137 = arith.cmpi ne, %136, %c0_i32_54 : i32
      scf.if %137 {
        %c0_i32_55 = arith.constant 0 : i32
        %c1_i32_56 = arith.constant 1 : i32
        %138 = arith.muli %c0_i32_55, %c1_i32_56 : i32
        %c0_i32_57 = arith.constant 0 : i32
        %139 = arith.addi %c0_i32_57, %138 : i32
        %c8_i32_58 = arith.constant 8 : i32
        %140 = arith.muli %139, %c8_i32_58 : i32
        %141 = tpu.assume_multiple %140, 8 : i32
        %c0_i32_59 = arith.constant 0 : i32
        %142 = arith.addi %141, %c0_i32_59 : i32
        %143 = arith.addi %129, %142 : i32
        %144 = arith.index_cast %143 : i32 to index
        %145 = memref.load %arg3[%144] : memref<32xi32, #tpu.memory_space<smem>>
        %146 = arith.addi %131, %142 : i32
        %c0_i32_60 = arith.constant 0 : i32
        %147 = tpu.memref_slice %arg6[%145, %c0_i32_60] : memref<64x32xf32, #tpu.memory_space<any>> -> memref<1x32xf32, #tpu.memory_space<any>>
        %c0_i32_61 = arith.constant 0 : i32
        %148 = tpu.memref_slice %arg12[%146, %c0_i32_61] : memref<16x32xf32, #tpu.memory_space<vmem>> -> memref<1x32xf32, #tpu.memory_space<vmem>>
        %149 = tpu.memref_slice %arg13[%124] : memref<2x!tpu.dma_semaphore, #tpu.memory_space<semaphore_mem>> -> memref<1x!tpu.dma_semaphore, #tpu.memory_space<semaphore_mem>>
        %150 = tpu.memref_squeeze %149 : memref<1x!tpu.dma_semaphore, #tpu.memory_space<semaphore_mem>> -> memref<!tpu.dma_semaphore, #tpu.memory_space<semaphore_mem>>
        tpu.enqueue_dma source(%147 : memref<1x32xf32, #tpu.memory_space<any>>) target(%148 : memref<1x32xf32, #tpu.memory_space<vmem>>) target_semaphore(%150 : memref<!tpu.dma_semaphore, #tpu.memory_space<semaphore_mem>>)
        %c1_i32_62 = arith.constant 1 : i32
        %151 = arith.addi %141, %c1_i32_62 : i32
        %152 = arith.addi %129, %151 : i32
        %153 = arith.index_cast %152 : i32 to index
        %154 = memref.load %arg3[%153] : memref<32xi32, #tpu.memory_space<smem>>
        %155 = arith.addi %131, %151 : i32
        %c0_i32_63 = arith.constant 0 : i32
        %156 = tpu.memref_slice %arg6[%154, %c0_i32_63] : memref<64x32xf32, #tpu.memory_space<any>> -> memref<1x32xf32, #tpu.memory_space<any>>
        %c0_i32_64 = arith.constant 0 : i32
        %157 = tpu.memref_slice %arg12[%155, %c0_i32_64] : memref<16x32xf32, #tpu.memory_space<vmem>> -> memref<1x32xf32, #tpu.memory_space<vmem>>
        %158 = tpu.memref_slice %arg13[%124] : memref<2x!tpu.dma_semaphore, #tpu.memory_space<semaphore_mem>> -> memref<1x!tpu.dma_semaphore, #tpu.memory_space<semaphore_mem>>
        %159 = tpu.memref_squeeze %158 : memref<1x!tpu.dma_semaphore, #tpu.memory_space<semaphore_mem>> -> memref<!tpu.dma_semaphore, #tpu.memory_space<semaphore_mem>>
        tpu.enqueue_dma source(%156 : memref<1x32xf32, #tpu.memory_space<any>>) target(%157 : memref<1x32xf32, #tpu.memory_space<vmem>>) target_semaphore(%159 : memref<!tpu.dma_semaphore, #tpu.memory_space<semaphore_mem>>)
        %c2_i32_65 = arith.constant 2 : i32
        %160 = arith.addi %141, %c2_i32_65 : i32
        %161 = arith.addi %129, %160 : i32
        %162 = arith.index_cast %161 : i32 to index
        %163 = memref.load %arg3[%162] : memref<32xi32, #tpu.memory_space<smem>>
        %164 = arith.addi %131, %160 : i32
        %c0_i32_66 = arith.constant 0 : i32
        %165 = tpu.memref_slice %arg6[%163, %c0_i32_66] : memref<64x32xf32, #tpu.memory_space<any>> -> memref<1x32xf32, #tpu.memory_space<any>>
        %c0_i32_67 = arith.constant 0 : i32
        %166 = tpu.memref_slice %arg12[%164, %c0_i32_67] : memref<16x32xf32, #tpu.memory_space<vmem>> -> memref<1x32xf32, #tpu.memory_space<vmem>>
        %167 = tpu.memref_slice %arg13[%124] : memref<2x!tpu.dma_semaphore, #tpu.memory_space<semaphore_mem>> -> memref<1x!tpu.dma_semaphore, #tpu.memory_space<semaphore_mem>>
        %168 = tpu.memref_squeeze %167 : memref<1x!tpu.dma_semaphore, #tpu.memory_space<semaphore_mem>> -> memref<!tpu.dma_semaphore, #tpu.memory_space<semaphore_mem>>
        tpu.enqueue_dma source(%165 : memref<1x32xf32, #tpu.memory_space<any>>) target(%166 : memref<1x32xf32, #tpu.memory_space<vmem>>) target_semaphore(%168 : memref<!tpu.dma_semaphore, #tpu.memory_space<semaphore_mem>>)
        %c3_i32_68 = arith.constant 3 : i32
        %169 = arith.addi %141, %c3_i32_68 : i32
        %170 = arith.addi %129, %169 : i32
        %171 = arith.index_cast %170 : i32 to index
        %172 = memref.load %arg3[%171] : memref<32xi32, #tpu.memory_space<smem>>
        %173 = arith.addi %131, %169 : i32
        %c0_i32_69 = arith.constant 0 : i32
        %174 = tpu.memref_slice %arg6[%172, %c0_i32_69] : memref<64x32xf32, #tpu.memory_space<any>> -> memref<1x32xf32, #tpu.memory_space<any>>
        %c0_i32_70 = arith.constant 0 : i32
        %175 = tpu.memref_slice %arg12[%173, %c0_i32_70] : memref<16x32xf32, #tpu.memory_space<vmem>> -> memref<1x32xf32, #tpu.memory_space<vmem>>
        %176 = tpu.memref_slice %arg13[%124] : memref<2x!tpu.dma_semaphore, #tpu.memory_space<semaphore_mem>> -> memref<1x!tpu.dma_semaphore, #tpu.memory_space<semaphore_mem>>
        %177 = tpu.memref_squeeze %176 : memref<1x!tpu.dma_semaphore, #tpu.memory_space<semaphore_mem>> -> memref<!tpu.dma_semaphore, #tpu.memory_space<semaphore_mem>>
        tpu.enqueue_dma source(%174 : memref<1x32xf32, #tpu.memory_space<any>>) target(%175 : memref<1x32xf32, #tpu.memory_space<vmem>>) target_semaphore(%177 : memref<!tpu.dma_semaphore, #tpu.memory_space<semaphore_mem>>)
        %c4_i32_71 = arith.constant 4 : i32
        %178 = arith.addi %141, %c4_i32_71 : i32
        %179 = arith.addi %129, %178 : i32
        %180 = arith.index_cast %179 : i32 to index
        %181 = memref.load %arg3[%180] : memref<32xi32, #tpu.memory_space<smem>>
        %182 = arith.addi %131, %178 : i32
        %c0_i32_72 = arith.constant 0 : i32
        %183 = tpu.memref_slice %arg6[%181, %c0_i32_72] : memref<64x32xf32, #tpu.memory_space<any>> -> memref<1x32xf32, #tpu.memory_space<any>>
        %c0_i32_73 = arith.constant 0 : i32
        %184 = tpu.memref_slice %arg12[%182, %c0_i32_73] : memref<16x32xf32, #tpu.memory_space<vmem>> -> memref<1x32xf32, #tpu.memory_space<vmem>>
        %185 = tpu.memref_slice %arg13[%124] : memref<2x!tpu.dma_semaphore, #tpu.memory_space<semaphore_mem>> -> memref<1x!tpu.dma_semaphore, #tpu.memory_space<semaphore_mem>>
        %186 = tpu.memref_squeeze %185 : memref<1x!tpu.dma_semaphore, #tpu.memory_space<semaphore_mem>> -> memref<!tpu.dma_semaphore, #tpu.memory_space<semaphore_mem>>
        tpu.enqueue_dma source(%183 : memref<1x32xf32, #tpu.memory_space<any>>) target(%184 : memref<1x32xf32, #tpu.memory_space<vmem>>) target_semaphore(%186 : memref<!tpu.dma_semaphore, #tpu.memory_space<semaphore_mem>>)
        %c5_i32_74 = arith.constant 5 : i32
        %187 = arith.addi %141, %c5_i32_74 : i32
        %188 = arith.addi %129, %187 : i32
        %189 = arith.index_cast %188 : i32 to index
        %190 = memref.load %arg3[%189] : memref<32xi32, #tpu.memory_space<smem>>
        %191 = arith.addi %131, %187 : i32
        %c0_i32_75 = arith.constant 0 : i32
        %192 = tpu.memref_slice %arg6[%190, %c0_i32_75] : memref<64x32xf32, #tpu.memory_space<any>> -> memref<1x32xf32, #tpu.memory_space<any>>
        %c0_i32_76 = arith.constant 0 : i32
        %193 = tpu.memref_slice %arg12[%191, %c0_i32_76] : memref<16x32xf32, #tpu.memory_space<vmem>> -> memref<1x32xf32, #tpu.memory_space<vmem>>
        %194 = tpu.memref_slice %arg13[%124] : memref<2x!tpu.dma_semaphore, #tpu.memory_space<semaphore_mem>> -> memref<1x!tpu.dma_semaphore, #tpu.memory_space<semaphore_mem>>
        %195 = tpu.memref_squeeze %194 : memref<1x!tpu.dma_semaphore, #tpu.memory_space<semaphore_mem>> -> memref<!tpu.dma_semaphore, #tpu.memory_space<semaphore_mem>>
        tpu.enqueue_dma source(%192 : memref<1x32xf32, #tpu.memory_space<any>>) target(%193 : memref<1x32xf32, #tpu.memory_space<vmem>>) target_semaphore(%195 : memref<!tpu.dma_semaphore, #tpu.memory_space<semaphore_mem>>)
        %c6_i32_77 = arith.constant 6 : i32
        %196 = arith.addi %141, %c6_i32_77 : i32
        %197 = arith.addi %129, %196 : i32
        %198 = arith.index_cast %197 : i32 to index
        %199 = memref.load %arg3[%198] : memref<32xi32, #tpu.memory_space<smem>>
        %200 = arith.addi %131, %196 : i32
        %c0_i32_78 = arith.constant 0 : i32
        %201 = tpu.memref_slice %arg6[%199, %c0_i32_78] : memref<64x32xf32, #tpu.memory_space<any>> -> memref<1x32xf32, #tpu.memory_space<any>>
        %c0_i32_79 = arith.constant 0 : i32
        %202 = tpu.memref_slice %arg12[%200, %c0_i32_79] : memref<16x32xf32, #tpu.memory_space<vmem>> -> memref<1x32xf32, #tpu.memory_space<vmem>>
        %203 = tpu.memref_slice %arg13[%124] : memref<2x!tpu.dma_semaphore, #tpu.memory_space<semaphore_mem>> -> memref<1x!tpu.dma_semaphore, #tpu.memory_space<semaphore_mem>>
        %204 = tpu.memref_squeeze %203 : memref<1x!tpu.dma_semaphore, #tpu.memory_space<semaphore_mem>> -> memref<!tpu.dma_semaphore, #tpu.memory_space<semaphore_mem>>
        tpu.enqueue_dma source(%201 : memref<1x32xf32, #tpu.memory_space<any>>) target(%202 : memref<1x32xf32, #tpu.memory_space<vmem>>) target_semaphore(%204 : memref<!tpu.dma_semaphore, #tpu.memory_space<semaphore_mem>>)
        %c7_i32_80 = arith.constant 7 : i32
        %205 = arith.addi %141, %c7_i32_80 : i32
        %206 = arith.addi %129, %205 : i32
        %207 = arith.index_cast %206 : i32 to index
        %208 = memref.load %arg3[%207] : memref<32xi32, #tpu.memory_space<smem>>
        %209 = arith.addi %131, %205 : i32
        %c0_i32_81 = arith.constant 0 : i32
        %210 = tpu.memref_slice %arg6[%208, %c0_i32_81] : memref<64x32xf32, #tpu.memory_space<any>> -> memref<1x32xf32, #tpu.memory_space<any>>
        %c0_i32_82 = arith.constant 0 : i32
        %211 = tpu.memref_slice %arg12[%209, %c0_i32_82] : memref<16x32xf32, #tpu.memory_space<vmem>> -> memref<1x32xf32, #tpu.memory_space<vmem>>
        %212 = tpu.memref_slice %arg13[%124] : memref<2x!tpu.dma_semaphore, #tpu.memory_space<semaphore_mem>> -> memref<1x!tpu.dma_semaphore, #tpu.memory_space<semaphore_mem>>
        %213 = tpu.memref_squeeze %212 : memref<1x!tpu.dma_semaphore, #tpu.memory_space<semaphore_mem>> -> memref<!tpu.dma_semaphore, #tpu.memory_space<semaphore_mem>>
        tpu.enqueue_dma source(%210 : memref<1x32xf32, #tpu.memory_space<any>>) target(%211 : memref<1x32xf32, #tpu.memory_space<vmem>>) target_semaphore(%213 : memref<!tpu.dma_semaphore, #tpu.memory_space<semaphore_mem>>)
        %c1_i32_83 = arith.constant 1 : i32
      } else {
      }
    } else {
    }
    %c8_i32 = arith.constant 8 : i32
    %8 = arith.muli %arg2, %c8_i32 : i32
    %9 = tpu.assume_multiple %8, 8 : i32
    %c0 = arith.constant 0 : index
    %10 = arith.index_cast %9 : i32 to index
    %c0_4 = arith.constant 0 : index
    %11 = vector.load %arg7[%c0, %10, %c0_4] : memref<1x8x32xf32, #tpu.memory_space<vmem>>, vector<1x8x32xf32>
    %12 = vector.shape_cast %11 : vector<1x8x32xf32> to vector<8x32xf32>
    %c0_5 = arith.constant 0 : index
    %c0_6 = arith.constant 0 : index
    %c0_7 = arith.constant 0 : index
    %c0_8 = arith.constant 0 : index
    %13 = vector.load %arg4[%c0_5, %c0_6, %c0_7, %c0_8] : memref<1x1x8x1xi32, #tpu.memory_space<vmem>>, vector<1x1x8x1xi32>
    %14 = vector.shape_cast %13 : vector<1x1x8x1xi32> to vector<8x1xi32>
    %c0_i32_9 = arith.constant 0 : i32
    %15 = vector.broadcast %c0_i32_9 : i32 to vector<8x1xi32>
    %16 = arith.cmpi eq, %14, %15 : vector<8x1xi32>
    %c0_10 = arith.constant 0 : index
    %c0_11 = arith.constant 0 : index
    %c0_12 = arith.constant 0 : index
    %17 = vector.load %arg8[%c0_10, %c0_11, %c0_12] : memref<1x8x32xf32, #tpu.memory_space<vmem>>, vector<1x1x32xf32>
    %18 = vector.shape_cast %17 : vector<1x1x32xf32> to vector<1x32xf32>
    %19 = vector.broadcast %18 : vector<1x32xf32> to vector<8x32xf32>
    %20 = arith.addf %12, %19 : vector<8x32xf32>
    %21 = vector.shape_cast %16 : vector<8x1xi1> to vector<8x1xi1>
    %22 = vector.broadcast %21 : vector<8x1xi1> to vector<8x32xi1>
    %23 = arith.select %22, %20, %12 : vector<8x32xi1>, vector<8x32xf32>
    %c1_i32_13 = arith.constant 1 : i32
    %24 = vector.broadcast %c1_i32_13 : i32 to vector<8x1xi32>
    %25 = arith.cmpi eq, %14, %24 : vector<8x1xi32>
    %c0_14 = arith.constant 0 : index
    %c1 = arith.constant 1 : index
    %c0_15 = arith.constant 0 : index
    %26 = vector.load %arg8[%c0_14, %c1, %c0_15] : memref<1x8x32xf32, #tpu.memory_space<vmem>>, vector<1x1x32xf32>
    %27 = vector.shape_cast %26 : vector<1x1x32xf32> to vector<1x32xf32>
    %28 = vector.broadcast %27 : vector<1x32xf32> to vector<8x32xf32>
    %29 = arith.addf %23, %28 : vector<8x32xf32>
    %30 = vector.shape_cast %25 : vector<8x1xi1> to vector<8x1xi1>
    %31 = vector.broadcast %30 : vector<8x1xi1> to vector<8x32xi1>
    %32 = arith.select %31, %29, %23 : vector<8x32xi1>, vector<8x32xf32>
    %c2_i32 = arith.constant 2 : i32
    %33 = vector.broadcast %c2_i32 : i32 to vector<8x1xi32>
    %34 = arith.cmpi eq, %14, %33 : vector<8x1xi32>
    %c0_16 = arith.constant 0 : index
    %c2 = arith.constant 2 : index
    %c0_17 = arith.constant 0 : index
    %35 = vector.load %arg8[%c0_16, %c2, %c0_17] : memref<1x8x32xf32, #tpu.memory_space<vmem>>, vector<1x1x32xf32>
    %36 = vector.shape_cast %35 : vector<1x1x32xf32> to vector<1x32xf32>
    %37 = vector.broadcast %36 : vector<1x32xf32> to vector<8x32xf32>
    %38 = arith.addf %32, %37 : vector<8x32xf32>
    %39 = vector.shape_cast %34 : vector<8x1xi1> to vector<8x1xi1>
    %40 = vector.broadcast %39 : vector<8x1xi1> to vector<8x32xi1>
    %41 = arith.select %40, %38, %32 : vector<8x32xi1>, vector<8x32xf32>
    %c3_i32 = arith.constant 3 : i32
    %42 = vector.broadcast %c3_i32 : i32 to vector<8x1xi32>
    %43 = arith.cmpi eq, %14, %42 : vector<8x1xi32>
    %c0_18 = arith.constant 0 : index
    %c3 = arith.constant 3 : index
    %c0_19 = arith.constant 0 : index
    %44 = vector.load %arg8[%c0_18, %c3, %c0_19] : memref<1x8x32xf32, #tpu.memory_space<vmem>>, vector<1x1x32xf32>
    %45 = vector.shape_cast %44 : vector<1x1x32xf32> to vector<1x32xf32>
    %46 = vector.broadcast %45 : vector<1x32xf32> to vector<8x32xf32>
    %47 = arith.addf %41, %46 : vector<8x32xf32>
    %48 = vector.shape_cast %43 : vector<8x1xi1> to vector<8x1xi1>
    %49 = vector.broadcast %48 : vector<8x1xi1> to vector<8x32xi1>
    %50 = arith.select %49, %47, %41 : vector<8x32xi1>, vector<8x32xf32>
    %c4_i32 = arith.constant 4 : i32
    %51 = vector.broadcast %c4_i32 : i32 to vector<8x1xi32>
    %52 = arith.cmpi eq, %14, %51 : vector<8x1xi32>
    %c0_20 = arith.constant 0 : index
    %c4 = arith.constant 4 : index
    %c0_21 = arith.constant 0 : index
    %53 = vector.load %arg8[%c0_20, %c4, %c0_21] : memref<1x8x32xf32, #tpu.memory_space<vmem>>, vector<1x1x32xf32>
    %54 = vector.shape_cast %53 : vector<1x1x32xf32> to vector<1x32xf32>
    %55 = vector.broadcast %54 : vector<1x32xf32> to vector<8x32xf32>
    %56 = arith.addf %50, %55 : vector<8x32xf32>
    %57 = vector.shape_cast %52 : vector<8x1xi1> to vector<8x1xi1>
    %58 = vector.broadcast %57 : vector<8x1xi1> to vector<8x32xi1>
    %59 = arith.select %58, %56, %50 : vector<8x32xi1>, vector<8x32xf32>
    %c5_i32 = arith.constant 5 : i32
    %60 = vector.broadcast %c5_i32 : i32 to vector<8x1xi32>
    %61 = arith.cmpi eq, %14, %60 : vector<8x1xi32>
    %c0_22 = arith.constant 0 : index
    %c5 = arith.constant 5 : index
    %c0_23 = arith.constant 0 : index
    %62 = vector.load %arg8[%c0_22, %c5, %c0_23] : memref<1x8x32xf32, #tpu.memory_space<vmem>>, vector<1x1x32xf32>
    %63 = vector.shape_cast %62 : vector<1x1x32xf32> to vector<1x32xf32>
    %64 = vector.broadcast %63 : vector<1x32xf32> to vector<8x32xf32>
    %65 = arith.addf %59, %64 : vector<8x32xf32>
    %66 = vector.shape_cast %61 : vector<8x1xi1> to vector<8x1xi1>
    %67 = vector.broadcast %66 : vector<8x1xi1> to vector<8x32xi1>
    %68 = arith.select %67, %65, %59 : vector<8x32xi1>, vector<8x32xf32>
    %c6_i32 = arith.constant 6 : i32
    %69 = vector.broadcast %c6_i32 : i32 to vector<8x1xi32>
    %70 = arith.cmpi eq, %14, %69 : vector<8x1xi32>
    %c0_24 = arith.constant 0 : index
    %c6 = arith.constant 6 : index
    %c0_25 = arith.constant 0 : index
    %71 = vector.load %arg8[%c0_24, %c6, %c0_25] : memref<1x8x32xf32, #tpu.memory_space<vmem>>, vector<1x1x32xf32>
    %72 = vector.shape_cast %71 : vector<1x1x32xf32> to vector<1x32xf32>
    %73 = vector.broadcast %72 : vector<1x32xf32> to vector<8x32xf32>
    %74 = arith.addf %68, %73 : vector<8x32xf32>
    %75 = vector.shape_cast %70 : vector<8x1xi1> to vector<8x1xi1>
    %76 = vector.broadcast %75 : vector<8x1xi1> to vector<8x32xi1>
    %77 = arith.select %76, %74, %68 : vector<8x32xi1>, vector<8x32xf32>
    %c7_i32 = arith.constant 7 : i32
    %78 = vector.broadcast %c7_i32 : i32 to vector<8x1xi32>
    %79 = arith.cmpi eq, %14, %78 : vector<8x1xi32>
    %c0_26 = arith.constant 0 : index
    %c7 = arith.constant 7 : index
    %c0_27 = arith.constant 0 : index
    %80 = vector.load %arg8[%c0_26, %c7, %c0_27] : memref<1x8x32xf32, #tpu.memory_space<vmem>>, vector<1x1x32xf32>
    %81 = vector.shape_cast %80 : vector<1x1x32xf32> to vector<1x32xf32>
    %82 = vector.broadcast %81 : vector<1x32xf32> to vector<8x32xf32>
    %83 = arith.addf %77, %82 : vector<8x32xf32>
    %84 = vector.shape_cast %79 : vector<8x1xi1> to vector<8x1xi1>
    %85 = vector.broadcast %84 : vector<8x1xi1> to vector<8x32xi1>
    %86 = arith.select %85, %83, %77 : vector<8x32xi1>, vector<8x32xf32>
    %c8_i32_28 = arith.constant 8 : i32
    %87 = arith.muli %0, %c8_i32_28 : i32
    %88 = tpu.assume_multiple %87, 8 : i32
    %c0_i32_29 = arith.constant 0 : i32
    %89 = tpu.memref_slice %arg12[%88, %c0_i32_29] : memref<16x32xf32, #tpu.memory_space<vmem>> -> memref<8x32xf32, #tpu.memory_space<vmem>>
    %c0_i32_30 = arith.constant 0 : i32
    %90 = tpu.memref_slice %arg12[%88, %c0_i32_30] : memref<16x32xf32, #tpu.memory_space<vmem>> -> memref<8x32xf32, #tpu.memory_space<vmem>>
    %91 = tpu.memref_slice %arg13[%0] : memref<2x!tpu.dma_semaphore, #tpu.memory_space<semaphore_mem>> -> memref<1x!tpu.dma_semaphore, #tpu.memory_space<semaphore_mem>>
    %92 = tpu.memref_squeeze %91 : memref<1x!tpu.dma_semaphore, #tpu.memory_space<semaphore_mem>> -> memref<!tpu.dma_semaphore, #tpu.memory_space<semaphore_mem>>
    tpu.wait_dma2 semaphore(%92 : memref<!tpu.dma_semaphore, #tpu.memory_space<semaphore_mem>>) src(%89 : memref<8x32xf32, #tpu.memory_space<vmem>>) dst(%90 : memref<8x32xf32, #tpu.memory_space<vmem>>)
    %93 = arith.index_cast %88 : i32 to index
    %c0_31 = arith.constant 0 : index
    %94 = vector.load %arg12[%93, %c0_31] : memref<16x32xf32, #tpu.memory_space<vmem>>, vector<8x32xf32>
    %95 = arith.addf %86, %94 : vector<8x32xf32>
    %cst = arith.constant dense<0.000000e+00> : vector<8xf32>
    %96 = vector.multi_reduction <add>, %95, %cst [1] : vector<8x32xf32> to vector<8xf32>
    %97 = vector.shape_cast %96 : vector<8xf32> to vector<8x1xf32>
    %cst_32 = arith.constant 3.200000e+01 : f32
    %98 = vector.broadcast %cst_32 : f32 to vector<8x1xf32>
    %99 = arith.divf %97, %98 : vector<8x1xf32>
    %100 = vector.broadcast %99 : vector<8x1xf32> to vector<8x32xf32>
    %101 = arith.subf %95, %100 : vector<8x32xf32>
    %102 = arith.mulf %101, %101 : vector<8x32xf32>
    %cst_33 = arith.constant dense<0.000000e+00> : vector<8xf32>
    %103 = vector.multi_reduction <add>, %102, %cst_33 [1] : vector<8x32xf32> to vector<8xf32>
    %104 = vector.shape_cast %103 : vector<8xf32> to vector<8x1xf32>
    %cst_34 = arith.constant 3.200000e+01 : f32
    %105 = vector.broadcast %cst_34 : f32 to vector<8x1xf32>
    %106 = arith.divf %104, %105 : vector<8x1xf32>
    %cst_35 = arith.constant 9.99999997E-7 : f32
    %107 = vector.broadcast %cst_35 : f32 to vector<8x1xf32>
    %108 = arith.addf %106, %107 : vector<8x1xf32>
    %109 = math.rsqrt %108 : vector<8x1xf32>
    %110 = vector.broadcast %109 : vector<8x1xf32> to vector<8x32xf32>
    %111 = arith.mulf %101, %110 : vector<8x32xf32>
    %c0_36 = arith.constant 0 : index
    %c0_37 = arith.constant 0 : index
    %c0_38 = arith.constant 0 : index
    %112 = vector.load %arg9[%c0_36, %c0_37, %c0_38] : memref<1x1x32xf32, #tpu.memory_space<vmem>>, vector<1x1x32xf32>
    %113 = vector.shape_cast %112 : vector<1x1x32xf32> to vector<1x32xf32>
    %114 = vector.broadcast %113 : vector<1x32xf32> to vector<8x32xf32>
    %115 = arith.mulf %111, %114 : vector<8x32xf32>
    %c0_39 = arith.constant 0 : index
    %c0_40 = arith.constant 0 : index
    %c0_41 = arith.constant 0 : index
    %116 = vector.load %arg10[%c0_39, %c0_40, %c0_41] : memref<1x1x32xf32, #tpu.memory_space<vmem>>, vector<1x1x32xf32>
    %117 = vector.shape_cast %116 : vector<1x1x32xf32> to vector<1x32xf32>
    %118 = vector.broadcast %117 : vector<1x32xf32> to vector<8x32xf32>
    %119 = arith.addf %115, %118 : vector<8x32xf32>
    %c0_42 = arith.constant 0 : index
    %c0_43 = arith.constant 0 : index
    %c0_44 = arith.constant 0 : index
    %c0_45 = arith.constant 0 : index
    %120 = vector.load %arg11[%c0_42, %c0_43, %c0_44, %c0_45] : memref<1x1x8x32xf32, #tpu.memory_space<vmem>>, vector<1x1x8x32xf32>
    %121 = vector.shape_cast %120 : vector<1x1x8x32xf32> to vector<8x32xf32>
    %122 = vector.shape_cast %119 : vector<8x32xf32> to vector<1x1x8x32xf32>
    tpu.vector_store %arg11[%c0_42, %c0_43, %c0_44, %c0_45], %122 {strides = array<i32>} : memref<1x1x8x32xf32, #tpu.memory_space<vmem>>, vector<1x1x8x32xf32>,
    return
  }
  func.func @transform_0(%arg0: i32, %arg1: i32, %arg2: i32, %arg3: memref<32xi32, #tpu.memory_space<smem>>) -> (i32, i32, i32, i32) {
    %c0_i32 = arith.constant 0 : i32
    %c0_i32_0 = arith.constant 0 : i32
    return %arg0, %arg1, %arg2, %c0_i32 : i32, i32, i32, i32
  }
  func.func @transform_3(%arg0: i32, %arg1: i32, %arg2: i32, %arg3: memref<32xi32, #tpu.memory_space<smem>>) -> (i32, i32, i32) {
    %c0_i32 = arith.constant 0 : i32
    %c0_i32_0 = arith.constant 0 : i32
    %c0_i32_1 = arith.constant 0 : i32
    return %arg0, %c0_i32, %c0_i32_0 : i32, i32, i32
  }
  func.func @transform_4(%arg0: i32, %arg1: i32, %arg2: i32, %arg3: memref<32xi32, #tpu.memory_space<smem>>) -> (i32, i32, i32) {
    %c0_i32 = arith.constant 0 : i32
    %c0_i32_0 = arith.constant 0 : i32
    %c0_i32_1 = arith.constant 0 : i32
    return %arg0, %c0_i32, %c0_i32_0 : i32, i32, i32
  }
  func.func @transform_5(%arg0: i32, %arg1: i32, %arg2: i32, %arg3: memref<32xi32, #tpu.memory_space<smem>>) -> (i32, i32, i32) {
    %c0_i32 = arith.constant 0 : i32
    %c0_i32_0 = arith.constant 0 : i32
    %c0_i32_1 = arith.constant 0 : i32
    return %arg0, %c0_i32, %c0_i32_0 : i32, i32, i32
  }
  func.func @transform_6(%arg0: i32, %arg1: i32, %arg2: i32, %arg3: memref<32xi32, #tpu.memory_space<smem>>) -> (i32, i32, i32) {
    %c0_i32 = arith.constant 0 : i32
    %c0_i32_0 = arith.constant 0 : i32
    %c0_i32_1 = arith.constant 0 : i32
    return %arg0, %c0_i32, %c0_i32_0 : i32, i32, i32
  }
  func.func @transform_7(%arg0: i32, %arg1: i32, %arg2: i32, %arg3: memref<32xi32, #tpu.memory_space<smem>>) -> (i32, i32, i32, i32) {
    %c0_i32 = arith.constant 0 : i32
    %c0_i32_0 = arith.constant 0 : i32
    return %arg0, %arg1, %arg2, %c0_i32 : i32, i32, i32, i32
  }
}

</mosaic_0001>

<llo_original>
// kernel: tpu_custom_call.1
$region0: #{tpu_custom_call.1}
  #allocation0 [shape = 'u32[]', space=smem, size = 0x4, offset = 0x4, fixed_abs, tag = 'smem constant byte address 0x4 - core index']
  #allocation1 [shape = 'u32[144,128]{1,0:T(1,128)}', space=vmem, size = 0x12000, scoped, tag = 'internal scratch']
  #allocation2 [shape = 'f32[16,32]{1,0:T(8,128)}', space=vmem, size = 0x2000, scoped, tag = 'scratch operand']
  #allocation3 [shape = 's32[2]{0}', space=sflag, size = 0x8, scoped, tag = 'scratch operand']
  #allocation4 [shape = 's32[1]{0}', space=sflag, size = 0x4, scoped, tag = 'scoped memory for tpu_custom_call.1']
  #allocation5 [shape = 'u8[512]{0}', space=smem, size = 0x200, scoped, tag = 'prefetched SMEM operand 0']
  #allocation8 [shape = 's32[]', space=sflag, size = 0x4, offset = 0, fixed_abs, tag = 'sflag constant byte address 0x0 - dummy sync flag']
  #allocation9 [shape = 's32[]', space=sflag, size = 0x4, offset = 0, fixed_abs, tag = 'sflag constant byte address 0x0 - dummy sync flag']
  #allocation10 [shape = 's32[]', space=sflag, size = 0x4, offset = 0, fixed_abs, tag = 'sflag constant byte address 0x0 - dummy sync flag']
  #allocation11 [shape = 's32[]', space=sflag, size = 0x4, offset = 0, fixed_abs, tag = 'sflag constant byte address 0x0 - dummy sync flag']
  #allocation12 [shape = 's32[]', space=sflag, size = 0x4, offset = 0, fixed_abs, tag = 'sflag constant byte address 0x0 - dummy sync flag']
  #allocation13 [shape = 's32[]', space=sflag, size = 0x4, offset = 0, fixed_abs, tag = 'sflag constant byte address 0x0 - dummy sync flag']
  #allocation14 [shape = 's32[]', space=sflag, size = 0x4, offset = 0, fixed_abs, tag = 'sflag constant byte address 0x0 - dummy sync flag']
  #allocation15 [shape = 's32[]', space=sflag, size = 0x4, offset = 0, fixed_abs, tag = 'sflag constant byte address 0x0 - dummy sync flag']
  #allocation16 [shape = 's32[]', space=sflag, size = 0x4, offset = 0, fixed_abs, tag = 'sflag constant byte address 0x0 - dummy sync flag']
  #allocation17 [shape = 's32[]', space=sflag, size = 0x4, offset = 0, fixed_abs, tag = 'sflag constant byte address 0x0 - dummy sync flag']
  #allocation18 [shape = 's32[]', space=sflag, size = 0x4, offset = 0, fixed_abs, tag = 'sflag constant byte address 0x0 - dummy sync flag']
  #allocation19 [shape = 's32[]', space=sflag, size = 0x4, offset = 0, fixed_abs, tag = 'sflag constant byte address 0x0 - dummy sync flag']
  #allocation20 [shape = 's32[]', space=sflag, size = 0x4, offset = 0, fixed_abs, tag = 'sflag constant byte address 0x0 - dummy sync flag']
  #allocation21 [shape = 's32[]', space=sflag, size = 0x4, offset = 0, fixed_abs, tag = 'sflag constant byte address 0x0 - dummy sync flag']
  #allocation22 [shape = 's32[]', space=sflag, size = 0x4, offset = 0, fixed_abs, tag = 'sflag constant byte address 0x0 - dummy sync flag']
  #allocation23 [shape = 's32[]', space=sflag, size = 0x4, offset = 0, fixed_abs, tag = 'sflag constant byte address 0x0 - dummy sync flag']
  #allocation24 [shape = 's32[]', space=sflag, size = 0x4, offset = 0, fixed_abs, tag = 'sflag constant byte address 0x0 - dummy sync flag']
  #allocation25 [shape = 's32[]', space=sflag, size = 0x4, offset = 0, fixed_abs, tag = 'sflag constant byte address 0x0 - dummy sync flag']
  #allocation26 [shape = 's32[]', space=sflag, size = 0x4, offset = 0, fixed_abs, tag = 'sflag constant byte address 0x0 - dummy sync flag']
  #allocation27 [shape = 's32[]', space=sflag, size = 0x4, offset = 0, fixed_abs, tag = 'sflag constant byte address 0x0 - dummy sync flag']
  #allocation28 [shape = 's32[]', space=sflag, size = 0x4, offset = 0, fixed_abs, tag = 'sflag constant byte address 0x0 - dummy sync flag']
  #allocation29 [shape = 's32[]', space=sflag, size = 0x4, offset = 0, fixed_abs, tag = 'sflag constant byte address 0x0 - dummy sync flag']
  #allocation30 [shape = 's32[]', space=sflag, size = 0x4, offset = 0, fixed_abs, tag = 'sflag constant byte address 0x0 - dummy sync flag']
  #allocation31 [shape = 's32[]', space=sflag, size = 0x4, offset = 0, fixed_abs, tag = 'sflag constant byte address 0x0 - dummy sync flag']
  #allocation32 [shape = 's32[]', space=sflag, size = 0x4, offset = 0, fixed_abs, tag = 'sflag constant byte address 0x0 - dummy sync flag']
  #allocation33 [shape = 's32[]', space=sflag, size = 0x4, offset = 0, fixed_abs, tag = 'sflag constant byte address 0x0 - dummy sync flag']
  #allocation34 [shape = 's32[]', space=sflag, size = 0x4, offset = 0, fixed_abs, tag = 'sflag constant byte address 0x0 - dummy sync flag']
  #allocation35 [shape = 's32[]', space=sflag, size = 0x4, offset = 0, fixed_abs, tag = 'sflag constant byte address 0x0 - dummy sync flag']
  #allocation36 [shape = 's32[]', space=sflag, size = 0x4, offset = 0, fixed_abs, tag = 'sflag constant byte address 0x0 - dummy sync flag']
  #allocation37 [shape = 's32[]', space=sflag, size = 0x4, offset = 0, fixed_abs, tag = 'sflag constant byte address 0x0 - dummy sync flag']
  #allocation38 [shape = 's32[]', space=sflag, size = 0x4, offset = 0, fixed_abs, tag = 'sflag constant byte address 0x0 - dummy sync flag']
  #allocation39 [shape = 's32[]', space=sflag, size = 0x4, offset = 0, fixed_abs, tag = 'sflag constant byte address 0x0 - dummy sync flag']
  %s0 = inlined_call_operand.vmem [shape: s32[32], index: 0, kind: input, shape index: {}]
  %s1 = inlined_call_operand.vmem [shape: s32[2,2,8,1], index: 1, kind: input, shape index: {}]
  %s2 = inlined_call_operand.vmem [shape: f32[64,32], index: 2, kind: input, shape index: {}]
  %s3 = inlined_call_operand.vmem [shape: f32[64,32], index: 3, kind: input, shape index: {}]
  %s4 = inlined_call_operand.vmem [shape: f32[2,8,32], index: 4, kind: input, shape index: {}]
  %s5 = inlined_call_operand.vmem [shape: f32[2,8,32], index: 5, kind: input, shape index: {}]
  %s6 = inlined_call_operand.vmem [shape: f32[2,1,32], index: 6, kind: input, shape index: {}]
  %s7 = inlined_call_operand.vmem [shape: f32[2,1,32], index: 7, kind: input, shape index: {}]
  %s8 = inlined_call_operand.hbm [shape: f32[2,2,8,32], index: 8, kind: output, shape index: {}]
  %s9 = sld [smem:[#allocation0]]
  $region1037: #{tpu_custom_call.1} parent=0
    _
  %s11 = ssub.s32 1, %s9
  %s12 = scalar_select 0, %s11, %s9
  %s13 = sshll.u32 %s0, 4
  %s14 = int_to_ptr.vmem [resolvable:$true] %s13
  %16 = dma.vmem_to_smem %s14, 16, [#allocation5], [#allocation4]
  %17 = dma.done [#allocation4], 16
  %18 = sfence
  $region1: #{tpu_custom_call.1} parent=0
    #allocation6 [shape = 'u8[8192]{0}', space=vmem, size = 0x2000, scoped, tag = 'output window, operand 0']
    #allocation7 [shape = 's32[2]{0}', space=sflag, size = 0x8, scoped, tag = 'scoped memory for tpu_custom_call.1']
    %19 = vsyncpa [#allocation7], 0
    %s20 = scalar_lea.sflag [#allocation7], 1
    %21 = vsyncpa %s20, 0
    loop: start=0, step=1, limit=6
    $region2: #{tpu_custom_call.1} parent=1 // loop_pre_header
      _
    $region3: #{tpu_custom_call.1} parent=1 // loop_header
      %s23 = sphi 0, %s27
      %p24 = scmp.ge.s32.totalorder %s23, 6
      %s30 = sphi 0, %s49
      %s31 = sphi 0, %s45
      %s32 = sphi 0, %s41
      %s33 = sphi 0, %s30
      %s34 = sphi 0, %s31
      %s35 = sphi 0, %s32
      %s36 = sphi 0, %s33
      %s37 = sphi 0, %s34
      %s38 = sphi 0, %s35
      %s56 = sphi 0, %s58
      %s59 = sphi 0, %s56
      %s60 = sphi 0, %s59
      %s76 = sphi 0, %s60
      %s82 = sphi 0, %s84
      %s85 = sphi 0, %s82
      %s86 = sphi 0, %s85
      %s102 = sphi 0, %s86
      %s108 = sphi 0, %s110
      %s111 = sphi 0, %s108
      %s112 = sphi 0, %s111
      %s128 = sphi 0, %s112
      %s134 = sphi 0, %s136
      %s137 = sphi 0, %s134
      %s138 = sphi 0, %s137
      %s154 = sphi 0, %s138
      %s160 = sphi 0, %s162
      %s163 = sphi 0, %s160
      %s164 = sphi 0, %s163
      %s180 = sphi 0, %s164
      %s190 = sphi 0, %s192
      %s193 = sphi 0, %s190
      %s194 = sphi 0, %s193
      %s210 = sphi 0, %s194
    $region4: #{tpu_custom_call.1} parent=1 // loop_header_branch
      %26 = sbr.rel (%p24) target = $region8
    $region5: #{tpu_custom_call.1} parent=1 // loop_body
      %s28 = ssub.s32 %s23, 1
      %s29 = ssub.s32 %s23, 2
      %s39 = sadd.s32 1, %s32
      %p40 = scmp.ge.s32.totalorder %s39, 1
      %s41 = scalar_select %p40, 0, %s39
      %s42 = sadd.s32 1, %s31
      %s43 = scalar_select %p40, %s42, %s31
      %p44 = scmp.ge.s32.totalorder %s43, 2
      %s45 = scalar_select %p44, 0, %s43
      %s46 = sadd.s32 1, %s30
      %s47 = scalar_select %p44, %s46, %s30
      %p48 = scmp.ge.s32.totalorder %s47, 2
      %s49 = scalar_select %p48, 0, %s47
      %s50 = ssub.s32 %s30, %s49
      %s51 = ssub.s32 %s31, %s45
      %s52 = sor.u32 %s50, %s51
      %s53 = ssub.s32 %s32, %s41
      %s54 = sor.u32 %s52, %s53
      %p55 = scmp.eq.s32.totalorder %s54, 0
      %s57 = sadd.s32 %s56, 1
      %s58 = scalar_select %p55, %s56, %s57
      %p61 = pneg %p55
      %p62 = scmp.eq.s32.totalorder %s23, 3
      %p63 = por %p61, %p62
      %p64 = scmp.ne.s32.totalorder %s56, %s59
      %p65 = scmp.eq.s32.totalorder %s23, 0
      %p66 = por %p64, %p65
      %p67 = scmp.ne.s32.totalorder %s56, %s59
      %p68 = scmp.eq.s32.totalorder %s28, 3
      %p69 = por %p67, %p68
      %p70 = scmp.ne.s32.totalorder %s59, %s60
      %p71 = scmp.eq.s32.totalorder %s28, 0
      %p72 = por %p70, %p71
      %p73 = scmp.ne.s32.totalorder %s59, %s60
      %p74 = scmp.eq.s32.totalorder %s29, 3
      %p75 = por %p73, %p74
      %p77 = scmp.ne.s32.totalorder %s60, %s76
      %p78 = scmp.eq.s32.totalorder %s29, 0
      %p79 = por %p77, %p78
      %s80 = ssub.s32 %s30, %s49
      %p81 = scmp.eq.s32.totalorder %s80, 0
      %s83 = sadd.s32 %s82, 1
      %s84 = scalar_select %p81, %s82, %s83
      %p87 = pneg %p81
      %p88 = scmp.eq.s32.totalorder %s23, 3
      %p89 = por %p87, %p88
      %p90 = scmp.ne.s32.totalorder %s82, %s85
      %p91 = scmp.eq.s32.totalorder %s23, 0
      %p92 = por %p90, %p91
      %p93 = scmp.ne.s32.totalorder %s82, %s85
      %p94 = scmp.eq.s32.totalorder %s28, 3
      %p95 = por %p93, %p94
      %p96 = scmp.ne.s32.totalorder %s85, %s86
      %p97 = scmp.eq.s32.totalorder %s28, 0
      %p98 = por %p96, %p97
      %p99 = scmp.ne.s32.totalorder %s85, %s86
      %p100 = scmp.eq.s32.totalorder %s29, 3
      %p101 = por %p99, %p100
      %p103 = scmp.ne.s32.totalorder %s86, %s102
      %p104 = scmp.eq.s32.totalorder %s29, 0
      %p105 = por %p103, %p104
      %s106 = ssub.s32 %s30, %s49
      %p107 = scmp.eq.s32.totalorder %s106, 0
      %s109 = sadd.s32 %s108, 1
      %s110 = scalar_select %p107, %s108, %s109
      %p113 = pneg %p107
      %p114 = scmp.eq.s32.totalorder %s23, 3
      %p115 = por %p113, %p114
      %p116 = scmp.ne.s32.totalorder %s108, %s111
      %p117 = scmp.eq.s32.totalorder %s23, 0
      %p118 = por %p116, %p117
      %p119 = scmp.ne.s32.totalorder %s108, %s111
      %p120 = scmp.eq.s32.totalorder %s28, 3
      %p121 = por %p119, %p120
      %p122 = scmp.ne.s32.totalorder %s111, %s112
      %p123 = scmp.eq.s32.totalorder %s28, 0
      %p124 = por %p122, %p123
      %p125 = scmp.ne.s32.totalorder %s111, %s112
      %p126 = scmp.eq.s32.totalorder %s29, 3
      %p127 = por %p125, %p126
      %p129 = scmp.ne.s32.totalorder %s112, %s128
      %p130 = scmp.eq.s32.totalorder %s29, 0
      %p131 = por %p129, %p130
      %s132 = ssub.s32 %s30, %s49
      %p133 = scmp.eq.s32.totalorder %s132, 0
      %s135 = sadd.s32 %s134, 1
      %s136 = scalar_select %p133, %s134, %s135
      %p139 = pneg %p133
      %p140 = scmp.eq.s32.totalorder %s23, 3
      %p141 = por %p139, %p140
      %p142 = scmp.ne.s32.totalorder %s134, %s137
      %p143 = scmp.eq.s32.totalorder %s23, 0
      %p144 = por %p142, %p143
      %p145 = scmp.ne.s32.totalorder %s134, %s137
      %p146 = scmp.eq.s32.totalorder %s28, 3
      %p147 = por %p145, %p146
      %p148 = scmp.ne.s32.totalorder %s137, %s138
      %p149 = scmp.eq.s32.totalorder %s28, 0
      %p150 = por %p148, %p149
      %p151 = scmp.ne.s32.totalorder %s137, %s138
      %p152 = scmp.eq.s32.totalorder %s29, 3
      %p153 = por %p151, %p152
      %p155 = scmp.ne.s32.totalorder %s138, %s154
      %p156 = scmp.eq.s32.totalorder %s29, 0
      %p157 = por %p155, %p156
      %s158 = ssub.s32 %s30, %s49
      %p159 = scmp.eq.s32.totalorder %s158, 0
      %s161 = sadd.s32 %s160, 1
      %s162 = scalar_select %p159, %s160, %s161
      %p165 = pneg %p159
      %p166 = scmp.eq.s32.totalorder %s23, 3
      %p167 = por %p165, %p166
      %p168 = scmp.ne.s32.totalorder %s160, %s163
      %p169 = scmp.eq.s32.totalorder %s23, 0
      %p170 = por %p168, %p169
      %p171 = scmp.ne.s32.totalorder %s160, %s163
      %p172 = scmp.eq.s32.totalorder %s28, 3
      %p173 = por %p171, %p172
      %p174 = scmp.ne.s32.totalorder %s163, %s164
      %p175 = scmp.eq.s32.totalorder %s28, 0
      %p176 = por %p174, %p175
      %p177 = scmp.ne.s32.totalorder %s163, %s164
      %p178 = scmp.eq.s32.totalorder %s29, 3
      %p179 = por %p177, %p178
      %p181 = scmp.ne.s32.totalorder %s164, %s180
      %p182 = scmp.eq.s32.totalorder %s29, 0
      %p183 = por %p181, %p182
      %s184 = ssub.s32 %s30, %s49
      %s185 = ssub.s32 %s31, %s45
      %s186 = sor.u32 %s184, %s185
      %s187 = ssub.s32 %s32, %s41
      %s188 = sor.u32 %s186, %s187
      %p189 = scmp.eq.s32.totalorder %s188, 0
      %s191 = sadd.s32 %s190, 1
      %s192 = scalar_select %p189, %s190, %s191
      %p195 = pneg %p189
      %p196 = scmp.eq.s32.totalorder %s23, 3
      %p197 = por %p195, %p196
      %p198 = scmp.ne.s32.totalorder %s190, %s193
      %p199 = scmp.eq.s32.totalorder %s23, 0
      %p200 = por %p198, %p199
      %p201 = scmp.ne.s32.totalorder %s190, %s193
      %p202 = scmp.eq.s32.totalorder %s28, 3
      %p203 = por %p201, %p202
      %p204 = scmp.ne.s32.totalorder %s193, %s194
      %p205 = scmp.eq.s32.totalorder %s28, 0
      %p206 = por %p204, %p205
      %p207 = scmp.ne.s32.totalorder %s193, %s194
      %p208 = scmp.eq.s32.totalorder %s29, 3
      %p209 = por %p207, %p208
      %p211 = scmp.ne.s32.totalorder %s194, %s210
      %p212 = scmp.eq.s32.totalorder %s29, 0
      %p213 = por %p211, %p212
      %p214 = scmp.le.s32.totalorder 1, %s23
      %p215 = scmp.lt.s32.totalorder %s23, 5
      %p216 = pnand %p214, %p215
      %p217 = pneg %p216
      // Predicated region
      $region9: #{tpu_custom_call.1} parent=5 // pred_check
        _
      $region10: #{tpu_custom_call.1} parent=5 // pred_check_branch
        %219 = sbr.rel (%p216) target = $region12
      $region11: #{tpu_custom_call.1} parent=5 // pred_region
        %s220 = ssub.s32 %s23, 1
      $region12: #{tpu_custom_call.1} parent=5 // pred_fallthru
        _
      %p221 = scmp.lt.s32.totalorder %s23, 4
      // Predicated region
      $region13: #{tpu_custom_call.1} parent=5 // pred_check
        %p222 = pneg %p221
      $region14: #{tpu_custom_call.1} parent=5 // pred_check_branch
        %224 = sbr.rel (%p222) target = $region16
      $region15: #{tpu_custom_call.1} parent=5 // pred_region
        // Predicated region
        $region17: #{tpu_custom_call.1} parent=15 // pred_check
          %p225 = pneg %p66
        $region18: #{tpu_custom_call.1} parent=15 // pred_check_branch
          %227 = sbr.rel (%p225) target = $region20
        $region19: #{tpu_custom_call.1} parent=15 // pred_region
          %p228 = scmp.lt.s32.totalorder %s30, 1
          %s229 = scalar_select %p228, %s30, 1
          %p230 = scmp.lt.s32.totalorder %s31, 1
          %s231 = scalar_select %p230, %s31, 1
          %p232 = scmp.lt.s32.totalorder %s32, 0
          %s233 = scalar_select %p232, %s32, 0
          %s234 = sadd.s32 %s233, %s231
          %s235 = smul.addr %s229, 2
          %s236 = sadd.s32 %s234, %s235
          %s237 = smul.addr %s236, 8
          %s238 = scalar_lea.vmem %s1, %s237
        $region20: #{tpu_custom_call.1} parent=15 // pred_fallthru
          _
        // Predicated region
        $region21: #{tpu_custom_call.1} parent=15 // pred_check
          %p239 = pneg %p92
        $region22: #{tpu_custom_call.1} parent=15 // pred_check_branch
          %241 = sbr.rel (%p239) target = $region24
        $region23: #{tpu_custom_call.1} parent=15 // pred_region
          %p242 = scmp.lt.s32.totalorder %s30, 1
          %s243 = scalar_select %p242, %s30, 1
          %s244 = smul.addr %s243, 8
          %s245 = scalar_lea.vmem %s4, %s244
        $region24: #{tpu_custom_call.1} parent=15 // pred_fallthru
          _
        // Predicated region
        $region25: #{tpu_custom_call.1} parent=15 // pred_check
          %p246 = pneg %p118
        $region26: #{tpu_custom_call.1} parent=15 // pred_check_branch
          %248 = sbr.rel (%p246) target = $region28
        $region27: #{tpu_custom_call.1} parent=15 // pred_region
          %p249 = scmp.lt.s32.totalorder %s30, 1
          %s250 = scalar_select %p249, %s30, 1
          %s251 = smul.addr %s250, 8
          %s252 = scalar_lea.vmem %s5, %s251
        $region28: #{tpu_custom_call.1} parent=15 // pred_fallthru
          _
        // Predicated region
        $region29: #{tpu_custom_call.1} parent=15 // pred_check
          %p253 = pneg %p144
        $region30: #{tpu_custom_call.1} parent=15 // pred_check_branch
          %255 = sbr.rel (%p253) target = $region32
        $region31: #{tpu_custom_call.1} parent=15 // pred_region
          %p256 = scmp.lt.s32.totalorder %s30, 1
          %s257 = scalar_select %p256, %s30, 1
          %s258 = scalar_lea.vmem %s6, %s257
        $region32: #{tpu_custom_call.1} parent=15 // pred_fallthru
          _
        // Predicated region
        $region33: #{tpu_custom_call.1} parent=15 // pred_check
          %p259 = pneg %p170
        $region34: #{tpu_custom_call.1} parent=15 // pred_check_branch
          %261 = sbr.rel (%p259) target = $region36
        $region35: #{tpu_custom_call.1} parent=15 // pred_region
          %p262 = scmp.lt.s32.totalorder %s30, 1
          %s263 = scalar_select %p262, %s30, 1
          %s264 = scalar_lea.vmem %s7, %s263
        $region36: #{tpu_custom_call.1} parent=15 // pred_fallthru
          _
      $region16: #{tpu_custom_call.1} parent=5 // pred_fallthru
        _
      %p265 = scmp.le.s32.totalorder 1, %s23
      %p266 = scmp.lt.s32.totalorder %s23, 5
      %p267 = pnand %p265, %p266
      %p268 = pneg %p267
      // Predicated region
      $region37: #{tpu_custom_call.1} parent=5 // pred_check
        _
      $region38: #{tpu_custom_call.1} parent=5 // pred_check_branch
        %270 = sbr.rel (%p267) target = $region40
      $region39: #{tpu_custom_call.1} parent=5 // pred_region
        %s271 = ssub.s32 %s23, 1
        %p272 = scmp.lt.s32.totalorder %s33, 1
        %s273 = scalar_select %p272, %s33, 1
        %p274 = scmp.lt.s32.totalorder %s34, 1
        %s275 = scalar_select %p274, %s34, 1
        %p276 = scmp.lt.s32.totalorder %s35, 0
        %s277 = scalar_select %p276, %s35, 0
        %s278 = sadd.s32 %s277, %s275
        %s279 = smul.addr %s273, 2
        %s280 = sadd.s32 %s278, %s279
        %s281 = smul.addr %s280, 8
        %s282 = scalar_lea.vmem %s1, %s281
        %p283 = pneg %p72
        %p284 = pneg %p69
        %p285 = scmp.lt.s32.totalorder %s33, 1
        %s286 = scalar_select %p285, %s33, 1
        %s287 = smul.addr %s286, 8
        %s288 = scalar_lea.vmem %s4, %s287
        %p289 = pneg %p98
        %p290 = pneg %p95
        %p291 = scmp.lt.s32.totalorder %s33, 1
        %s292 = scalar_select %p291, %s33, 1
        %s293 = smul.addr %s292, 8
        %s294 = scalar_lea.vmem %s5, %s293
        %p295 = pneg %p124
        %p296 = pneg %p121
        %p297 = scmp.lt.s32.totalorder %s33, 1
        %s298 = scalar_select %p297, %s33, 1
        %s299 = scalar_lea.vmem %s6, %s298
        %p300 = pneg %p150
        %p301 = pneg %p147
        %p302 = scmp.lt.s32.totalorder %s33, 1
        %s303 = scalar_select %p302, %s33, 1
        %s304 = scalar_lea.vmem %s7, %s303
        %p305 = pneg %p176
        %p306 = pneg %p173
        %p307 = pneg %p206
        %p308 = pneg %p203
        %s309 = sand.u32 %s193, 1
        %s310 = scalar_lea.sflag [#allocation7], %s309
        %s311 = sand.u32 %s193, 1
        %s312 = smul.addr %s311, 8
        %s313 = scalar_lea.vmem [#allocation6], %s312
        %p314 = scmp.lt.s32.totalorder %s33, 1
        %s315 = scalar_select %p314, %s33, 1
        %p316 = scmp.lt.s32.totalorder %s34, 1
        %s317 = scalar_select %p316, %s34, 1
        %p318 = scmp.lt.s32.totalorder %s35, 0
        %s319 = scalar_select %p318, %s35, 0
        %s320 = sadd.s32 %s319, %s317
        %s321 = smul.addr %s315, 2
        %s322 = sadd.s32 %s320, %s321
        %s323 = smul.addr %s322, 8
        %s324 = scalar_lea.vmem %s1, %s323
        %p325 = scmp.lt.s32.totalorder %s33, 1
        %s326 = scalar_select %p325, %s33, 1
        %s327 = smul.addr %s326, 8
        %s328 = scalar_lea.vmem %s4, %s327
        %p329 = scmp.lt.s32.totalorder %s33, 1
        %s330 = scalar_select %p329, %s33, 1
        %s331 = smul.addr %s330, 8
        %s332 = scalar_lea.vmem %s5, %s331
        %p333 = scmp.lt.s32.totalorder %s33, 1
        %s334 = scalar_select %p333, %s33, 1
        %s335 = scalar_lea.vmem %s6, %s334
        %p336 = scmp.lt.s32.totalorder %s33, 1
        %s337 = scalar_select %p336, %s33, 1
        %s338 = scalar_lea.vmem %s7, %s337
        %s339 = sand.u32 %s35, 1
        %p340 = scmp.eq.s32.totalorder %s35, 0
        // Predicated region
        $region41: #{tpu_custom_call.1} parent=39 // pred_check
          %p341 = pneg %p340
        $region42: #{tpu_custom_call.1} parent=39 // pred_check_branch
          %343 = sbr.rel (%p341) target = $region44
        $region43: #{tpu_custom_call.1} parent=39 // pred_region
          %s344 = smul.u32 %s33, 16
          %s345 = smul.u32 %s34, 8
          %s346 = sadd.s32 %s344, %s345
          %p347 = scmp.eq.s32.totalorder %s33, 0
          // Predicated region
          $region45: #{tpu_custom_call.1} parent=43 // pred_check
            %p348 = pneg %p347
          $region46: #{tpu_custom_call.1} parent=43 // pred_check_branch
            %350 = sbr.rel (%p348) target = $region48
          $region47: #{tpu_custom_call.1} parent=43 // pred_region
            %s351 = sadd.s32 %s346, 0
            %s352 = sld [smem:[#allocation5 + %s351]]
            %s353 = sadd.s32 0, 0
            %s354 = scalar_lea.vmem %s2, %s352
            %s355 = scalar_lea.vmem [#allocation2], %s353
            %p357 = scmp.lt.u32.totalorder 1, 8
            %p358 = pneg %p357
            // Predicated region
            $region49: #{tpu_custom_call.1} parent=47 // pred_check
              _
            $region50: #{tpu_custom_call.1} parent=47 // pred_check_branch
              %360 = sbr.rel (%p357) target = $region52
            $region51: #{tpu_custom_call.1} parent=47 // pred_region
              %s375 = sand.u32 1, 7
              %p376 = scmp.eq.s32.totalorder %s375, 0
              %p377 = pneg %p376
              // Predicated region
              $region64: #{tpu_custom_call.1} parent=51 // pred_check
                _
              $region65: #{tpu_custom_call.1} parent=51 // pred_check_branch
                %379 = sbr.rel (%p376) target = $region67
              $region66: #{tpu_custom_call.1} parent=51 // pred_region
                %s380 = sand.u32 1, 7
                %s381 = ssub.s32 1, %s380
                %s382 = scalar_lea.vmem %s354, %s381
                %s383 = ssub.s32 1, %s380
                %s384 = scalar_lea.vmem %s355, %s383 [#allocation2]
                %s385 = sshllo.u32 0, %s380
                loop: start=0, step=1, limit=1
                $region68: #{tpu_custom_call.1} parent=66 // loop_pre_header
                  _
                $region69: #{tpu_custom_call.1} parent=66 // loop_header
                  %s387 = sphi 0, %s391
                  %p388 = scmp.ge.s32.totalorder %s387, 1
                  %s392 = sphi %s382, %s382
                  %s393 = sphi %s384, %s384
                $region70: #{tpu_custom_call.1} parent=66 // loop_header_branch
                  %390 = sbr.rel (%p388) target = $region74
                $region71: #{tpu_custom_call.1} parent=66 // loop_body
                  %v394 = vld [vmem:[%s392] sm:%s385]
                  %395 = vst [vmem:[%s393] sm:%s385] %v394
                $region72: #{tpu_custom_call.1} parent=66 // loop_footer
                  %s391 = sadd.s32 1, %s387
                $region73: #{tpu_custom_call.1} parent=66 // loop_footer_branch
                  %386 = sbr.rel target = $region69
                $region74: #{tpu_custom_call.1} parent=66 // loop_exit
                  _
              $region67: #{tpu_custom_call.1} parent=51 // pred_fallthru
                _
            $region52: #{tpu_custom_call.1} parent=47 // pred_fallthru
              _
            // Predicated region
            $region53: #{tpu_custom_call.1} parent=47 // pred_check
              %p361 = pneg %p357
            $region54: #{tpu_custom_call.1} parent=47 // pred_check_branch
              %363 = sbr.rel (%p361) target = $region56
            $region55: #{tpu_custom_call.1} parent=47 // pred_region
              %s364 = sshllo.u32 0, 1
              loop: start=0, step=1, limit=1
              $region57: #{tpu_custom_call.1} parent=55 // loop_pre_header
                _
              $region58: #{tpu_custom_call.1} parent=55 // loop_header
                %s366 = sphi 0, %s370
                %p367 = scmp.ge.s32.totalorder %s366, 1
                %s371 = sphi %s354, %s354
                %s372 = sphi %s355, %s355
              $region59: #{tpu_custom_call.1} parent=55 // loop_header_branch
                %369 = sbr.rel (%p367) target = $region63
              $region60: #{tpu_custom_call.1} parent=55 // loop_body
                %v373 = vld [vmem:[%s371] sm:%s364]
                %374 = vst [vmem:[%s372] sm:%s364] %v373
              $region61: #{tpu_custom_call.1} parent=55 // loop_footer
                %s370 = sadd.s32 1, %s366
              $region62: #{tpu_custom_call.1} parent=55 // loop_footer_branch
                %365 = sbr.rel target = $region58
              $region63: #{tpu_custom_call.1} parent=55 // loop_exit
                _
            $region56: #{tpu_custom_call.1} parent=47 // pred_fallthru
              _
            // Predicated region
            $region75: #{tpu_custom_call.1} parent=47 // pred_check
              _
            $region76: #{tpu_custom_call.1} parent=47 // pred_check_branch
              %398 = sbr.rel (0) target = $region78
            $region77: #{tpu_custom_call.1} parent=47 // pred_region
              %399 = vsyncadd [#allocation3], 16
            $region78: #{tpu_custom_call.1} parent=47 // pred_fallthru
              _
            %s400 = sadd.s32 0, 1
            %s401 = sadd.s32 %s346, %s400
            %s402 = sld [smem:[#allocation5 + %s401]]
            %s403 = sadd.s32 0, %s400
            %s404 = scalar_lea.vmem %s2, %s402
            %s405 = scalar_lea.vmem [#allocation2], %s403
            %p407 = scmp.lt.u32.totalorder 1, 8
            %p408 = pneg %p407
            // Predicated region
            $region79: #{tpu_custom_call.1} parent=47 // pred_check
              _
            $region80: #{tpu_custom_call.1} parent=47 // pred_check_branch
              %410 = sbr.rel (%p407) target = $region82
            $region81: #{tpu_custom_call.1} parent=47 // pred_region
              %s425 = sand.u32 1, 7
              %p426 = scmp.eq.s32.totalorder %s425, 0
              %p427 = pneg %p426
              // Predicated region
              $region94: #{tpu_custom_call.1} parent=81 // pred_check
                _
              $region95: #{tpu_custom_call.1} parent=81 // pred_check_branch
                %429 = sbr.rel (%p426) target = $region97
              $region96: #{tpu_custom_call.1} parent=81 // pred_region
                %s430 = sand.u32 1, 7
                %s431 = ssub.s32 1, %s430
                %s432 = scalar_lea.vmem %s404, %s431
                %s433 = ssub.s32 1, %s430
                %s434 = scalar_lea.vmem %s405, %s433 [#allocation2]
                %s435 = sshllo.u32 0, %s430
                loop: start=0, step=1, limit=1
                $region98: #{tpu_custom_call.1} parent=96 // loop_pre_header
                  _
                $region99: #{tpu_custom_call.1} parent=96 // loop_header
                  %s437 = sphi 0, %s441
                  %p438 = scmp.ge.s32.totalorder %s437, 1
                  %s442 = sphi %s432, %s432
                  %s443 = sphi %s434, %s434
                $region100: #{tpu_custom_call.1} parent=96 // loop_header_branch
                  %440 = sbr.rel (%p438) target = $region104
                $region101: #{tpu_custom_call.1} parent=96 // loop_body
                  %v444 = vld [vmem:[%s442] sm:%s435]
                  %445 = vst [vmem:[%s443] sm:%s435] %v444
                $region102: #{tpu_custom_call.1} parent=96 // loop_footer
                  %s441 = sadd.s32 1, %s437
                $region103: #{tpu_custom_call.1} parent=96 // loop_footer_branch
                  %436 = sbr.rel target = $region99
                $region104: #{tpu_custom_call.1} parent=96 // loop_exit
                  _
              $region97: #{tpu_custom_call.1} parent=81 // pred_fallthru
                _
            $region82: #{tpu_custom_call.1} parent=47 // pred_fallthru
              _
            // Predicated region
            $region83: #{tpu_custom_call.1} parent=47 // pred_check
              %p411 = pneg %p407
            $region84: #{tpu_custom_call.1} parent=47 // pred_check_branch
              %413 = sbr.rel (%p411) target = $region86
            $region85: #{tpu_custom_call.1} parent=47 // pred_region
              %s414 = sshllo.u32 0, 1
              loop: start=0, step=1, limit=1
              $region87: #{tpu_custom_call.1} parent=85 // loop_pre_header
                _
              $region88: #{tpu_custom_call.1} parent=85 // loop_header
                %s416 = sphi 0, %s420
                %p417 = scmp.ge.s32.totalorder %s416, 1
                %s421 = sphi %s404, %s404
                %s422 = sphi %s405, %s405
              $region89: #{tpu_custom_call.1} parent=85 // loop_header_branch
                %419 = sbr.rel (%p417) target = $region93
              $region90: #{tpu_custom_call.1} parent=85 // loop_body
                %v423 = vld [vmem:[%s421] sm:%s414]
                %424 = vst [vmem:[%s422] sm:%s414] %v423
              $region91: #{tpu_custom_call.1} parent=85 // loop_footer
                %s420 = sadd.s32 1, %s416
              $region92: #{tpu_custom_call.1} parent=85 // loop_footer_branch
                %415 = sbr.rel target = $region88
              $region93: #{tpu_custom_call.1} parent=85 // loop_exit
                _
            $region86: #{tpu_custom_call.1} parent=47 // pred_fallthru
              _
            // Predicated region
            $region105: #{tpu_custom_call.1} parent=47 // pred_check
              _
            $region106: #{tpu_custom_call.1} parent=47 // pred_check_branch
              %448 = sbr.rel (0) target = $region108
            $region107: #{tpu_custom_call.1} parent=47 // pred_region
              %449 = vsyncadd [#allocation3], 16
            $region108: #{tpu_custom_call.1} parent=47 // pred_fallthru
              _
            %s450 = sadd.s32 0, 2
            %s451 = sadd.s32 %s346, %s450
            %s452 = sld [smem:[#allocation5 + %s451]]
            %s453 = sadd.s32 0, %s450
            %s454 = scalar_lea.vmem %s2, %s452
            %s455 = scalar_lea.vmem [#allocation2], %s453
            %p457 = scmp.lt.u32.totalorder 1, 8
            %p458 = pneg %p457
            // Predicated region
            $region109: #{tpu_custom_call.1} parent=47 // pred_check
              _
            $region110: #{tpu_custom_call.1} parent=47 // pred_check_branch
              %460 = sbr.rel (%p457) target = $region112
            $region111: #{tpu_custom_call.1} parent=47 // pred_region
              %s475 = sand.u32 1, 7
              %p476 = scmp.eq.s32.totalorder %s475, 0
              %p477 = pneg %p476
              // Predicated region
              $region124: #{tpu_custom_call.1} parent=111 // pred_check
                _
              $region125: #{tpu_custom_call.1} parent=111 // pred_check_branch
                %479 = sbr.rel (%p476) target = $region127
              $region126: #{tpu_custom_call.1} parent=111 // pred_region
                %s480 = sand.u32 1, 7
                %s481 = ssub.s32 1, %s480
                %s482 = scalar_lea.vmem %s454, %s481
                %s483 = ssub.s32 1, %s480
                %s484 = scalar_lea.vmem %s455, %s483 [#allocation2]
                %s485 = sshllo.u32 0, %s480
                loop: start=0, step=1, limit=1
                $region128: #{tpu_custom_call.1} parent=126 // loop_pre_header
                  _
                $region129: #{tpu_custom_call.1} parent=126 // loop_header
                  %s487 = sphi 0, %s491
                  %p488 = scmp.ge.s32.totalorder %s487, 1
                  %s492 = sphi %s482, %s482
                  %s493 = sphi %s484, %s484
                $region130: #{tpu_custom_call.1} parent=126 // loop_header_branch
                  %490 = sbr.rel (%p488) target = $region134
                $region131: #{tpu_custom_call.1} parent=126 // loop_body
                  %v494 = vld [vmem:[%s492] sm:%s485]
                  %495 = vst [vmem:[%s493] sm:%s485] %v494
                $region132: #{tpu_custom_call.1} parent=126 // loop_footer
                  %s491 = sadd.s32 1, %s487
                $region133: #{tpu_custom_call.1} parent=126 // loop_footer_branch
                  %486 = sbr.rel target = $region129
                $region134: #{tpu_custom_call.1} parent=126 // loop_exit
                  _
              $region127: #{tpu_custom_call.1} parent=111 // pred_fallthru
                _
            $region112: #{tpu_custom_call.1} parent=47 // pred_fallthru
              _
            // Predicated region
            $region113: #{tpu_custom_call.1} parent=47 // pred_check
              %p461 = pneg %p457
            $region114: #{tpu_custom_call.1} parent=47 // pred_check_branch
              %463 = sbr.rel (%p461) target = $region116
            $region115: #{tpu_custom_call.1} parent=47 // pred_region
              %s464 = sshllo.u32 0, 1
              loop: start=0, step=1, limit=1
              $region117: #{tpu_custom_call.1} parent=115 // loop_pre_header
                _
              $region118: #{tpu_custom_call.1} parent=115 // loop_header
                %s466 = sphi 0, %s470
                %p467 = scmp.ge.s32.totalorder %s466, 1
                %s471 = sphi %s454, %s454
                %s472 = sphi %s455, %s455
              $region119: #{tpu_custom_call.1} parent=115 // loop_header_branch
                %469 = sbr.rel (%p467) target = $region123
              $region120: #{tpu_custom_call.1} parent=115 // loop_body
                %v473 = vld [vmem:[%s471] sm:%s464]
                %474 = vst [vmem:[%s472] sm:%s464] %v473
              $region121: #{tpu_custom_call.1} parent=115 // loop_footer
                %s470 = sadd.s32 1, %s466
              $region122: #{tpu_custom_call.1} parent=115 // loop_footer_branch
                %465 = sbr.rel target = $region118
              $region123: #{tpu_custom_call.1} parent=115 // loop_exit
                _
            $region116: #{tpu_custom_call.1} parent=47 // pred_fallthru
              _
            // Predicated region
            $region135: #{tpu_custom_call.1} parent=47 // pred_check
              _
            $region136: #{tpu_custom_call.1} parent=47 // pred_check_branch
              %498 = sbr.rel (0) target = $region138
            $region137: #{tpu_custom_call.1} parent=47 // pred_region
              %499 = vsyncadd [#allocation3], 16
            $region138: #{tpu_custom_call.1} parent=47 // pred_fallthru
              _
            %s500 = sadd.s32 0, 3
            %s501 = sadd.s32 %s346, %s500
            %s502 = sld [smem:[#allocation5 + %s501]]
            %s503 = sadd.s32 0, %s500
            %s504 = scalar_lea.vmem %s2, %s502
            %s505 = scalar_lea.vmem [#allocation2], %s503
            %p507 = scmp.lt.u32.totalorder 1, 8
            %p508 = pneg %p507
            // Predicated region
            $region139: #{tpu_custom_call.1} parent=47 // pred_check
              _
            $region140: #{tpu_custom_call.1} parent=47 // pred_check_branch
              %510 = sbr.rel (%p507) target = $region142
            $region141: #{tpu_custom_call.1} parent=47 // pred_region
              %s525 = sand.u32 1, 7
              %p526 = scmp.eq.s32.totalorder %s525, 0
              %p527 = pneg %p526
              // Predicated region
              $region154: #{tpu_custom_call.1} parent=141 // pred_check
                _
              $region155: #{tpu_custom_call.1} parent=141 // pred_check_branch
                %529 = sbr.rel (%p526) target = $region157
              $region156: #{tpu_custom_call.1} parent=141 // pred_region
                %s530 = sand.u32 1, 7
                %s531 = ssub.s32 1, %s530
                %s532 = scalar_lea.vmem %s504, %s531
                %s533 = ssub.s32 1, %s530
                %s534 = scalar_lea.vmem %s505, %s533 [#allocation2]
                %s535 = sshllo.u32 0, %s530
                loop: start=0, step=1, limit=1
                $region158: #{tpu_custom_call.1} parent=156 // loop_pre_header
                  _
                $region159: #{tpu_custom_call.1} parent=156 // loop_header
                  %s537 = sphi 0, %s541
                  %p538 = scmp.ge.s32.totalorder %s537, 1
                  %s542 = sphi %s532, %s532
                  %s543 = sphi %s534, %s534
                $region160: #{tpu_custom_call.1} parent=156 // loop_header_branch
                  %540 = sbr.rel (%p538) target = $region164
                $region161: #{tpu_custom_call.1} parent=156 // loop_body
                  %v544 = vld [vmem:[%s542] sm:%s535]
                  %545 = vst [vmem:[%s543] sm:%s535] %v544
                $region162: #{tpu_custom_call.1} parent=156 // loop_footer
                  %s541 = sadd.s32 1, %s537
                $region163: #{tpu_custom_call.1} parent=156 // loop_footer_branch
                  %536 = sbr.rel target = $region159
                $region164: #{tpu_custom_call.1} parent=156 // loop_exit
                  _
              $region157: #{tpu_custom_call.1} parent=141 // pred_fallthru
                _
            $region142: #{tpu_custom_call.1} parent=47 // pred_fallthru
              _
            // Predicated region
            $region143: #{tpu_custom_call.1} parent=47 // pred_check
              %p511 = pneg %p507
            $region144: #{tpu_custom_call.1} parent=47 // pred_check_branch
              %513 = sbr.rel (%p511) target = $region146
            $region145: #{tpu_custom_call.1} parent=47 // pred_region
              %s514 = sshllo.u32 0, 1
              loop: start=0, step=1, limit=1
              $region147: #{tpu_custom_call.1} parent=145 // loop_pre_header
                _
              $region148: #{tpu_custom_call.1} parent=145 // loop_header
                %s516 = sphi 0, %s520
                %p517 = scmp.ge.s32.totalorder %s516, 1
                %s521 = sphi %s504, %s504
                %s522 = sphi %s505, %s505
              $region149: #{tpu_custom_call.1} parent=145 // loop_header_branch
                %519 = sbr.rel (%p517) target = $region153
              $region150: #{tpu_custom_call.1} parent=145 // loop_body
                %v523 = vld [vmem:[%s521] sm:%s514]
                %524 = vst [vmem:[%s522] sm:%s514] %v523
              $region151: #{tpu_custom_call.1} parent=145 // loop_footer
                %s520 = sadd.s32 1, %s516
              $region152: #{tpu_custom_call.1} parent=145 // loop_footer_branch
                %515 = sbr.rel target = $region148
              $region153: #{tpu_custom_call.1} parent=145 // loop_exit
                _
            $region146: #{tpu_custom_call.1} parent=47 // pred_fallthru
              _
            // Predicated region
            $region165: #{tpu_custom_call.1} parent=47 // pred_check
              _
            $region166: #{tpu_custom_call.1} parent=47 // pred_check_branch
              %548 = sbr.rel (0) target = $region168
            $region167: #{tpu_custom_call.1} parent=47 // pred_region
              %549 = vsyncadd [#allocation3], 16
            $region168: #{tpu_custom_call.1} parent=47 // pred_fallthru
              _
            %s550 = sadd.s32 0, 4
            %s551 = sadd.s32 %s346, %s550
            %s552 = sld [smem:[#allocation5 + %s551]]
            %s553 = sadd.s32 0, %s550
            %s554 = scalar_lea.vmem %s2, %s552
            %s555 = scalar_lea.vmem [#allocation2], %s553
            %p557 = scmp.lt.u32.totalorder 1, 8
            %p558 = pneg %p557
            // Predicated region
            $region169: #{tpu_custom_call.1} parent=47 // pred_check
              _
            $region170: #{tpu_custom_call.1} parent=47 // pred_check_branch
              %560 = sbr.rel (%p557) target = $region172
            $region171: #{tpu_custom_call.1} parent=47 // pred_region
              %s575 = sand.u32 1, 7
              %p576 = scmp.eq.s32.totalorder %s575, 0
              %p577 = pneg %p576
              // Predicated region
              $region184: #{tpu_custom_call.1} parent=171 // pred_check
                _
              $region185: #{tpu_custom_call.1} parent=171 // pred_check_branch
                %579 = sbr.rel (%p576) target = $region187
              $region186: #{tpu_custom_call.1} parent=171 // pred_region
                %s580 = sand.u32 1, 7
                %s581 = ssub.s32 1, %s580
                %s582 = scalar_lea.vmem %s554, %s581
                %s583 = ssub.s32 1, %s580
                %s584 = scalar_lea.vmem %s555, %s583 [#allocation2]
                %s585 = sshllo.u32 0, %s580
                loop: start=0, step=1, limit=1
                $region188: #{tpu_custom_call.1} parent=186 // loop_pre_header
                  _
                $region189: #{tpu_custom_call.1} parent=186 // loop_header
                  %s587 = sphi 0, %s591
                  %p588 = scmp.ge.s32.totalorder %s587, 1
                  %s592 = sphi %s582, %s582
                  %s593 = sphi %s584, %s584
                $region190: #{tpu_custom_call.1} parent=186 // loop_header_branch
                  %590 = sbr.rel (%p588) target = $region194
                $region191: #{tpu_custom_call.1} parent=186 // loop_body
                  %v594 = vld [vmem:[%s592] sm:%s585]
                  %595 = vst [vmem:[%s593] sm:%s585] %v594
                $region192: #{tpu_custom_call.1} parent=186 // loop_footer
                  %s591 = sadd.s32 1, %s587
                $region193: #{tpu_custom_call.1} parent=186 // loop_footer_branch
                  %586 = sbr.rel target = $region189
                $region194: #{tpu_custom_call.1} parent=186 // loop_exit
                  _
              $region187: #{tpu_custom_call.1} parent=171 // pred_fallthru
                _
            $region172: #{tpu_custom_call.1} parent=47 // pred_fallthru
              _
            // Predicated region
            $region173: #{tpu_custom_call.1} parent=47 // pred_check
              %p561 = pneg %p557
            $region174: #{tpu_custom_call.1} parent=47 // pred_check_branch
              %563 = sbr.rel (%p561) target = $region176
            $region175: #{tpu_custom_call.1} parent=47 // pred_region
              %s564 = sshllo.u32 0, 1
              loop: start=0, step=1, limit=1
              $region177: #{tpu_custom_call.1} parent=175 // loop_pre_header
                _
              $region178: #{tpu_custom_call.1} parent=175 // loop_header
                %s566 = sphi 0, %s570
                %p567 = scmp.ge.s32.totalorder %s566, 1
                %s571 = sphi %s554, %s554
                %s572 = sphi %s555, %s555
              $region179: #{tpu_custom_call.1} parent=175 // loop_header_branch
                %569 = sbr.rel (%p567) target = $region183
              $region180: #{tpu_custom_call.1} parent=175 // loop_body
                %v573 = vld [vmem:[%s571] sm:%s564]
                %574 = vst [vmem:[%s572] sm:%s564] %v573
              $region181: #{tpu_custom_call.1} parent=175 // loop_footer
                %s570 = sadd.s32 1, %s566
              $region182: #{tpu_custom_call.1} parent=175 // loop_footer_branch
                %565 = sbr.rel target = $region178
              $region183: #{tpu_custom_call.1} parent=175 // loop_exit
                _
            $region176: #{tpu_custom_call.1} parent=47 // pred_fallthru
              _
            // Predicated region
            $region195: #{tpu_custom_call.1} parent=47 // pred_check
              _
            $region196: #{tpu_custom_call.1} parent=47 // pred_check_branch
              %598 = sbr.rel (0) target = $region198
            $region197: #{tpu_custom_call.1} parent=47 // pred_region
              %599 = vsyncadd [#allocation3], 16
            $region198: #{tpu_custom_call.1} parent=47 // pred_fallthru
              _
            %s600 = sadd.s32 0, 5
            %s601 = sadd.s32 %s346, %s600
            %s602 = sld [smem:[#allocation5 + %s601]]
            %s603 = sadd.s32 0, %s600
            %s604 = scalar_lea.vmem %s2, %s602
            %s605 = scalar_lea.vmem [#allocation2], %s603
            %p607 = scmp.lt.u32.totalorder 1, 8
            %p608 = pneg %p607
            // Predicated region
            $region199: #{tpu_custom_call.1} parent=47 // pred_check
              _
            $region200: #{tpu_custom_call.1} parent=47 // pred_check_branch
              %610 = sbr.rel (%p607) target = $region202
            $region201: #{tpu_custom_call.1} parent=47 // pred_region
              %s625 = sand.u32 1, 7
              %p626 = scmp.eq.s32.totalorder %s625, 0
              %p627 = pneg %p626
              // Predicated region
              $region214: #{tpu_custom_call.1} parent=201 // pred_check
                _
              $region215: #{tpu_custom_call.1} parent=201 // pred_check_branch
                %629 = sbr.rel (%p626) target = $region217
              $region216: #{tpu_custom_call.1} parent=201 // pred_region
                %s630 = sand.u32 1, 7
                %s631 = ssub.s32 1, %s630
                %s632 = scalar_lea.vmem %s604, %s631
                %s633 = ssub.s32 1, %s630
                %s634 = scalar_lea.vmem %s605, %s633 [#allocation2]
                %s635 = sshllo.u32 0, %s630
                loop: start=0, step=1, limit=1
                $region218: #{tpu_custom_call.1} parent=216 // loop_pre_header
                  _
                $region219: #{tpu_custom_call.1} parent=216 // loop_header
                  %s637 = sphi 0, %s641
                  %p638 = scmp.ge.s32.totalorder %s637, 1
                  %s642 = sphi %s632, %s632
                  %s643 = sphi %s634, %s634
                $region220: #{tpu_custom_call.1} parent=216 // loop_header_branch
                  %640 = sbr.rel (%p638) target = $region224
                $region221: #{tpu_custom_call.1} parent=216 // loop_body
                  %v644 = vld [vmem:[%s642] sm:%s635]
                  %645 = vst [vmem:[%s643] sm:%s635] %v644
                $region222: #{tpu_custom_call.1} parent=216 // loop_footer
                  %s641 = sadd.s32 1, %s637
                $region223: #{tpu_custom_call.1} parent=216 // loop_footer_branch
                  %636 = sbr.rel target = $region219
                $region224: #{tpu_custom_call.1} parent=216 // loop_exit
                  _
              $region217: #{tpu_custom_call.1} parent=201 // pred_fallthru
                _
            $region202: #{tpu_custom_call.1} parent=47 // pred_fallthru
              _
            // Predicated region
            $region203: #{tpu_custom_call.1} parent=47 // pred_check
              %p611 = pneg %p607
            $region204: #{tpu_custom_call.1} parent=47 // pred_check_branch
              %613 = sbr.rel (%p611) target = $region206
            $region205: #{tpu_custom_call.1} parent=47 // pred_region
              %s614 = sshllo.u32 0, 1
              loop: start=0, step=1, limit=1
              $region207: #{tpu_custom_call.1} parent=205 // loop_pre_header
                _
              $region208: #{tpu_custom_call.1} parent=205 // loop_header
                %s616 = sphi 0, %s620
                %p617 = scmp.ge.s32.totalorder %s616, 1
                %s621 = sphi %s604, %s604
                %s622 = sphi %s605, %s605
              $region209: #{tpu_custom_call.1} parent=205 // loop_header_branch
                %619 = sbr.rel (%p617) target = $region213
              $region210: #{tpu_custom_call.1} parent=205 // loop_body
                %v623 = vld [vmem:[%s621] sm:%s614]
                %624 = vst [vmem:[%s622] sm:%s614] %v623
              $region211: #{tpu_custom_call.1} parent=205 // loop_footer
                %s620 = sadd.s32 1, %s616
              $region212: #{tpu_custom_call.1} parent=205 // loop_footer_branch
                %615 = sbr.rel target = $region208
              $region213: #{tpu_custom_call.1} parent=205 // loop_exit
                _
            $region206: #{tpu_custom_call.1} parent=47 // pred_fallthru
              _
            // Predicated region
            $region225: #{tpu_custom_call.1} parent=47 // pred_check
              _
            $region226: #{tpu_custom_call.1} parent=47 // pred_check_branch
              %648 = sbr.rel (0) target = $region228
            $region227: #{tpu_custom_call.1} parent=47 // pred_region
              %649 = vsyncadd [#allocation3], 16
            $region228: #{tpu_custom_call.1} parent=47 // pred_fallthru
              _
            %s650 = sadd.s32 0, 6
            %s651 = sadd.s32 %s346, %s650
            %s652 = sld [smem:[#allocation5 + %s651]]
            %s653 = sadd.s32 0, %s650
            %s654 = scalar_lea.vmem %s2, %s652
            %s655 = scalar_lea.vmem [#allocation2], %s653
            %p657 = scmp.lt.u32.totalorder 1, 8
            %p658 = pneg %p657
            // Predicated region
            $region229: #{tpu_custom_call.1} parent=47 // pred_check
              _
            $region230: #{tpu_custom_call.1} parent=47 // pred_check_branch
              %660 = sbr.rel (%p657) target = $region232
            $region231: #{tpu_custom_call.1} parent=47 // pred_region
              %s675 = sand.u32 1, 7
              %p676 = scmp.eq.s32.totalorder %s675, 0
              %p677 = pneg %p676
              // Predicated region
              $region244: #{tpu_custom_call.1} parent=231 // pred_check
                _
              $region245: #{tpu_custom_call.1} parent=231 // pred_check_branch
                %679 = sbr.rel (%p676) target = $region247
              $region246: #{tpu_custom_call.1} parent=231 // pred_region
                %s680 = sand.u32 1, 7
                %s681 = ssub.s32 1, %s680
                %s682 = scalar_lea.vmem %s654, %s681
                %s683 = ssub.s32 1, %s680
                %s684 = scalar_lea.vmem %s655, %s683 [#allocation2]
                %s685 = sshllo.u32 0, %s680
                loop: start=0, step=1, limit=1
                $region248: #{tpu_custom_call.1} parent=246 // loop_pre_header
                  _
                $region249: #{tpu_custom_call.1} parent=246 // loop_header
                  %s687 = sphi 0, %s691
                  %p688 = scmp.ge.s32.totalorder %s687, 1
                  %s692 = sphi %s682, %s682
                  %s693 = sphi %s684, %s684
                $region250: #{tpu_custom_call.1} parent=246 // loop_header_branch
                  %690 = sbr.rel (%p688) target = $region254
                $region251: #{tpu_custom_call.1} parent=246 // loop_body
                  %v694 = vld [vmem:[%s692] sm:%s685]
                  %695 = vst [vmem:[%s693] sm:%s685] %v694
                $region252: #{tpu_custom_call.1} parent=246 // loop_footer
                  %s691 = sadd.s32 1, %s687
                $region253: #{tpu_custom_call.1} parent=246 // loop_footer_branch
                  %686 = sbr.rel target = $region249
                $region254: #{tpu_custom_call.1} parent=246 // loop_exit
                  _
              $region247: #{tpu_custom_call.1} parent=231 // pred_fallthru
                _
            $region232: #{tpu_custom_call.1} parent=47 // pred_fallthru
              _
            // Predicated region
            $region233: #{tpu_custom_call.1} parent=47 // pred_check
              %p661 = pneg %p657
            $region234: #{tpu_custom_call.1} parent=47 // pred_check_branch
              %663 = sbr.rel (%p661) target = $region236
            $region235: #{tpu_custom_call.1} parent=47 // pred_region
              %s664 = sshllo.u32 0, 1
              loop: start=0, step=1, limit=1
              $region237: #{tpu_custom_call.1} parent=235 // loop_pre_header
                _
              $region238: #{tpu_custom_call.1} parent=235 // loop_header
                %s666 = sphi 0, %s670
                %p667 = scmp.ge.s32.totalorder %s666, 1
                %s671 = sphi %s654, %s654
                %s672 = sphi %s655, %s655
              $region239: #{tpu_custom_call.1} parent=235 // loop_header_branch
                %669 = sbr.rel (%p667) target = $region243
              $region240: #{tpu_custom_call.1} parent=235 // loop_body
                %v673 = vld [vmem:[%s671] sm:%s664]
                %674 = vst [vmem:[%s672] sm:%s664] %v673
              $region241: #{tpu_custom_call.1} parent=235 // loop_footer
                %s670 = sadd.s32 1, %s666
              $region242: #{tpu_custom_call.1} parent=235 // loop_footer_branch
                %665 = sbr.rel target = $region238
              $region243: #{tpu_custom_call.1} parent=235 // loop_exit
                _
            $region236: #{tpu_custom_call.1} parent=47 // pred_fallthru
              _
            // Predicated region
            $region255: #{tpu_custom_call.1} parent=47 // pred_check
              _
            $region256: #{tpu_custom_call.1} parent=47 // pred_check_branch
              %698 = sbr.rel (0) target = $region258
            $region257: #{tpu_custom_call.1} parent=47 // pred_region
              %699 = vsyncadd [#allocation3], 16
            $region258: #{tpu_custom_call.1} parent=47 // pred_fallthru
              _
            %s700 = sadd.s32 0, 7
            %s701 = sadd.s32 %s346, %s700
            %s702 = sld [smem:[#allocation5 + %s701]]
            %s703 = sadd.s32 0, %s700
            %s704 = scalar_lea.vmem %s2, %s702
            %s705 = scalar_lea.vmem [#allocation2], %s703
            %p707 = scmp.lt.u32.totalorder 1, 8
            %p708 = pneg %p707
            // Predicated region
            $region259: #{tpu_custom_call.1} parent=47 // pred_check
              _
            $region260: #{tpu_custom_call.1} parent=47 // pred_check_branch
              %710 = sbr.rel (%p707) target = $region262
            $region261: #{tpu_custom_call.1} parent=47 // pred_region
              %s725 = sand.u32 1, 7
              %p726 = scmp.eq.s32.totalorder %s725, 0
              %p727 = pneg %p726
              // Predicated region
              $region274: #{tpu_custom_call.1} parent=261 // pred_check
                _
              $region275: #{tpu_custom_call.1} parent=261 // pred_check_branch
                %729 = sbr.rel (%p726) target = $region277
              $region276: #{tpu_custom_call.1} parent=261 // pred_region
                %s730 = sand.u32 1, 7
                %s731 = ssub.s32 1, %s730
                %s732 = scalar_lea.vmem %s704, %s731
                %s733 = ssub.s32 1, %s730
                %s734 = scalar_lea.vmem %s705, %s733 [#allocation2]
                %s735 = sshllo.u32 0, %s730
                loop: start=0, step=1, limit=1
                $region278: #{tpu_custom_call.1} parent=276 // loop_pre_header
                  _
                $region279: #{tpu_custom_call.1} parent=276 // loop_header
                  %s737 = sphi 0, %s741
                  %p738 = scmp.ge.s32.totalorder %s737, 1
                  %s742 = sphi %s732, %s732
                  %s743 = sphi %s734, %s734
                $region280: #{tpu_custom_call.1} parent=276 // loop_header_branch
                  %740 = sbr.rel (%p738) target = $region284
                $region281: #{tpu_custom_call.1} parent=276 // loop_body
                  %v744 = vld [vmem:[%s742] sm:%s735]
                  %745 = vst [vmem:[%s743] sm:%s735] %v744
                $region282: #{tpu_custom_call.1} parent=276 // loop_footer
                  %s741 = sadd.s32 1, %s737
                $region283: #{tpu_custom_call.1} parent=276 // loop_footer_branch
                  %736 = sbr.rel target = $region279
                $region284: #{tpu_custom_call.1} parent=276 // loop_exit
                  _
              $region277: #{tpu_custom_call.1} parent=261 // pred_fallthru
                _
            $region262: #{tpu_custom_call.1} parent=47 // pred_fallthru
              _
            // Predicated region
            $region263: #{tpu_custom_call.1} parent=47 // pred_check
              %p711 = pneg %p707
            $region264: #{tpu_custom_call.1} parent=47 // pred_check_branch
              %713 = sbr.rel (%p711) target = $region266
            $region265: #{tpu_custom_call.1} parent=47 // pred_region
              %s714 = sshllo.u32 0, 1
              loop: start=0, step=1, limit=1
              $region267: #{tpu_custom_call.1} parent=265 // loop_pre_header
                _
              $region268: #{tpu_custom_call.1} parent=265 // loop_header
                %s716 = sphi 0, %s720
                %p717 = scmp.ge.s32.totalorder %s716, 1
                %s721 = sphi %s704, %s704
                %s722 = sphi %s705, %s705
              $region269: #{tpu_custom_call.1} parent=265 // loop_header_branch
                %719 = sbr.rel (%p717) target = $region273
              $region270: #{tpu_custom_call.1} parent=265 // loop_body
                %v723 = vld [vmem:[%s721] sm:%s714]
                %724 = vst [vmem:[%s722] sm:%s714] %v723
              $region271: #{tpu_custom_call.1} parent=265 // loop_footer
                %s720 = sadd.s32 1, %s716
              $region272: #{tpu_custom_call.1} parent=265 // loop_footer_branch
                %715 = sbr.rel target = $region268
              $region273: #{tpu_custom_call.1} parent=265 // loop_exit
                _
            $region266: #{tpu_custom_call.1} parent=47 // pred_fallthru
              _
            // Predicated region
            $region285: #{tpu_custom_call.1} parent=47 // pred_check
              _
            $region286: #{tpu_custom_call.1} parent=47 // pred_check_branch
              %748 = sbr.rel (0) target = $region288
            $region287: #{tpu_custom_call.1} parent=47 // pred_region
              %749 = vsyncadd [#allocation3], 16
            $region288: #{tpu_custom_call.1} parent=47 // pred_fallthru
              _
          $region48: #{tpu_custom_call.1} parent=43 // pred_fallthru
            _
          %p750 = scmp.ne.s32.totalorder %s33, 0
          // Predicated region
          $region289: #{tpu_custom_call.1} parent=43 // pred_check
            %p751 = pneg %p750
          $region290: #{tpu_custom_call.1} parent=43 // pred_check_branch
            %753 = sbr.rel (%p751) target = $region292
          $region291: #{tpu_custom_call.1} parent=43 // pred_region
            %s754 = sadd.s32 %s346, 0
            %s755 = sld [smem:[#allocation5 + %s754]]
            %s756 = sadd.s32 0, 0
            %s757 = scalar_lea.vmem %s3, %s755
            %s758 = scalar_lea.vmem [#allocation2], %s756
            %p760 = scmp.lt.u32.totalorder 1, 8
            %p761 = pneg %p760
            // Predicated region
            $region293: #{tpu_custom_call.1} parent=291 // pred_check
              _
            $region294: #{tpu_custom_call.1} parent=291 // pred_check_branch
              %763 = sbr.rel (%p760) target = $region296
            $region295: #{tpu_custom_call.1} parent=291 // pred_region
              %s778 = sand.u32 1, 7
              %p779 = scmp.eq.s32.totalorder %s778, 0
              %p780 = pneg %p779
              // Predicated region
              $region308: #{tpu_custom_call.1} parent=295 // pred_check
                _
              $region309: #{tpu_custom_call.1} parent=295 // pred_check_branch
                %782 = sbr.rel (%p779) target = $region311
              $region310: #{tpu_custom_call.1} parent=295 // pred_region
                %s783 = sand.u32 1, 7
                %s784 = ssub.s32 1, %s783
                %s785 = scalar_lea.vmem %s757, %s784
                %s786 = ssub.s32 1, %s783
                %s787 = scalar_lea.vmem %s758, %s786 [#allocation2]
                %s788 = sshllo.u32 0, %s783
                loop: start=0, step=1, limit=1
                $region312: #{tpu_custom_call.1} parent=310 // loop_pre_header
                  _
                $region313: #{tpu_custom_call.1} parent=310 // loop_header
                  %s790 = sphi 0, %s794
                  %p791 = scmp.ge.s32.totalorder %s790, 1
                  %s795 = sphi %s785, %s785
                  %s796 = sphi %s787, %s787
                $region314: #{tpu_custom_call.1} parent=310 // loop_header_branch
                  %793 = sbr.rel (%p791) target = $region318
                $region315: #{tpu_custom_call.1} parent=310 // loop_body
                  %v797 = vld [vmem:[%s795] sm:%s788]
                  %798 = vst [vmem:[%s796] sm:%s788] %v797
                $region316: #{tpu_custom_call.1} parent=310 // loop_footer
                  %s794 = sadd.s32 1, %s790
                $region317: #{tpu_custom_call.1} parent=310 // loop_footer_branch
                  %789 = sbr.rel target = $region313
                $region318: #{tpu_custom_call.1} parent=310 // loop_exit
                  _
              $region311: #{tpu_custom_call.1} parent=295 // pred_fallthru
                _
            $region296: #{tpu_custom_call.1} parent=291 // pred_fallthru
              _
            // Predicated region
            $region297: #{tpu_custom_call.1} parent=291 // pred_check
              %p764 = pneg %p760
            $region298: #{tpu_custom_call.1} parent=291 // pred_check_branch
              %766 = sbr.rel (%p764) target = $region300
            $region299: #{tpu_custom_call.1} parent=291 // pred_region
              %s767 = sshllo.u32 0, 1
              loop: start=0, step=1, limit=1
              $region301: #{tpu_custom_call.1} parent=299 // loop_pre_header
                _
              $region302: #{tpu_custom_call.1} parent=299 // loop_header
                %s769 = sphi 0, %s773
                %p770 = scmp.ge.s32.totalorder %s769, 1
                %s774 = sphi %s757, %s757
                %s775 = sphi %s758, %s758
              $region303: #{tpu_custom_call.1} parent=299 // loop_header_branch
                %772 = sbr.rel (%p770) target = $region307
              $region304: #{tpu_custom_call.1} parent=299 // loop_body
                %v776 = vld [vmem:[%s774] sm:%s767]
                %777 = vst [vmem:[%s775] sm:%s767] %v776
              $region305: #{tpu_custom_call.1} parent=299 // loop_footer
                %s773 = sadd.s32 1, %s769
              $region306: #{tpu_custom_call.1} parent=299 // loop_footer_branch
                %768 = sbr.rel target = $region302
              $region307: #{tpu_custom_call.1} parent=299 // loop_exit
                _
            $region300: #{tpu_custom_call.1} parent=291 // pred_fallthru
              _
            // Predicated region
            $region319: #{tpu_custom_call.1} parent=291 // pred_check
              _
            $region320: #{tpu_custom_call.1} parent=291 // pred_check_branch
              %801 = sbr.rel (0) target = $region322
            $region321: #{tpu_custom_call.1} parent=291 // pred_region
              %802 = vsyncadd [#allocation3], 16
            $region322: #{tpu_custom_call.1} parent=291 // pred_fallthru
              _
            %s803 = sadd.s32 0, 1
            %s804 = sadd.s32 %s346, %s803
            %s805 = sld [smem:[#allocation5 + %s804]]
            %s806 = sadd.s32 0, %s803
            %s807 = scalar_lea.vmem %s3, %s805
            %s808 = scalar_lea.vmem [#allocation2], %s806
            %p810 = scmp.lt.u32.totalorder 1, 8
            %p811 = pneg %p810
            // Predicated region
            $region323: #{tpu_custom_call.1} parent=291 // pred_check
              _
            $region324: #{tpu_custom_call.1} parent=291 // pred_check_branch
              %813 = sbr.rel (%p810) target = $region326
            $region325: #{tpu_custom_call.1} parent=291 // pred_region
              %s828 = sand.u32 1, 7
              %p829 = scmp.eq.s32.totalorder %s828, 0
              %p830 = pneg %p829
              // Predicated region
              $region338: #{tpu_custom_call.1} parent=325 // pred_check
                _
              $region339: #{tpu_custom_call.1} parent=325 // pred_check_branch
                %832 = sbr.rel (%p829) target = $region341
              $region340: #{tpu_custom_call.1} parent=325 // pred_region
                %s833 = sand.u32 1, 7
                %s834 = ssub.s32 1, %s833
                %s835 = scalar_lea.vmem %s807, %s834
                %s836 = ssub.s32 1, %s833
                %s837 = scalar_lea.vmem %s808, %s836 [#allocation2]
                %s838 = sshllo.u32 0, %s833
                loop: start=0, step=1, limit=1
                $region342: #{tpu_custom_call.1} parent=340 // loop_pre_header
                  _
                $region343: #{tpu_custom_call.1} parent=340 // loop_header
                  %s840 = sphi 0, %s844
                  %p841 = scmp.ge.s32.totalorder %s840, 1
                  %s845 = sphi %s835, %s835
                  %s846 = sphi %s837, %s837
                $region344: #{tpu_custom_call.1} parent=340 // loop_header_branch
                  %843 = sbr.rel (%p841) target = $region348
                $region345: #{tpu_custom_call.1} parent=340 // loop_body
                  %v847 = vld [vmem:[%s845] sm:%s838]
                  %848 = vst [vmem:[%s846] sm:%s838] %v847
                $region346: #{tpu_custom_call.1} parent=340 // loop_footer
                  %s844 = sadd.s32 1, %s840
                $region347: #{tpu_custom_call.1} parent=340 // loop_footer_branch
                  %839 = sbr.rel target = $region343
                $region348: #{tpu_custom_call.1} parent=340 // loop_exit
                  _
              $region341: #{tpu_custom_call.1} parent=325 // pred_fallthru
                _
            $region326: #{tpu_custom_call.1} parent=291 // pred_fallthru
              _
            // Predicated region
            $region327: #{tpu_custom_call.1} parent=291 // pred_check
              %p814 = pneg %p810
            $region328: #{tpu_custom_call.1} parent=291 // pred_check_branch
              %816 = sbr.rel (%p814) target = $region330
            $region329: #{tpu_custom_call.1} parent=291 // pred_region
              %s817 = sshllo.u32 0, 1
              loop: start=0, step=1, limit=1
              $region331: #{tpu_custom_call.1} parent=329 // loop_pre_header
                _
              $region332: #{tpu_custom_call.1} parent=329 // loop_header
                %s819 = sphi 0, %s823
                %p820 = scmp.ge.s32.totalorder %s819, 1
                %s824 = sphi %s807, %s807
                %s825 = sphi %s808, %s808
              $region333: #{tpu_custom_call.1} parent=329 // loop_header_branch
                %822 = sbr.rel (%p820) target = $region337
              $region334: #{tpu_custom_call.1} parent=329 // loop_body
                %v826 = vld [vmem:[%s824] sm:%s817]
                %827 = vst [vmem:[%s825] sm:%s817] %v826
              $region335: #{tpu_custom_call.1} parent=329 // loop_footer
                %s823 = sadd.s32 1, %s819
              $region336: #{tpu_custom_call.1} parent=329 // loop_footer_branch
                %818 = sbr.rel target = $region332
              $region337: #{tpu_custom_call.1} parent=329 // loop_exit
                _
            $region330: #{tpu_custom_call.1} parent=291 // pred_fallthru
              _
            // Predicated region
            $region349: #{tpu_custom_call.1} parent=291 // pred_check
              _
            $region350: #{tpu_custom_call.1} parent=291 // pred_check_branch
              %851 = sbr.rel (0) target = $region352
            $region351: #{tpu_custom_call.1} parent=291 // pred_region
              %852 = vsyncadd [#allocation3], 16
            $region352: #{tpu_custom_call.1} parent=291 // pred_fallthru
              _
            %s853 = sadd.s32 0, 2
            %s854 = sadd.s32 %s346, %s853
            %s855 = sld [smem:[#allocation5 + %s854]]
            %s856 = sadd.s32 0, %s853
            %s857 = scalar_lea.vmem %s3, %s855
            %s858 = scalar_lea.vmem [#allocation2], %s856
            %p860 = scmp.lt.u32.totalorder 1, 8
            %p861 = pneg %p860
            // Predicated region
            $region353: #{tpu_custom_call.1} parent=291 // pred_check
              _
            $region354: #{tpu_custom_call.1} parent=291 // pred_check_branch
              %863 = sbr.rel (%p860) target = $region356
            $region355: #{tpu_custom_call.1} parent=291 // pred_region
              %s878 = sand.u32 1, 7
              %p879 = scmp.eq.s32.totalorder %s878, 0
              %p880 = pneg %p879
              // Predicated region
              $region368: #{tpu_custom_call.1} parent=355 // pred_check
                _
              $region369: #{tpu_custom_call.1} parent=355 // pred_check_branch
                %882 = sbr.rel (%p879) target = $region371
              $region370: #{tpu_custom_call.1} parent=355 // pred_region
                %s883 = sand.u32 1, 7
                %s884 = ssub.s32 1, %s883
                %s885 = scalar_lea.vmem %s857, %s884
                %s886 = ssub.s32 1, %s883
                %s887 = scalar_lea.vmem %s858, %s886 [#allocation2]
                %s888 = sshllo.u32 0, %s883
                loop: start=0, step=1, limit=1
                $region372: #{tpu_custom_call.1} parent=370 // loop_pre_header
                  _
                $region373: #{tpu_custom_call.1} parent=370 // loop_header
                  %s890 = sphi 0, %s894
                  %p891 = scmp.ge.s32.totalorder %s890, 1
                  %s895 = sphi %s885, %s885
                  %s896 = sphi %s887, %s887
                $region374: #{tpu_custom_call.1} parent=370 // loop_header_branch
                  %893 = sbr.rel (%p891) target = $region378
                $region375: #{tpu_custom_call.1} parent=370 // loop_body
                  %v897 = vld [vmem:[%s895] sm:%s888]
                  %898 = vst [vmem:[%s896] sm:%s888] %v897
                $region376: #{tpu_custom_call.1} parent=370 // loop_footer
                  %s894 = sadd.s32 1, %s890
                $region377: #{tpu_custom_call.1} parent=370 // loop_footer_branch
                  %889 = sbr.rel target = $region373
                $region378: #{tpu_custom_call.1} parent=370 // loop_exit
                  _
              $region371: #{tpu_custom_call.1} parent=355 // pred_fallthru
                _
            $region356: #{tpu_custom_call.1} parent=291 // pred_fallthru
              _
            // Predicated region
            $region357: #{tpu_custom_call.1} parent=291 // pred_check
              %p864 = pneg %p860
            $region358: #{tpu_custom_call.1} parent=291 // pred_check_branch
              %866 = sbr.rel (%p864) target = $region360
            $region359: #{tpu_custom_call.1} parent=291 // pred_region
              %s867 = sshllo.u32 0, 1
              loop: start=0, step=1, limit=1
              $region361: #{tpu_custom_call.1} parent=359 // loop_pre_header
                _
              $region362: #{tpu_custom_call.1} parent=359 // loop_header
                %s869 = sphi 0, %s873
                %p870 = scmp.ge.s32.totalorder %s869, 1
                %s874 = sphi %s857, %s857
                %s875 = sphi %s858, %s858
              $region363: #{tpu_custom_call.1} parent=359 // loop_header_branch
                %872 = sbr.rel (%p870) target = $region367
              $region364: #{tpu_custom_call.1} parent=359 // loop_body
                %v876 = vld [vmem:[%s874] sm:%s867]
                %877 = vst [vmem:[%s875] sm:%s867] %v876
              $region365: #{tpu_custom_call.1} parent=359 // loop_footer
                %s873 = sadd.s32 1, %s869
              $region366: #{tpu_custom_call.1} parent=359 // loop_footer_branch
                %868 = sbr.rel target = $region362
              $region367: #{tpu_custom_call.1} parent=359 // loop_exit
                _
            $region360: #{tpu_custom_call.1} parent=291 // pred_fallthru
              _
            // Predicated region
            $region379: #{tpu_custom_call.1} parent=291 // pred_check
              _
            $region380: #{tpu_custom_call.1} parent=291 // pred_check_branch
              %901 = sbr.rel (0) target = $region382
            $region381: #{tpu_custom_call.1} parent=291 // pred_region
              %902 = vsyncadd [#allocation3], 16
            $region382: #{tpu_custom_call.1} parent=291 // pred_fallthru
              _
            %s903 = sadd.s32 0, 3
            %s904 = sadd.s32 %s346, %s903
            %s905 = sld [smem:[#allocation5 + %s904]]
            %s906 = sadd.s32 0, %s903
            %s907 = scalar_lea.vmem %s3, %s905
            %s908 = scalar_lea.vmem [#allocation2], %s906
            %p910 = scmp.lt.u32.totalorder 1, 8
            %p911 = pneg %p910
            // Predicated region
            $region383: #{tpu_custom_call.1} parent=291 // pred_check
              _
            $region384: #{tpu_custom_call.1} parent=291 // pred_check_branch
              %913 = sbr.rel (%p910) target = $region386
            $region385: #{tpu_custom_call.1} parent=291 // pred_region
              %s928 = sand.u32 1, 7
              %p929 = scmp.eq.s32.totalorder %s928, 0
              %p930 = pneg %p929
              // Predicated region
              $region398: #{tpu_custom_call.1} parent=385 // pred_check
                _
              $region399: #{tpu_custom_call.1} parent=385 // pred_check_branch
                %932 = sbr.rel (%p929) target = $region401
              $region400: #{tpu_custom_call.1} parent=385 // pred_region
                %s933 = sand.u32 1, 7
                %s934 = ssub.s32 1, %s933
                %s935 = scalar_lea.vmem %s907, %s934
                %s936 = ssub.s32 1, %s933
                %s937 = scalar_lea.vmem %s908, %s936 [#allocation2]
                %s938 = sshllo.u32 0, %s933
                loop: start=0, step=1, limit=1
                $region402: #{tpu_custom_call.1} parent=400 // loop_pre_header
                  _
                $region403: #{tpu_custom_call.1} parent=400 // loop_header
                  %s940 = sphi 0, %s944
                  %p941 = scmp.ge.s32.totalorder %s940, 1
                  %s945 = sphi %s935, %s935
                  %s946 = sphi %s937, %s937
                $region404: #{tpu_custom_call.1} parent=400 // loop_header_branch
                  %943 = sbr.rel (%p941) target = $region408
                $region405: #{tpu_custom_call.1} parent=400 // loop_body
                  %v947 = vld [vmem:[%s945] sm:%s938]
                  %948 = vst [vmem:[%s946] sm:%s938] %v947
                $region406: #{tpu_custom_call.1} parent=400 // loop_footer
                  %s944 = sadd.s32 1, %s940
                $region407: #{tpu_custom_call.1} parent=400 // loop_footer_branch
                  %939 = sbr.rel target = $region403
                $region408: #{tpu_custom_call.1} parent=400 // loop_exit
                  _
              $region401: #{tpu_custom_call.1} parent=385 // pred_fallthru
                _
            $region386: #{tpu_custom_call.1} parent=291 // pred_fallthru
              _
            // Predicated region
            $region387: #{tpu_custom_call.1} parent=291 // pred_check
              %p914 = pneg %p910
            $region388: #{tpu_custom_call.1} parent=291 // pred_check_branch
              %916 = sbr.rel (%p914) target = $region390
            $region389: #{tpu_custom_call.1} parent=291 // pred_region
              %s917 = sshllo.u32 0, 1
              loop: start=0, step=1, limit=1
              $region391: #{tpu_custom_call.1} parent=389 // loop_pre_header
                _
              $region392: #{tpu_custom_call.1} parent=389 // loop_header
                %s919 = sphi 0, %s923
                %p920 = scmp.ge.s32.totalorder %s919, 1
                %s924 = sphi %s907, %s907
                %s925 = sphi %s908, %s908
              $region393: #{tpu_custom_call.1} parent=389 // loop_header_branch
                %922 = sbr.rel (%p920) target = $region397
              $region394: #{tpu_custom_call.1} parent=389 // loop_body
                %v926 = vld [vmem:[%s924] sm:%s917]
                %927 = vst [vmem:[%s925] sm:%s917] %v926
              $region395: #{tpu_custom_call.1} parent=389 // loop_footer
                %s923 = sadd.s32 1, %s919
              $region396: #{tpu_custom_call.1} parent=389 // loop_footer_branch
                %918 = sbr.rel target = $region392
              $region397: #{tpu_custom_call.1} parent=389 // loop_exit
                _
            $region390: #{tpu_custom_call.1} parent=291 // pred_fallthru
              _
            // Predicated region
            $region409: #{tpu_custom_call.1} parent=291 // pred_check
              _
            $region410: #{tpu_custom_call.1} parent=291 // pred_check_branch
              %951 = sbr.rel (0) target = $region412
            $region411: #{tpu_custom_call.1} parent=291 // pred_region
              %952 = vsyncadd [#allocation3], 16
            $region412: #{tpu_custom_call.1} parent=291 // pred_fallthru
              _
            %s953 = sadd.s32 0, 4
            %s954 = sadd.s32 %s346, %s953
            %s955 = sld [smem:[#allocation5 + %s954]]
            %s956 = sadd.s32 0, %s953
            %s957 = scalar_lea.vmem %s3, %s955
            %s958 = scalar_lea.vmem [#allocation2], %s956
            %p960 = scmp.lt.u32.totalorder 1, 8
            %p961 = pneg %p960
            // Predicated region
            $region413: #{tpu_custom_call.1} parent=291 // pred_check
              _
            $region414: #{tpu_custom_call.1} parent=291 // pred_check_branch
              %963 = sbr.rel (%p960) target = $region416
            $region415: #{tpu_custom_call.1} parent=291 // pred_region
              %s978 = sand.u32 1, 7
              %p979 = scmp.eq.s32.totalorder %s978, 0
              %p980 = pneg %p979
              // Predicated region
              $region428: #{tpu_custom_call.1} parent=415 // pred_check
                _
              $region429: #{tpu_custom_call.1} parent=415 // pred_check_branch
                %982 = sbr.rel (%p979) target = $region431
              $region430: #{tpu_custom_call.1} parent=415 // pred_region
                %s983 = sand.u32 1, 7
                %s984 = ssub.s32 1, %s983
                %s985 = scalar_lea.vmem %s957, %s984
                %s986 = ssub.s32 1, %s983
                %s987 = scalar_lea.vmem %s958, %s986 [#allocation2]
                %s988 = sshllo.u32 0, %s983
                loop: start=0, step=1, limit=1
                $region432: #{tpu_custom_call.1} parent=430 // loop_pre_header
                  _
                $region433: #{tpu_custom_call.1} parent=430 // loop_header
                  %s990 = sphi 0, %s994
                  %p991 = scmp.ge.s32.totalorder %s990, 1
                  %s995 = sphi %s985, %s985
                  %s996 = sphi %s987, %s987
                $region434: #{tpu_custom_call.1} parent=430 // loop_header_branch
                  %993 = sbr.rel (%p991) target = $region438
                $region435: #{tpu_custom_call.1} parent=430 // loop_body
                  %v997 = vld [vmem:[%s995] sm:%s988]
                  %998 = vst [vmem:[%s996] sm:%s988] %v997
                $region436: #{tpu_custom_call.1} parent=430 // loop_footer
                  %s994 = sadd.s32 1, %s990
                $region437: #{tpu_custom_call.1} parent=430 // loop_footer_branch
                  %989 = sbr.rel target = $region433
                $region438: #{tpu_custom_call.1} parent=430 // loop_exit
                  _
              $region431: #{tpu_custom_call.1} parent=415 // pred_fallthru
                _
            $region416: #{tpu_custom_call.1} parent=291 // pred_fallthru
              _
            // Predicated region
            $region417: #{tpu_custom_call.1} parent=291 // pred_check
              %p964 = pneg %p960
            $region418: #{tpu_custom_call.1} parent=291 // pred_check_branch
              %966 = sbr.rel (%p964) target = $region420
            $region419: #{tpu_custom_call.1} parent=291 // pred_region
              %s967 = sshllo.u32 0, 1
              loop: start=0, step=1, limit=1
              $region421: #{tpu_custom_call.1} parent=419 // loop_pre_header
                _
              $region422: #{tpu_custom_call.1} parent=419 // loop_header
                %s969 = sphi 0, %s973
                %p970 = scmp.ge.s32.totalorder %s969, 1
                %s974 = sphi %s957, %s957
                %s975 = sphi %s958, %s958
              $region423: #{tpu_custom_call.1} parent=419 // loop_header_branch
                %972 = sbr.rel (%p970) target = $region427
              $region424: #{tpu_custom_call.1} parent=419 // loop_body
                %v976 = vld [vmem:[%s974] sm:%s967]
                %977 = vst [vmem:[%s975] sm:%s967] %v976
              $region425: #{tpu_custom_call.1} parent=419 // loop_footer
                %s973 = sadd.s32 1, %s969
              $region426: #{tpu_custom_call.1} parent=419 // loop_footer_branch
                %968 = sbr.rel target = $region422
              $region427: #{tpu_custom_call.1} parent=419 // loop_exit
                _
            $region420: #{tpu_custom_call.1} parent=291 // pred_fallthru
              _
            // Predicated region
            $region439: #{tpu_custom_call.1} parent=291 // pred_check
              _
            $region440: #{tpu_custom_call.1} parent=291 // pred_check_branch
              %1001 = sbr.rel (0) target = $region442
            $region441: #{tpu_custom_call.1} parent=291 // pred_region
              %1002 = vsyncadd [#allocation3], 16
            $region442: #{tpu_custom_call.1} parent=291 // pred_fallthru
              _
            %s1003 = sadd.s32 0, 5
            %s1004 = sadd.s32 %s346, %s1003
            %s1005 = sld [smem:[#allocation5 + %s1004]]
            %s1006 = sadd.s32 0, %s1003
            %s1007 = scalar_lea.vmem %s3, %s1005
            %s1008 = scalar_lea.vmem [#allocation2], %s1006
            %p1010 = scmp.lt.u32.totalorder 1, 8
            %p1011 = pneg %p1010
            // Predicated region
            $region443: #{tpu_custom_call.1} parent=291 // pred_check
              _
            $region444: #{tpu_custom_call.1} parent=291 // pred_check_branch
              %1013 = sbr.rel (%p1010) target = $region446
            $region445: #{tpu_custom_call.1} parent=291 // pred_region
              %s1028 = sand.u32 1, 7
              %p1029 = scmp.eq.s32.totalorder %s1028, 0
              %p1030 = pneg %p1029
              // Predicated region
              $region458: #{tpu_custom_call.1} parent=445 // pred_check
                _
              $region459: #{tpu_custom_call.1} parent=445 // pred_check_branch
                %1032 = sbr.rel (%p1029) target = $region461
              $region460: #{tpu_custom_call.1} parent=445 // pred_region
                %s1033 = sand.u32 1, 7
                %s1034 = ssub.s32 1, %s1033
                %s1035 = scalar_lea.vmem %s1007, %s1034
                %s1036 = ssub.s32 1, %s1033
                %s1037 = scalar_lea.vmem %s1008, %s1036 [#allocation2]
                %s1038 = sshllo.u32 0, %s1033
                loop: start=0, step=1, limit=1
                $region462: #{tpu_custom_call.1} parent=460 // loop_pre_header
                  _
                $region463: #{tpu_custom_call.1} parent=460 // loop_header
                  %s1040 = sphi 0, %s1044
                  %p1041 = scmp.ge.s32.totalorder %s1040, 1
                  %s1045 = sphi %s1035, %s1035
                  %s1046 = sphi %s1037, %s1037
                $region464: #{tpu_custom_call.1} parent=460 // loop_header_branch
                  %1043 = sbr.rel (%p1041) target = $region468
                $region465: #{tpu_custom_call.1} parent=460 // loop_body
                  %v1047 = vld [vmem:[%s1045] sm:%s1038]
                  %1048 = vst [vmem:[%s1046] sm:%s1038] %v1047
                $region466: #{tpu_custom_call.1} parent=460 // loop_footer
                  %s1044 = sadd.s32 1, %s1040
                $region467: #{tpu_custom_call.1} parent=460 // loop_footer_branch
                  %1039 = sbr.rel target = $region463
                $region468: #{tpu_custom_call.1} parent=460 // loop_exit
                  _
              $region461: #{tpu_custom_call.1} parent=445 // pred_fallthru
                _
            $region446: #{tpu_custom_call.1} parent=291 // pred_fallthru
              _
            // Predicated region
            $region447: #{tpu_custom_call.1} parent=291 // pred_check
              %p1014 = pneg %p1010
            $region448: #{tpu_custom_call.1} parent=291 // pred_check_branch
              %1016 = sbr.rel (%p1014) target = $region450
            $region449: #{tpu_custom_call.1} parent=291 // pred_region
              %s1017 = sshllo.u32 0, 1
              loop: start=0, step=1, limit=1
              $region451: #{tpu_custom_call.1} parent=449 // loop_pre_header
                _
              $region452: #{tpu_custom_call.1} parent=449 // loop_header
                %s1019 = sphi 0, %s1023
                %p1020 = scmp.ge.s32.totalorder %s1019, 1
                %s1024 = sphi %s1007, %s1007
                %s1025 = sphi %s1008, %s1008
              $region453: #{tpu_custom_call.1} parent=449 // loop_header_branch
                %1022 = sbr.rel (%p1020) target = $region457
              $region454: #{tpu_custom_call.1} parent=449 // loop_body
                %v1026 = vld [vmem:[%s1024] sm:%s1017]
                %1027 = vst [vmem:[%s1025] sm:%s1017] %v1026
              $region455: #{tpu_custom_call.1} parent=449 // loop_footer
                %s1023 = sadd.s32 1, %s1019
              $region456: #{tpu_custom_call.1} parent=449 // loop_footer_branch
                %1018 = sbr.rel target = $region452
              $region457: #{tpu_custom_call.1} parent=449 // loop_exit
                _
            $region450: #{tpu_custom_call.1} parent=291 // pred_fallthru
              _
            // Predicated region
            $region469: #{tpu_custom_call.1} parent=291 // pred_check
              _
            $region470: #{tpu_custom_call.1} parent=291 // pred_check_branch
              %1051 = sbr.rel (0) target = $region472
            $region471: #{tpu_custom_call.1} parent=291 // pred_region
              %1052 = vsyncadd [#allocation3], 16
            $region472: #{tpu_custom_call.1} parent=291 // pred_fallthru
              _
            %s1053 = sadd.s32 0, 6
            %s1054 = sadd.s32 %s346, %s1053
            %s1055 = sld [smem:[#allocation5 + %s1054]]
            %s1056 = sadd.s32 0, %s1053
            %s1057 = scalar_lea.vmem %s3, %s1055
            %s1058 = scalar_lea.vmem [#allocation2], %s1056
            %p1060 = scmp.lt.u32.totalorder 1, 8
            %p1061 = pneg %p1060
            // Predicated region
            $region473: #{tpu_custom_call.1} parent=291 // pred_check
              _
            $region474: #{tpu_custom_call.1} parent=291 // pred_check_branch
              %1063 = sbr.rel (%p1060) target = $region476
            $region475: #{tpu_custom_call.1} parent=291 // pred_region
              %s1078 = sand.u32 1, 7
              %p1079 = scmp.eq.s32.totalorder %s1078, 0
              %p1080 = pneg %p1079
              // Predicated region
              $region488: #{tpu_custom_call.1} parent=475 // pred_check
                _
              $region489: #{tpu_custom_call.1} parent=475 // pred_check_branch
                %1082 = sbr.rel (%p1079) target = $region491
              $region490: #{tpu_custom_call.1} parent=475 // pred_region
                %s1083 = sand.u32 1, 7
                %s1084 = ssub.s32 1, %s1083
                %s1085 = scalar_lea.vmem %s1057, %s1084
                %s1086 = ssub.s32 1, %s1083
                %s1087 = scalar_lea.vmem %s1058, %s1086 [#allocation2]
                %s1088 = sshllo.u32 0, %s1083
                loop: start=0, step=1, limit=1
                $region492: #{tpu_custom_call.1} parent=490 // loop_pre_header
                  _
                $region493: #{tpu_custom_call.1} parent=490 // loop_header
                  %s1090 = sphi 0, %s1094
                  %p1091 = scmp.ge.s32.totalorder %s1090, 1
                  %s1095 = sphi %s1085, %s1085
                  %s1096 = sphi %s1087, %s1087
                $region494: #{tpu_custom_call.1} parent=490 // loop_header_branch
                  %1093 = sbr.rel (%p1091) target = $region498
                $region495: #{tpu_custom_call.1} parent=490 // loop_body
                  %v1097 = vld [vmem:[%s1095] sm:%s1088]
                  %1098 = vst [vmem:[%s1096] sm:%s1088] %v1097
                $region496: #{tpu_custom_call.1} parent=490 // loop_footer
                  %s1094 = sadd.s32 1, %s1090
                $region497: #{tpu_custom_call.1} parent=490 // loop_footer_branch
                  %1089 = sbr.rel target = $region493
                $region498: #{tpu_custom_call.1} parent=490 // loop_exit
                  _
              $region491: #{tpu_custom_call.1} parent=475 // pred_fallthru
                _
            $region476: #{tpu_custom_call.1} parent=291 // pred_fallthru
              _
            // Predicated region
            $region477: #{tpu_custom_call.1} parent=291 // pred_check
              %p1064 = pneg %p1060
            $region478: #{tpu_custom_call.1} parent=291 // pred_check_branch
              %1066 = sbr.rel (%p1064) target = $region480
            $region479: #{tpu_custom_call.1} parent=291 // pred_region
              %s1067 = sshllo.u32 0, 1
              loop: start=0, step=1, limit=1
              $region481: #{tpu_custom_call.1} parent=479 // loop_pre_header
                _
              $region482: #{tpu_custom_call.1} parent=479 // loop_header
                %s1069 = sphi 0, %s1073
                %p1070 = scmp.ge.s32.totalorder %s1069, 1
                %s1074 = sphi %s1057, %s1057
                %s1075 = sphi %s1058, %s1058
              $region483: #{tpu_custom_call.1} parent=479 // loop_header_branch
                %1072 = sbr.rel (%p1070) target = $region487
              $region484: #{tpu_custom_call.1} parent=479 // loop_body
                %v1076 = vld [vmem:[%s1074] sm:%s1067]
                %1077 = vst [vmem:[%s1075] sm:%s1067] %v1076
              $region485: #{tpu_custom_call.1} parent=479 // loop_footer
                %s1073 = sadd.s32 1, %s1069
              $region486: #{tpu_custom_call.1} parent=479 // loop_footer_branch
                %1068 = sbr.rel target = $region482
              $region487: #{tpu_custom_call.1} parent=479 // loop_exit
                _
            $region480: #{tpu_custom_call.1} parent=291 // pred_fallthru
              _
            // Predicated region
            $region499: #{tpu_custom_call.1} parent=291 // pred_check
              _
            $region500: #{tpu_custom_call.1} parent=291 // pred_check_branch
              %1101 = sbr.rel (0) target = $region502
            $region501: #{tpu_custom_call.1} parent=291 // pred_region
              %1102 = vsyncadd [#allocation3], 16
            $region502: #{tpu_custom_call.1} parent=291 // pred_fallthru
              _
            %s1103 = sadd.s32 0, 7
            %s1104 = sadd.s32 %s346, %s1103
            %s1105 = sld [smem:[#allocation5 + %s1104]]
            %s1106 = sadd.s32 0, %s1103
            %s1107 = scalar_lea.vmem %s3, %s1105
            %s1108 = scalar_lea.vmem [#allocation2], %s1106
            %p1110 = scmp.lt.u32.totalorder 1, 8
            %p1111 = pneg %p1110
            // Predicated region
            $region503: #{tpu_custom_call.1} parent=291 // pred_check
              _
            $region504: #{tpu_custom_call.1} parent=291 // pred_check_branch
              %1113 = sbr.rel (%p1110) target = $region506
            $region505: #{tpu_custom_call.1} parent=291 // pred_region
              %s1128 = sand.u32 1, 7
              %p1129 = scmp.eq.s32.totalorder %s1128, 0
              %p1130 = pneg %p1129
              // Predicated region
              $region518: #{tpu_custom_call.1} parent=505 // pred_check
                _
              $region519: #{tpu_custom_call.1} parent=505 // pred_check_branch
                %1132 = sbr.rel (%p1129) target = $region521
              $region520: #{tpu_custom_call.1} parent=505 // pred_region
                %s1133 = sand.u32 1, 7
                %s1134 = ssub.s32 1, %s1133
                %s1135 = scalar_lea.vmem %s1107, %s1134
                %s1136 = ssub.s32 1, %s1133
                %s1137 = scalar_lea.vmem %s1108, %s1136 [#allocation2]
                %s1138 = sshllo.u32 0, %s1133
                loop: start=0, step=1, limit=1
                $region522: #{tpu_custom_call.1} parent=520 // loop_pre_header
                  _
                $region523: #{tpu_custom_call.1} parent=520 // loop_header
                  %s1140 = sphi 0, %s1144
                  %p1141 = scmp.ge.s32.totalorder %s1140, 1
                  %s1145 = sphi %s1135, %s1135
                  %s1146 = sphi %s1137, %s1137
                $region524: #{tpu_custom_call.1} parent=520 // loop_header_branch
                  %1143 = sbr.rel (%p1141) target = $region528
                $region525: #{tpu_custom_call.1} parent=520 // loop_body
                  %v1147 = vld [vmem:[%s1145] sm:%s1138]
                  %1148 = vst [vmem:[%s1146] sm:%s1138] %v1147
                $region526: #{tpu_custom_call.1} parent=520 // loop_footer
                  %s1144 = sadd.s32 1, %s1140
                $region527: #{tpu_custom_call.1} parent=520 // loop_footer_branch
                  %1139 = sbr.rel target = $region523
                $region528: #{tpu_custom_call.1} parent=520 // loop_exit
                  _
              $region521: #{tpu_custom_call.1} parent=505 // pred_fallthru
                _
            $region506: #{tpu_custom_call.1} parent=291 // pred_fallthru
              _
            // Predicated region
            $region507: #{tpu_custom_call.1} parent=291 // pred_check
              %p1114 = pneg %p1110
            $region508: #{tpu_custom_call.1} parent=291 // pred_check_branch
              %1116 = sbr.rel (%p1114) target = $region510
            $region509: #{tpu_custom_call.1} parent=291 // pred_region
              %s1117 = sshllo.u32 0, 1
              loop: start=0, step=1, limit=1
              $region511: #{tpu_custom_call.1} parent=509 // loop_pre_header
                _
              $region512: #{tpu_custom_call.1} parent=509 // loop_header
                %s1119 = sphi 0, %s1123
                %p1120 = scmp.ge.s32.totalorder %s1119, 1
                %s1124 = sphi %s1107, %s1107
                %s1125 = sphi %s1108, %s1108
              $region513: #{tpu_custom_call.1} parent=509 // loop_header_branch
                %1122 = sbr.rel (%p1120) target = $region517
              $region514: #{tpu_custom_call.1} parent=509 // loop_body
                %v1126 = vld [vmem:[%s1124] sm:%s1117]
                %1127 = vst [vmem:[%s1125] sm:%s1117] %v1126
              $region515: #{tpu_custom_call.1} parent=509 // loop_footer
                %s1123 = sadd.s32 1, %s1119
              $region516: #{tpu_custom_call.1} parent=509 // loop_footer_branch
                %1118 = sbr.rel target = $region512
              $region517: #{tpu_custom_call.1} parent=509 // loop_exit
                _
            $region510: #{tpu_custom_call.1} parent=291 // pred_fallthru
              _
            // Predicated region
            $region529: #{tpu_custom_call.1} parent=291 // pred_check
              _
            $region530: #{tpu_custom_call.1} parent=291 // pred_check_branch
              %1151 = sbr.rel (0) target = $region532
            $region531: #{tpu_custom_call.1} parent=291 // pred_region
              %1152 = vsyncadd [#allocation3], 16
            $region532: #{tpu_custom_call.1} parent=291 // pred_fallthru
              _
          $region292: #{tpu_custom_call.1} parent=43 // pred_fallthru
            _
        $region44: #{tpu_custom_call.1} parent=39 // pred_fallthru
          _
        %s1153 = sadd.s32 %s35, 1
        %p1154 = scmp.lt.s32.totalorder %s1153, 1
        // Predicated region
        $region533: #{tpu_custom_call.1} parent=39 // pred_check
          %p1155 = pneg %p1154
        $region534: #{tpu_custom_call.1} parent=39 // pred_check_branch
          %1157 = sbr.rel (%p1155) target = $region536
        $region535: #{tpu_custom_call.1} parent=39 // pred_region
          %s1158 = ssub.s32 1, %s339
          %s1159 = smul.u32 %s33, 16
          %s1160 = smul.u32 %s34, 8
          %s1161 = sadd.s32 %s1159, %s1160
          %s1162 = smul.u32 %s1153, 8
          %s1163 = sadd.s32 %s1161, %s1162
          %s1164 = smul.u32 %s1158, 8
          %p1165 = scmp.eq.s32.totalorder %s33, 0
          // Predicated region
          $region537: #{tpu_custom_call.1} parent=535 // pred_check
            %p1166 = pneg %p1165
          $region538: #{tpu_custom_call.1} parent=535 // pred_check_branch
            %1168 = sbr.rel (%p1166) target = $region540
          $region539: #{tpu_custom_call.1} parent=535 // pred_region
            %s1169 = sadd.s32 %s1163, 0
            %s1170 = sld [smem:[#allocation5 + %s1169]]
            %s1171 = sadd.s32 %s1164, 0
            %s1172 = scalar_lea.vmem %s2, %s1170
            %s1173 = scalar_lea.vmem [#allocation2], %s1171
            %s1174 = scalar_lea.sflag [#allocation3], %s1158
            %p1176 = scmp.lt.u32.totalorder 1, 8
            %p1177 = pneg %p1176
            // Predicated region
            $region541: #{tpu_custom_call.1} parent=539 // pred_check
              _
            $region542: #{tpu_custom_call.1} parent=539 // pred_check_branch
              %1179 = sbr.rel (%p1176) target = $region544
            $region543: #{tpu_custom_call.1} parent=539 // pred_region
              %s1194 = sand.u32 1, 7
              %p1195 = scmp.eq.s32.totalorder %s1194, 0
              %p1196 = pneg %p1195
              // Predicated region
              $region556: #{tpu_custom_call.1} parent=543 // pred_check
                _
              $region557: #{tpu_custom_call.1} parent=543 // pred_check_branch
                %1198 = sbr.rel (%p1195) target = $region559
              $region558: #{tpu_custom_call.1} parent=543 // pred_region
                %s1199 = sand.u32 1, 7
                %s1200 = ssub.s32 1, %s1199
                %s1201 = scalar_lea.vmem %s1172, %s1200
                %s1202 = ssub.s32 1, %s1199
                %s1203 = scalar_lea.vmem %s1173, %s1202 [#allocation2]
                %s1204 = sshllo.u32 0, %s1199
                loop: start=0, step=1, limit=1
                $region560: #{tpu_custom_call.1} parent=558 // loop_pre_header
                  _
                $region561: #{tpu_custom_call.1} parent=558 // loop_header
                  %s1206 = sphi 0, %s1210
                  %p1207 = scmp.ge.s32.totalorder %s1206, 1
                  %s1211 = sphi %s1201, %s1201
                  %s1212 = sphi %s1203, %s1203
                $region562: #{tpu_custom_call.1} parent=558 // loop_header_branch
                  %1209 = sbr.rel (%p1207) target = $region566
                $region563: #{tpu_custom_call.1} parent=558 // loop_body
                  %v1213 = vld [vmem:[%s1211] sm:%s1204]
                  %1214 = vst [vmem:[%s1212] sm:%s1204] %v1213
                $region564: #{tpu_custom_call.1} parent=558 // loop_footer
                  %s1210 = sadd.s32 1, %s1206
                $region565: #{tpu_custom_call.1} parent=558 // loop_footer_branch
                  %1205 = sbr.rel target = $region561
                $region566: #{tpu_custom_call.1} parent=558 // loop_exit
                  _
              $region559: #{tpu_custom_call.1} parent=543 // pred_fallthru
                _
            $region544: #{tpu_custom_call.1} parent=539 // pred_fallthru
              _
            // Predicated region
            $region545: #{tpu_custom_call.1} parent=539 // pred_check
              %p1180 = pneg %p1176
            $region546: #{tpu_custom_call.1} parent=539 // pred_check_branch
              %1182 = sbr.rel (%p1180) target = $region548
            $region547: #{tpu_custom_call.1} parent=539 // pred_region
              %s1183 = sshllo.u32 0, 1
              loop: start=0, step=1, limit=1
              $region549: #{tpu_custom_call.1} parent=547 // loop_pre_header
                _
              $region550: #{tpu_custom_call.1} parent=547 // loop_header
                %s1185 = sphi 0, %s1189
                %p1186 = scmp.ge.s32.totalorder %s1185, 1
                %s1190 = sphi %s1172, %s1172
                %s1191 = sphi %s1173, %s1173
              $region551: #{tpu_custom_call.1} parent=547 // loop_header_branch
                %1188 = sbr.rel (%p1186) target = $region555
              $region552: #{tpu_custom_call.1} parent=547 // loop_body
                %v1192 = vld [vmem:[%s1190] sm:%s1183]
                %1193 = vst [vmem:[%s1191] sm:%s1183] %v1192
              $region553: #{tpu_custom_call.1} parent=547 // loop_footer
                %s1189 = sadd.s32 1, %s1185
              $region554: #{tpu_custom_call.1} parent=547 // loop_footer_branch
                %1184 = sbr.rel target = $region550
              $region555: #{tpu_custom_call.1} parent=547 // loop_exit
                _
            $region548: #{tpu_custom_call.1} parent=539 // pred_fallthru
              _
            // Predicated region
            $region567: #{tpu_custom_call.1} parent=539 // pred_check
              _
            $region568: #{tpu_custom_call.1} parent=539 // pred_check_branch
              %1217 = sbr.rel (0) target = $region570
            $region569: #{tpu_custom_call.1} parent=539 // pred_region
              %1218 = vsyncadd %s1174, 16
            $region570: #{tpu_custom_call.1} parent=539 // pred_fallthru
              _
            %s1219 = sadd.s32 0, 1
            %s1220 = sadd.s32 %s1163, %s1219
            %s1221 = sld [smem:[#allocation5 + %s1220]]
            %s1222 = sadd.s32 %s1164, %s1219
            %s1223 = scalar_lea.vmem %s2, %s1221
            %s1224 = scalar_lea.vmem [#allocation2], %s1222
            %p1226 = scmp.lt.u32.totalorder 1, 8
            %p1227 = pneg %p1226
            // Predicated region
            $region571: #{tpu_custom_call.1} parent=539 // pred_check
              _
            $region572: #{tpu_custom_call.1} parent=539 // pred_check_branch
              %1229 = sbr.rel (%p1226) target = $region574
            $region573: #{tpu_custom_call.1} parent=539 // pred_region
              %s1244 = sand.u32 1, 7
              %p1245 = scmp.eq.s32.totalorder %s1244, 0
              %p1246 = pneg %p1245
              // Predicated region
              $region586: #{tpu_custom_call.1} parent=573 // pred_check
                _
              $region587: #{tpu_custom_call.1} parent=573 // pred_check_branch
                %1248 = sbr.rel (%p1245) target = $region589
              $region588: #{tpu_custom_call.1} parent=573 // pred_region
                %s1249 = sand.u32 1, 7
                %s1250 = ssub.s32 1, %s1249
                %s1251 = scalar_lea.vmem %s1223, %s1250
                %s1252 = ssub.s32 1, %s1249
                %s1253 = scalar_lea.vmem %s1224, %s1252 [#allocation2]
                %s1254 = sshllo.u32 0, %s1249
                loop: start=0, step=1, limit=1
                $region590: #{tpu_custom_call.1} parent=588 // loop_pre_header
                  _
                $region591: #{tpu_custom_call.1} parent=588 // loop_header
                  %s1256 = sphi 0, %s1260
                  %p1257 = scmp.ge.s32.totalorder %s1256, 1
                  %s1261 = sphi %s1251, %s1251
                  %s1262 = sphi %s1253, %s1253
                $region592: #{tpu_custom_call.1} parent=588 // loop_header_branch
                  %1259 = sbr.rel (%p1257) target = $region596
                $region593: #{tpu_custom_call.1} parent=588 // loop_body
                  %v1263 = vld [vmem:[%s1261] sm:%s1254]
                  %1264 = vst [vmem:[%s1262] sm:%s1254] %v1263
                $region594: #{tpu_custom_call.1} parent=588 // loop_footer
                  %s1260 = sadd.s32 1, %s1256
                $region595: #{tpu_custom_call.1} parent=588 // loop_footer_branch
                  %1255 = sbr.rel target = $region591
                $region596: #{tpu_custom_call.1} parent=588 // loop_exit
                  _
              $region589: #{tpu_custom_call.1} parent=573 // pred_fallthru
                _
            $region574: #{tpu_custom_call.1} parent=539 // pred_fallthru
              _
            // Predicated region
            $region575: #{tpu_custom_call.1} parent=539 // pred_check
              %p1230 = pneg %p1226
            $region576: #{tpu_custom_call.1} parent=539 // pred_check_branch
              %1232 = sbr.rel (%p1230) target = $region578
            $region577: #{tpu_custom_call.1} parent=539 // pred_region
              %s1233 = sshllo.u32 0, 1
              loop: start=0, step=1, limit=1
              $region579: #{tpu_custom_call.1} parent=577 // loop_pre_header
                _
              $region580: #{tpu_custom_call.1} parent=577 // loop_header
                %s1235 = sphi 0, %s1239
                %p1236 = scmp.ge.s32.totalorder %s1235, 1
                %s1240 = sphi %s1223, %s1223
                %s1241 = sphi %s1224, %s1224
              $region581: #{tpu_custom_call.1} parent=577 // loop_header_branch
                %1238 = sbr.rel (%p1236) target = $region585
              $region582: #{tpu_custom_call.1} parent=577 // loop_body
                %v1242 = vld [vmem:[%s1240] sm:%s1233]
                %1243 = vst [vmem:[%s1241] sm:%s1233] %v1242
              $region583: #{tpu_custom_call.1} parent=577 // loop_footer
                %s1239 = sadd.s32 1, %s1235
              $region584: #{tpu_custom_call.1} parent=577 // loop_footer_branch
                %1234 = sbr.rel target = $region580
              $region585: #{tpu_custom_call.1} parent=577 // loop_exit
                _
            $region578: #{tpu_custom_call.1} parent=539 // pred_fallthru
              _
            // Predicated region
            $region597: #{tpu_custom_call.1} parent=539 // pred_check
              _
            $region598: #{tpu_custom_call.1} parent=539 // pred_check_branch
              %1267 = sbr.rel (0) target = $region600
            $region599: #{tpu_custom_call.1} parent=539 // pred_region
              %1268 = vsyncadd %s1174, 16
            $region600: #{tpu_custom_call.1} parent=539 // pred_fallthru
              _
            %s1269 = sadd.s32 0, 2
            %s1270 = sadd.s32 %s1163, %s1269
            %s1271 = sld [smem:[#allocation5 + %s1270]]
            %s1272 = sadd.s32 %s1164, %s1269
            %s1273 = scalar_lea.vmem %s2, %s1271
            %s1274 = scalar_lea.vmem [#allocation2], %s1272
            %p1276 = scmp.lt.u32.totalorder 1, 8
            %p1277 = pneg %p1276
            // Predicated region
            $region601: #{tpu_custom_call.1} parent=539 // pred_check
              _
            $region602: #{tpu_custom_call.1} parent=539 // pred_check_branch
              %1279 = sbr.rel (%p1276) target = $region604
            $region603: #{tpu_custom_call.1} parent=539 // pred_region
              %s1294 = sand.u32 1, 7
              %p1295 = scmp.eq.s32.totalorder %s1294, 0
              %p1296 = pneg %p1295
              // Predicated region
              $region616: #{tpu_custom_call.1} parent=603 // pred_check
                _
              $region617: #{tpu_custom_call.1} parent=603 // pred_check_branch
                %1298 = sbr.rel (%p1295) target = $region619
              $region618: #{tpu_custom_call.1} parent=603 // pred_region
                %s1299 = sand.u32 1, 7
                %s1300 = ssub.s32 1, %s1299
                %s1301 = scalar_lea.vmem %s1273, %s1300
                %s1302 = ssub.s32 1, %s1299
                %s1303 = scalar_lea.vmem %s1274, %s1302 [#allocation2]
                %s1304 = sshllo.u32 0, %s1299
                loop: start=0, step=1, limit=1
                $region620: #{tpu_custom_call.1} parent=618 // loop_pre_header
                  _
                $region621: #{tpu_custom_call.1} parent=618 // loop_header
                  %s1306 = sphi 0, %s1310
                  %p1307 = scmp.ge.s32.totalorder %s1306, 1
                  %s1311 = sphi %s1301, %s1301
                  %s1312 = sphi %s1303, %s1303
                $region622: #{tpu_custom_call.1} parent=618 // loop_header_branch
                  %1309 = sbr.rel (%p1307) target = $region626
                $region623: #{tpu_custom_call.1} parent=618 // loop_body
                  %v1313 = vld [vmem:[%s1311] sm:%s1304]
                  %1314 = vst [vmem:[%s1312] sm:%s1304] %v1313
                $region624: #{tpu_custom_call.1} parent=618 // loop_footer
                  %s1310 = sadd.s32 1, %s1306
                $region625: #{tpu_custom_call.1} parent=618 // loop_footer_branch
                  %1305 = sbr.rel target = $region621
                $region626: #{tpu_custom_call.1} parent=618 // loop_exit
                  _
              $region619: #{tpu_custom_call.1} parent=603 // pred_fallthru
                _
            $region604: #{tpu_custom_call.1} parent=539 // pred_fallthru
              _
            // Predicated region
            $region605: #{tpu_custom_call.1} parent=539 // pred_check
              %p1280 = pneg %p1276
            $region606: #{tpu_custom_call.1} parent=539 // pred_check_branch
              %1282 = sbr.rel (%p1280) target = $region608
            $region607: #{tpu_custom_call.1} parent=539 // pred_region
              %s1283 = sshllo.u32 0, 1
              loop: start=0, step=1, limit=1
              $region609: #{tpu_custom_call.1} parent=607 // loop_pre_header
                _
              $region610: #{tpu_custom_call.1} parent=607 // loop_header
                %s1285 = sphi 0, %s1289
                %p1286 = scmp.ge.s32.totalorder %s1285, 1
                %s1290 = sphi %s1273, %s1273
                %s1291 = sphi %s1274, %s1274
              $region611: #{tpu_custom_call.1} parent=607 // loop_header_branch
                %1288 = sbr.rel (%p1286) target = $region615
              $region612: #{tpu_custom_call.1} parent=607 // loop_body
                %v1292 = vld [vmem:[%s1290] sm:%s1283]
                %1293 = vst [vmem:[%s1291] sm:%s1283] %v1292
              $region613: #{tpu_custom_call.1} parent=607 // loop_footer
                %s1289 = sadd.s32 1, %s1285
              $region614: #{tpu_custom_call.1} parent=607 // loop_footer_branch
                %1284 = sbr.rel target = $region610
              $region615: #{tpu_custom_call.1} parent=607 // loop_exit
                _
            $region608: #{tpu_custom_call.1} parent=539 // pred_fallthru
              _
            // Predicated region
            $region627: #{tpu_custom_call.1} parent=539 // pred_check
              _
            $region628: #{tpu_custom_call.1} parent=539 // pred_check_branch
              %1317 = sbr.rel (0) target = $region630
            $region629: #{tpu_custom_call.1} parent=539 // pred_region
              %1318 = vsyncadd %s1174, 16
            $region630: #{tpu_custom_call.1} parent=539 // pred_fallthru
              _
            %s1319 = sadd.s32 0, 3
            %s1320 = sadd.s32 %s1163, %s1319
            %s1321 = sld [smem:[#allocation5 + %s1320]]
            %s1322 = sadd.s32 %s1164, %s1319
            %s1323 = scalar_lea.vmem %s2, %s1321
            %s1324 = scalar_lea.vmem [#allocation2], %s1322
            %p1326 = scmp.lt.u32.totalorder 1, 8
            %p1327 = pneg %p1326
            // Predicated region
            $region631: #{tpu_custom_call.1} parent=539 // pred_check
              _
            $region632: #{tpu_custom_call.1} parent=539 // pred_check_branch
              %1329 = sbr.rel (%p1326) target = $region634
            $region633: #{tpu_custom_call.1} parent=539 // pred_region
              %s1344 = sand.u32 1, 7
              %p1345 = scmp.eq.s32.totalorder %s1344, 0
              %p1346 = pneg %p1345
              // Predicated region
              $region646: #{tpu_custom_call.1} parent=633 // pred_check
                _
              $region647: #{tpu_custom_call.1} parent=633 // pred_check_branch
                %1348 = sbr.rel (%p1345) target = $region649
              $region648: #{tpu_custom_call.1} parent=633 // pred_region
                %s1349 = sand.u32 1, 7
                %s1350 = ssub.s32 1, %s1349
                %s1351 = scalar_lea.vmem %s1323, %s1350
                %s1352 = ssub.s32 1, %s1349
                %s1353 = scalar_lea.vmem %s1324, %s1352 [#allocation2]
                %s1354 = sshllo.u32 0, %s1349
                loop: start=0, step=1, limit=1
                $region650: #{tpu_custom_call.1} parent=648 // loop_pre_header
                  _
                $region651: #{tpu_custom_call.1} parent=648 // loop_header
                  %s1356 = sphi 0, %s1360
                  %p1357 = scmp.ge.s32.totalorder %s1356, 1
                  %s1361 = sphi %s1351, %s1351
                  %s1362 = sphi %s1353, %s1353
                $region652: #{tpu_custom_call.1} parent=648 // loop_header_branch
                  %1359 = sbr.rel (%p1357) target = $region656
                $region653: #{tpu_custom_call.1} parent=648 // loop_body
                  %v1363 = vld [vmem:[%s1361] sm:%s1354]
                  %1364 = vst [vmem:[%s1362] sm:%s1354] %v1363
                $region654: #{tpu_custom_call.1} parent=648 // loop_footer
                  %s1360 = sadd.s32 1, %s1356
                $region655: #{tpu_custom_call.1} parent=648 // loop_footer_branch
                  %1355 = sbr.rel target = $region651
                $region656: #{tpu_custom_call.1} parent=648 // loop_exit
                  _
              $region649: #{tpu_custom_call.1} parent=633 // pred_fallthru
                _
            $region634: #{tpu_custom_call.1} parent=539 // pred_fallthru
              _
            // Predicated region
            $region635: #{tpu_custom_call.1} parent=539 // pred_check
              %p1330 = pneg %p1326
            $region636: #{tpu_custom_call.1} parent=539 // pred_check_branch
              %1332 = sbr.rel (%p1330) target = $region638
            $region637: #{tpu_custom_call.1} parent=539 // pred_region
              %s1333 = sshllo.u32 0, 1
              loop: start=0, step=1, limit=1
              $region639: #{tpu_custom_call.1} parent=637 // loop_pre_header
                _
              $region640: #{tpu_custom_call.1} parent=637 // loop_header
                %s1335 = sphi 0, %s1339
                %p1336 = scmp.ge.s32.totalorder %s1335, 1
                %s1340 = sphi %s1323, %s1323
                %s1341 = sphi %s1324, %s1324
              $region641: #{tpu_custom_call.1} parent=637 // loop_header_branch
                %1338 = sbr.rel (%p1336) target = $region645
              $region642: #{tpu_custom_call.1} parent=637 // loop_body
                %v1342 = vld [vmem:[%s1340] sm:%s1333]
                %1343 = vst [vmem:[%s1341] sm:%s1333] %v1342
              $region643: #{tpu_custom_call.1} parent=637 // loop_footer
                %s1339 = sadd.s32 1, %s1335
              $region644: #{tpu_custom_call.1} parent=637 // loop_footer_branch
                %1334 = sbr.rel target = $region640
              $region645: #{tpu_custom_call.1} parent=637 // loop_exit
                _
            $region638: #{tpu_custom_call.1} parent=539 // pred_fallthru
              _
            // Predicated region
            $region657: #{tpu_custom_call.1} parent=539 // pred_check
              _
            $region658: #{tpu_custom_call.1} parent=539 // pred_check_branch
              %1367 = sbr.rel (0) target = $region660
            $region659: #{tpu_custom_call.1} parent=539 // pred_region
              %1368 = vsyncadd %s1174, 16
            $region660: #{tpu_custom_call.1} parent=539 // pred_fallthru
              _
            %s1369 = sadd.s32 0, 4
            %s1370 = sadd.s32 %s1163, %s1369
            %s1371 = sld [smem:[#allocation5 + %s1370]]
            %s1372 = sadd.s32 %s1164, %s1369
            %s1373 = scalar_lea.vmem %s2, %s1371
            %s1374 = scalar_lea.vmem [#allocation2], %s1372
            %p1376 = scmp.lt.u32.totalorder 1, 8
            %p1377 = pneg %p1376
            // Predicated region
            $region661: #{tpu_custom_call.1} parent=539 // pred_check
              _
            $region662: #{tpu_custom_call.1} parent=539 // pred_check_branch
              %1379 = sbr.rel (%p1376) target = $region664
            $region663: #{tpu_custom_call.1} parent=539 // pred_region
              %s1394 = sand.u32 1, 7
              %p1395 = scmp.eq.s32.totalorder %s1394, 0
              %p1396 = pneg %p1395
              // Predicated region
              $region676: #{tpu_custom_call.1} parent=663 // pred_check
                _
              $region677: #{tpu_custom_call.1} parent=663 // pred_check_branch
                %1398 = sbr.rel (%p1395) target = $region679
              $region678: #{tpu_custom_call.1} parent=663 // pred_region
                %s1399 = sand.u32 1, 7
                %s1400 = ssub.s32 1, %s1399
                %s1401 = scalar_lea.vmem %s1373, %s1400
                %s1402 = ssub.s32 1, %s1399
                %s1403 = scalar_lea.vmem %s1374, %s1402 [#allocation2]
                %s1404 = sshllo.u32 0, %s1399
                loop: start=0, step=1, limit=1
                $region680: #{tpu_custom_call.1} parent=678 // loop_pre_header
                  _
                $region681: #{tpu_custom_call.1} parent=678 // loop_header
                  %s1406 = sphi 0, %s1410
                  %p1407 = scmp.ge.s32.totalorder %s1406, 1
                  %s1411 = sphi %s1401, %s1401
                  %s1412 = sphi %s1403, %s1403
                $region682: #{tpu_custom_call.1} parent=678 // loop_header_branch
                  %1409 = sbr.rel (%p1407) target = $region686
                $region683: #{tpu_custom_call.1} parent=678 // loop_body
                  %v1413 = vld [vmem:[%s1411] sm:%s1404]
                  %1414 = vst [vmem:[%s1412] sm:%s1404] %v1413
                $region684: #{tpu_custom_call.1} parent=678 // loop_footer
                  %s1410 = sadd.s32 1, %s1406
                $region685: #{tpu_custom_call.1} parent=678 // loop_footer_branch
                  %1405 = sbr.rel target = $region681
                $region686: #{tpu_custom_call.1} parent=678 // loop_exit
                  _
              $region679: #{tpu_custom_call.1} parent=663 // pred_fallthru
                _
            $region664: #{tpu_custom_call.1} parent=539 // pred_fallthru
              _
            // Predicated region
            $region665: #{tpu_custom_call.1} parent=539 // pred_check
              %p1380 = pneg %p1376
            $region666: #{tpu_custom_call.1} parent=539 // pred_check_branch
              %1382 = sbr.rel (%p1380) target = $region668
            $region667: #{tpu_custom_call.1} parent=539 // pred_region
              %s1383 = sshllo.u32 0, 1
              loop: start=0, step=1, limit=1
              $region669: #{tpu_custom_call.1} parent=667 // loop_pre_header
                _
              $region670: #{tpu_custom_call.1} parent=667 // loop_header
                %s1385 = sphi 0, %s1389
                %p1386 = scmp.ge.s32.totalorder %s1385, 1
                %s1390 = sphi %s1373, %s1373
                %s1391 = sphi %s1374, %s1374
              $region671: #{tpu_custom_call.1} parent=667 // loop_header_branch
                %1388 = sbr.rel (%p1386) target = $region675
              $region672: #{tpu_custom_call.1} parent=667 // loop_body
                %v1392 = vld [vmem:[%s1390] sm:%s1383]
                %1393 = vst [vmem:[%s1391] sm:%s1383] %v1392
              $region673: #{tpu_custom_call.1} parent=667 // loop_footer
                %s1389 = sadd.s32 1, %s1385
              $region674: #{tpu_custom_call.1} parent=667 // loop_footer_branch
                %1384 = sbr.rel target = $region670
              $region675: #{tpu_custom_call.1} parent=667 // loop_exit
                _
            $region668: #{tpu_custom_call.1} parent=539 // pred_fallthru
              _
            // Predicated region
            $region687: #{tpu_custom_call.1} parent=539 // pred_check
              _
            $region688: #{tpu_custom_call.1} parent=539 // pred_check_branch
              %1417 = sbr.rel (0) target = $region690
            $region689: #{tpu_custom_call.1} parent=539 // pred_region
              %1418 = vsyncadd %s1174, 16
            $region690: #{tpu_custom_call.1} parent=539 // pred_fallthru
              _
            %s1419 = sadd.s32 0, 5
            %s1420 = sadd.s32 %s1163, %s1419
            %s1421 = sld [smem:[#allocation5 + %s1420]]
            %s1422 = sadd.s32 %s1164, %s1419
            %s1423 = scalar_lea.vmem %s2, %s1421
            %s1424 = scalar_lea.vmem [#allocation2], %s1422
            %p1426 = scmp.lt.u32.totalorder 1, 8
            %p1427 = pneg %p1426
            // Predicated region
            $region691: #{tpu_custom_call.1} parent=539 // pred_check
              _
            $region692: #{tpu_custom_call.1} parent=539 // pred_check_branch
              %1429 = sbr.rel (%p1426) target = $region694
            $region693: #{tpu_custom_call.1} parent=539 // pred_region
              %s1444 = sand.u32 1, 7
              %p1445 = scmp.eq.s32.totalorder %s1444, 0
              %p1446 = pneg %p1445
              // Predicated region
              $region706: #{tpu_custom_call.1} parent=693 // pred_check
                _
              $region707: #{tpu_custom_call.1} parent=693 // pred_check_branch
                %1448 = sbr.rel (%p1445) target = $region709
              $region708: #{tpu_custom_call.1} parent=693 // pred_region
                %s1449 = sand.u32 1, 7
                %s1450 = ssub.s32 1, %s1449
                %s1451 = scalar_lea.vmem %s1423, %s1450
                %s1452 = ssub.s32 1, %s1449
                %s1453 = scalar_lea.vmem %s1424, %s1452 [#allocation2]
                %s1454 = sshllo.u32 0, %s1449
                loop: start=0, step=1, limit=1
                $region710: #{tpu_custom_call.1} parent=708 // loop_pre_header
                  _
                $region711: #{tpu_custom_call.1} parent=708 // loop_header
                  %s1456 = sphi 0, %s1460
                  %p1457 = scmp.ge.s32.totalorder %s1456, 1
                  %s1461 = sphi %s1451, %s1451
                  %s1462 = sphi %s1453, %s1453
                $region712: #{tpu_custom_call.1} parent=708 // loop_header_branch
                  %1459 = sbr.rel (%p1457) target = $region716
                $region713: #{tpu_custom_call.1} parent=708 // loop_body
                  %v1463 = vld [vmem:[%s1461] sm:%s1454]
                  %1464 = vst [vmem:[%s1462] sm:%s1454] %v1463
                $region714: #{tpu_custom_call.1} parent=708 // loop_footer
                  %s1460 = sadd.s32 1, %s1456
                $region715: #{tpu_custom_call.1} parent=708 // loop_footer_branch
                  %1455 = sbr.rel target = $region711
                $region716: #{tpu_custom_call.1} parent=708 // loop_exit
                  _
              $region709: #{tpu_custom_call.1} parent=693 // pred_fallthru
                _
            $region694: #{tpu_custom_call.1} parent=539 // pred_fallthru
              _
            // Predicated region
            $region695: #{tpu_custom_call.1} parent=539 // pred_check
              %p1430 = pneg %p1426
            $region696: #{tpu_custom_call.1} parent=539 // pred_check_branch
              %1432 = sbr.rel (%p1430) target = $region698
            $region697: #{tpu_custom_call.1} parent=539 // pred_region
              %s1433 = sshllo.u32 0, 1
              loop: start=0, step=1, limit=1
              $region699: #{tpu_custom_call.1} parent=697 // loop_pre_header
                _
              $region700: #{tpu_custom_call.1} parent=697 // loop_header
                %s1435 = sphi 0, %s1439
                %p1436 = scmp.ge.s32.totalorder %s1435, 1
                %s1440 = sphi %s1423, %s1423
                %s1441 = sphi %s1424, %s1424
              $region701: #{tpu_custom_call.1} parent=697 // loop_header_branch
                %1438 = sbr.rel (%p1436) target = $region705
              $region702: #{tpu_custom_call.1} parent=697 // loop_body
                %v1442 = vld [vmem:[%s1440] sm:%s1433]
                %1443 = vst [vmem:[%s1441] sm:%s1433] %v1442
              $region703: #{tpu_custom_call.1} parent=697 // loop_footer
                %s1439 = sadd.s32 1, %s1435
              $region704: #{tpu_custom_call.1} parent=697 // loop_footer_branch
                %1434 = sbr.rel target = $region700
              $region705: #{tpu_custom_call.1} parent=697 // loop_exit
                _
            $region698: #{tpu_custom_call.1} parent=539 // pred_fallthru
              _
            // Predicated region
            $region717: #{tpu_custom_call.1} parent=539 // pred_check
              _
            $region718: #{tpu_custom_call.1} parent=539 // pred_check_branch
              %1467 = sbr.rel (0) target = $region720
            $region719: #{tpu_custom_call.1} parent=539 // pred_region
              %1468 = vsyncadd %s1174, 16
            $region720: #{tpu_custom_call.1} parent=539 // pred_fallthru
              _
            %s1469 = sadd.s32 0, 6
            %s1470 = sadd.s32 %s1163, %s1469
            %s1471 = sld [smem:[#allocation5 + %s1470]]
            %s1472 = sadd.s32 %s1164, %s1469
            %s1473 = scalar_lea.vmem %s2, %s1471
            %s1474 = scalar_lea.vmem [#allocation2], %s1472
            %p1476 = scmp.lt.u32.totalorder 1, 8
            %p1477 = pneg %p1476
            // Predicated region
            $region721: #{tpu_custom_call.1} parent=539 // pred_check
              _
            $region722: #{tpu_custom_call.1} parent=539 // pred_check_branch
              %1479 = sbr.rel (%p1476) target = $region724
            $region723: #{tpu_custom_call.1} parent=539 // pred_region
              %s1494 = sand.u32 1, 7
              %p1495 = scmp.eq.s32.totalorder %s1494, 0
              %p1496 = pneg %p1495
              // Predicated region
              $region736: #{tpu_custom_call.1} parent=723 // pred_check
                _
              $region737: #{tpu_custom_call.1} parent=723 // pred_check_branch
                %1498 = sbr.rel (%p1495) target = $region739
              $region738: #{tpu_custom_call.1} parent=723 // pred_region
                %s1499 = sand.u32 1, 7
                %s1500 = ssub.s32 1, %s1499
                %s1501 = scalar_lea.vmem %s1473, %s1500
                %s1502 = ssub.s32 1, %s1499
                %s1503 = scalar_lea.vmem %s1474, %s1502 [#allocation2]
                %s1504 = sshllo.u32 0, %s1499
                loop: start=0, step=1, limit=1
                $region740: #{tpu_custom_call.1} parent=738 // loop_pre_header
                  _
                $region741: #{tpu_custom_call.1} parent=738 // loop_header
                  %s1506 = sphi 0, %s1510
                  %p1507 = scmp.ge.s32.totalorder %s1506, 1
                  %s1511 = sphi %s1501, %s1501
                  %s1512 = sphi %s1503, %s1503
                $region742: #{tpu_custom_call.1} parent=738 // loop_header_branch
                  %1509 = sbr.rel (%p1507) target = $region746
                $region743: #{tpu_custom_call.1} parent=738 // loop_body
                  %v1513 = vld [vmem:[%s1511] sm:%s1504]
                  %1514 = vst [vmem:[%s1512] sm:%s1504] %v1513
                $region744: #{tpu_custom_call.1} parent=738 // loop_footer
                  %s1510 = sadd.s32 1, %s1506
                $region745: #{tpu_custom_call.1} parent=738 // loop_footer_branch
                  %1505 = sbr.rel target = $region741
                $region746: #{tpu_custom_call.1} parent=738 // loop_exit
                  _
              $region739: #{tpu_custom_call.1} parent=723 // pred_fallthru
                _
            $region724: #{tpu_custom_call.1} parent=539 // pred_fallthru
              _
            // Predicated region
            $region725: #{tpu_custom_call.1} parent=539 // pred_check
              %p1480 = pneg %p1476
            $region726: #{tpu_custom_call.1} parent=539 // pred_check_branch
              %1482 = sbr.rel (%p1480) target = $region728
            $region727: #{tpu_custom_call.1} parent=539 // pred_region
              %s1483 = sshllo.u32 0, 1
              loop: start=0, step=1, limit=1
              $region729: #{tpu_custom_call.1} parent=727 // loop_pre_header
                _
              $region730: #{tpu_custom_call.1} parent=727 // loop_header
                %s1485 = sphi 0, %s1489
                %p1486 = scmp.ge.s32.totalorder %s1485, 1
                %s1490 = sphi %s1473, %s1473
                %s1491 = sphi %s1474, %s1474
              $region731: #{tpu_custom_call.1} parent=727 // loop_header_branch
                %1488 = sbr.rel (%p1486) target = $region735
              $region732: #{tpu_custom_call.1} parent=727 // loop_body
                %v1492 = vld [vmem:[%s1490] sm:%s1483]
                %1493 = vst [vmem:[%s1491] sm:%s1483] %v1492
              $region733: #{tpu_custom_call.1} parent=727 // loop_footer
                %s1489 = sadd.s32 1, %s1485
              $region734: #{tpu_custom_call.1} parent=727 // loop_footer_branch
                %1484 = sbr.rel target = $region730
              $region735: #{tpu_custom_call.1} parent=727 // loop_exit
                _
            $region728: #{tpu_custom_call.1} parent=539 // pred_fallthru
              _
            // Predicated region
            $region747: #{tpu_custom_call.1} parent=539 // pred_check
              _
            $region748: #{tpu_custom_call.1} parent=539 // pred_check_branch
              %1517 = sbr.rel (0) target = $region750
            $region749: #{tpu_custom_call.1} parent=539 // pred_region
              %1518 = vsyncadd %s1174, 16
            $region750: #{tpu_custom_call.1} parent=539 // pred_fallthru
              _
            %s1519 = sadd.s32 0, 7
            %s1520 = sadd.s32 %s1163, %s1519
            %s1521 = sld [smem:[#allocation5 + %s1520]]
            %s1522 = sadd.s32 %s1164, %s1519
            %s1523 = scalar_lea.vmem %s2, %s1521
            %s1524 = scalar_lea.vmem [#allocation2], %s1522
            %p1526 = scmp.lt.u32.totalorder 1, 8
            %p1527 = pneg %p1526
            // Predicated region
            $region751: #{tpu_custom_call.1} parent=539 // pred_check
              _
            $region752: #{tpu_custom_call.1} parent=539 // pred_check_branch
              %1529 = sbr.rel (%p1526) target = $region754
            $region753: #{tpu_custom_call.1} parent=539 // pred_region
              %s1544 = sand.u32 1, 7
              %p1545 = scmp.eq.s32.totalorder %s1544, 0
              %p1546 = pneg %p1545
              // Predicated region
              $region766: #{tpu_custom_call.1} parent=753 // pred_check
                _
              $region767: #{tpu_custom_call.1} parent=753 // pred_check_branch
                %1548 = sbr.rel (%p1545) target = $region769
              $region768: #{tpu_custom_call.1} parent=753 // pred_region
                %s1549 = sand.u32 1, 7
                %s1550 = ssub.s32 1, %s1549
                %s1551 = scalar_lea.vmem %s1523, %s1550
                %s1552 = ssub.s32 1, %s1549
                %s1553 = scalar_lea.vmem %s1524, %s1552 [#allocation2]
                %s1554 = sshllo.u32 0, %s1549
                loop: start=0, step=1, limit=1
                $region770: #{tpu_custom_call.1} parent=768 // loop_pre_header
                  _
                $region771: #{tpu_custom_call.1} parent=768 // loop_header
                  %s1556 = sphi 0, %s1560
                  %p1557 = scmp.ge.s32.totalorder %s1556, 1
                  %s1561 = sphi %s1551, %s1551
                  %s1562 = sphi %s1553, %s1553
                $region772: #{tpu_custom_call.1} parent=768 // loop_header_branch
                  %1559 = sbr.rel (%p1557) target = $region776
                $region773: #{tpu_custom_call.1} parent=768 // loop_body
                  %v1563 = vld [vmem:[%s1561] sm:%s1554]
                  %1564 = vst [vmem:[%s1562] sm:%s1554] %v1563
                $region774: #{tpu_custom_call.1} parent=768 // loop_footer
                  %s1560 = sadd.s32 1, %s1556
                $region775: #{tpu_custom_call.1} parent=768 // loop_footer_branch
                  %1555 = sbr.rel target = $region771
                $region776: #{tpu_custom_call.1} parent=768 // loop_exit
                  _
              $region769: #{tpu_custom_call.1} parent=753 // pred_fallthru
                _
            $region754: #{tpu_custom_call.1} parent=539 // pred_fallthru
              _
            // Predicated region
            $region755: #{tpu_custom_call.1} parent=539 // pred_check
              %p1530 = pneg %p1526
            $region756: #{tpu_custom_call.1} parent=539 // pred_check_branch
              %1532 = sbr.rel (%p1530) target = $region758
            $region757: #{tpu_custom_call.1} parent=539 // pred_region
              %s1533 = sshllo.u32 0, 1
              loop: start=0, step=1, limit=1
              $region759: #{tpu_custom_call.1} parent=757 // loop_pre_header
                _
              $region760: #{tpu_custom_call.1} parent=757 // loop_header
                %s1535 = sphi 0, %s1539
                %p1536 = scmp.ge.s32.totalorder %s1535, 1
                %s1540 = sphi %s1523, %s1523
                %s1541 = sphi %s1524, %s1524
              $region761: #{tpu_custom_call.1} parent=757 // loop_header_branch
                %1538 = sbr.rel (%p1536) target = $region765
              $region762: #{tpu_custom_call.1} parent=757 // loop_body
                %v1542 = vld [vmem:[%s1540] sm:%s1533]
                %1543 = vst [vmem:[%s1541] sm:%s1533] %v1542
              $region763: #{tpu_custom_call.1} parent=757 // loop_footer
                %s1539 = sadd.s32 1, %s1535
              $region764: #{tpu_custom_call.1} parent=757 // loop_footer_branch
                %1534 = sbr.rel target = $region760
              $region765: #{tpu_custom_call.1} parent=757 // loop_exit
                _
            $region758: #{tpu_custom_call.1} parent=539 // pred_fallthru
              _
            // Predicated region
            $region777: #{tpu_custom_call.1} parent=539 // pred_check
              _
            $region778: #{tpu_custom_call.1} parent=539 // pred_check_branch
              %1567 = sbr.rel (0) target = $region780
            $region779: #{tpu_custom_call.1} parent=539 // pred_region
              %1568 = vsyncadd %s1174, 16
            $region780: #{tpu_custom_call.1} parent=539 // pred_fallthru
              _
          $region540: #{tpu_custom_call.1} parent=535 // pred_fallthru
            _
          %p1569 = scmp.ne.s32.totalorder %s33, 0
          // Predicated region
          $region781: #{tpu_custom_call.1} parent=535 // pred_check
            %p1570 = pneg %p1569
          $region782: #{tpu_custom_call.1} parent=535 // pred_check_branch
            %1572 = sbr.rel (%p1570) target = $region784
          $region783: #{tpu_custom_call.1} parent=535 // pred_region
            %s1573 = sadd.s32 %s1163, 0
            %s1574 = sld [smem:[#allocation5 + %s1573]]
            %s1575 = sadd.s32 %s1164, 0
            %s1576 = scalar_lea.vmem %s3, %s1574
            %s1577 = scalar_lea.vmem [#allocation2], %s1575
            %s1578 = scalar_lea.sflag [#allocation3], %s1158
            %p1580 = scmp.lt.u32.totalorder 1, 8
            %p1581 = pneg %p1580
            // Predicated region
            $region785: #{tpu_custom_call.1} parent=783 // pred_check
              _
            $region786: #{tpu_custom_call.1} parent=783 // pred_check_branch
              %1583 = sbr.rel (%p1580) target = $region788
            $region787: #{tpu_custom_call.1} parent=783 // pred_region
              %s1598 = sand.u32 1, 7
              %p1599 = scmp.eq.s32.totalorder %s1598, 0
              %p1600 = pneg %p1599
              // Predicated region
              $region800: #{tpu_custom_call.1} parent=787 // pred_check
                _
              $region801: #{tpu_custom_call.1} parent=787 // pred_check_branch
                %1602 = sbr.rel (%p1599) target = $region803
              $region802: #{tpu_custom_call.1} parent=787 // pred_region
                %s1603 = sand.u32 1, 7
                %s1604 = ssub.s32 1, %s1603
                %s1605 = scalar_lea.vmem %s1576, %s1604
                %s1606 = ssub.s32 1, %s1603
                %s1607 = scalar_lea.vmem %s1577, %s1606 [#allocation2]
                %s1608 = sshllo.u32 0, %s1603
                loop: start=0, step=1, limit=1
                $region804: #{tpu_custom_call.1} parent=802 // loop_pre_header
                  _
                $region805: #{tpu_custom_call.1} parent=802 // loop_header
                  %s1610 = sphi 0, %s1614
                  %p1611 = scmp.ge.s32.totalorder %s1610, 1
                  %s1615 = sphi %s1605, %s1605
                  %s1616 = sphi %s1607, %s1607
                $region806: #{tpu_custom_call.1} parent=802 // loop_header_branch
                  %1613 = sbr.rel (%p1611) target = $region810
                $region807: #{tpu_custom_call.1} parent=802 // loop_body
                  %v1617 = vld [vmem:[%s1615] sm:%s1608]
                  %1618 = vst [vmem:[%s1616] sm:%s1608] %v1617
                $region808: #{tpu_custom_call.1} parent=802 // loop_footer
                  %s1614 = sadd.s32 1, %s1610
                $region809: #{tpu_custom_call.1} parent=802 // loop_footer_branch
                  %1609 = sbr.rel target = $region805
                $region810: #{tpu_custom_call.1} parent=802 // loop_exit
                  _
              $region803: #{tpu_custom_call.1} parent=787 // pred_fallthru
                _
            $region788: #{tpu_custom_call.1} parent=783 // pred_fallthru
              _
            // Predicated region
            $region789: #{tpu_custom_call.1} parent=783 // pred_check
              %p1584 = pneg %p1580
            $region790: #{tpu_custom_call.1} parent=783 // pred_check_branch
              %1586 = sbr.rel (%p1584) target = $region792
            $region791: #{tpu_custom_call.1} parent=783 // pred_region
              %s1587 = sshllo.u32 0, 1
              loop: start=0, step=1, limit=1
              $region793: #{tpu_custom_call.1} parent=791 // loop_pre_header
                _
              $region794: #{tpu_custom_call.1} parent=791 // loop_header
                %s1589 = sphi 0, %s1593
                %p1590 = scmp.ge.s32.totalorder %s1589, 1
                %s1594 = sphi %s1576, %s1576
                %s1595 = sphi %s1577, %s1577
              $region795: #{tpu_custom_call.1} parent=791 // loop_header_branch
                %1592 = sbr.rel (%p1590) target = $region799
              $region796: #{tpu_custom_call.1} parent=791 // loop_body
                %v1596 = vld [vmem:[%s1594] sm:%s1587]
                %1597 = vst [vmem:[%s1595] sm:%s1587] %v1596
              $region797: #{tpu_custom_call.1} parent=791 // loop_footer
                %s1593 = sadd.s32 1, %s1589
              $region798: #{tpu_custom_call.1} parent=791 // loop_footer_branch
                %1588 = sbr.rel target = $region794
              $region799: #{tpu_custom_call.1} parent=791 // loop_exit
                _
            $region792: #{tpu_custom_call.1} parent=783 // pred_fallthru
              _
            // Predicated region
            $region811: #{tpu_custom_call.1} parent=783 // pred_check
              _
            $region812: #{tpu_custom_call.1} parent=783 // pred_check_branch
              %1621 = sbr.rel (0) target = $region814
            $region813: #{tpu_custom_call.1} parent=783 // pred_region
              %1622 = vsyncadd %s1578, 16
            $region814: #{tpu_custom_call.1} parent=783 // pred_fallthru
              _
            %s1623 = sadd.s32 0, 1
            %s1624 = sadd.s32 %s1163, %s1623
            %s1625 = sld [smem:[#allocation5 + %s1624]]
            %s1626 = sadd.s32 %s1164, %s1623
            %s1627 = scalar_lea.vmem %s3, %s1625
            %s1628 = scalar_lea.vmem [#allocation2], %s1626
            %p1630 = scmp.lt.u32.totalorder 1, 8
            %p1631 = pneg %p1630
            // Predicated region
            $region815: #{tpu_custom_call.1} parent=783 // pred_check
              _
            $region816: #{tpu_custom_call.1} parent=783 // pred_check_branch
              %1633 = sbr.rel (%p1630) target = $region818
            $region817: #{tpu_custom_call.1} parent=783 // pred_region
              %s1648 = sand.u32 1, 7
              %p1649 = scmp.eq.s32.totalorder %s1648, 0
              %p1650 = pneg %p1649
              // Predicated region
              $region830: #{tpu_custom_call.1} parent=817 // pred_check
                _
              $region831: #{tpu_custom_call.1} parent=817 // pred_check_branch
                %1652 = sbr.rel (%p1649) target = $region833
              $region832: #{tpu_custom_call.1} parent=817 // pred_region
                %s1653 = sand.u32 1, 7
                %s1654 = ssub.s32 1, %s1653
                %s1655 = scalar_lea.vmem %s1627, %s1654
                %s1656 = ssub.s32 1, %s1653
                %s1657 = scalar_lea.vmem %s1628, %s1656 [#allocation2]
                %s1658 = sshllo.u32 0, %s1653
                loop: start=0, step=1, limit=1
                $region834: #{tpu_custom_call.1} parent=832 // loop_pre_header
                  _
                $region835: #{tpu_custom_call.1} parent=832 // loop_header
                  %s1660 = sphi 0, %s1664
                  %p1661 = scmp.ge.s32.totalorder %s1660, 1
                  %s1665 = sphi %s1655, %s1655
                  %s1666 = sphi %s1657, %s1657
                $region836: #{tpu_custom_call.1} parent=832 // loop_header_branch
                  %1663 = sbr.rel (%p1661) target = $region840
                $region837: #{tpu_custom_call.1} parent=832 // loop_body
                  %v1667 = vld [vmem:[%s1665] sm:%s1658]
                  %1668 = vst [vmem:[%s1666] sm:%s1658] %v1667
                $region838: #{tpu_custom_call.1} parent=832 // loop_footer
                  %s1664 = sadd.s32 1, %s1660
                $region839: #{tpu_custom_call.1} parent=832 // loop_footer_branch
                  %1659 = sbr.rel target = $region835
                $region840: #{tpu_custom_call.1} parent=832 // loop_exit
                  _
              $region833: #{tpu_custom_call.1} parent=817 // pred_fallthru
                _
            $region818: #{tpu_custom_call.1} parent=783 // pred_fallthru
              _
            // Predicated region
            $region819: #{tpu_custom_call.1} parent=783 // pred_check
              %p1634 = pneg %p1630
            $region820: #{tpu_custom_call.1} parent=783 // pred_check_branch
              %1636 = sbr.rel (%p1634) target = $region822
            $region821: #{tpu_custom_call.1} parent=783 // pred_region
              %s1637 = sshllo.u32 0, 1
              loop: start=0, step=1, limit=1
              $region823: #{tpu_custom_call.1} parent=821 // loop_pre_header
                _
              $region824: #{tpu_custom_call.1} parent=821 // loop_header
                %s1639 = sphi 0, %s1643
                %p1640 = scmp.ge.s32.totalorder %s1639, 1
                %s1644 = sphi %s1627, %s1627
                %s1645 = sphi %s1628, %s1628
              $region825: #{tpu_custom_call.1} parent=821 // loop_header_branch
                %1642 = sbr.rel (%p1640) target = $region829
              $region826: #{tpu_custom_call.1} parent=821 // loop_body
                %v1646 = vld [vmem:[%s1644] sm:%s1637]
                %1647 = vst [vmem:[%s1645] sm:%s1637] %v1646
              $region827: #{tpu_custom_call.1} parent=821 // loop_footer
                %s1643 = sadd.s32 1, %s1639
              $region828: #{tpu_custom_call.1} parent=821 // loop_footer_branch
                %1638 = sbr.rel target = $region824
              $region829: #{tpu_custom_call.1} parent=821 // loop_exit
                _
            $region822: #{tpu_custom_call.1} parent=783 // pred_fallthru
              _
            // Predicated region
            $region841: #{tpu_custom_call.1} parent=783 // pred_check
              _
            $region842: #{tpu_custom_call.1} parent=783 // pred_check_branch
              %1671 = sbr.rel (0) target = $region844
            $region843: #{tpu_custom_call.1} parent=783 // pred_region
              %1672 = vsyncadd %s1578, 16
            $region844: #{tpu_custom_call.1} parent=783 // pred_fallthru
              _
            %s1673 = sadd.s32 0, 2
            %s1674 = sadd.s32 %s1163, %s1673
            %s1675 = sld [smem:[#allocation5 + %s1674]]
            %s1676 = sadd.s32 %s1164, %s1673
            %s1677 = scalar_lea.vmem %s3, %s1675
            %s1678 = scalar_lea.vmem [#allocation2], %s1676
            %p1680 = scmp.lt.u32.totalorder 1, 8
            %p1681 = pneg %p1680
            // Predicated region
            $region845: #{tpu_custom_call.1} parent=783 // pred_check
              _
            $region846: #{tpu_custom_call.1} parent=783 // pred_check_branch
              %1683 = sbr.rel (%p1680) target = $region848
            $region847: #{tpu_custom_call.1} parent=783 // pred_region
              %s1698 = sand.u32 1, 7
              %p1699 = scmp.eq.s32.totalorder %s1698, 0
              %p1700 = pneg %p1699
              // Predicated region
              $region860: #{tpu_custom_call.1} parent=847 // pred_check
                _
              $region861: #{tpu_custom_call.1} parent=847 // pred_check_branch
                %1702 = sbr.rel (%p1699) target = $region863
              $region862: #{tpu_custom_call.1} parent=847 // pred_region
                %s1703 = sand.u32 1, 7
                %s1704 = ssub.s32 1, %s1703
                %s1705 = scalar_lea.vmem %s1677, %s1704
                %s1706 = ssub.s32 1, %s1703
                %s1707 = scalar_lea.vmem %s1678, %s1706 [#allocation2]
                %s1708 = sshllo.u32 0, %s1703
                loop: start=0, step=1, limit=1
                $region864: #{tpu_custom_call.1} parent=862 // loop_pre_header
                  _
                $region865: #{tpu_custom_call.1} parent=862 // loop_header
                  %s1710 = sphi 0, %s1714
                  %p1711 = scmp.ge.s32.totalorder %s1710, 1
                  %s1715 = sphi %s1705, %s1705
                  %s1716 = sphi %s1707, %s1707
                $region866: #{tpu_custom_call.1} parent=862 // loop_header_branch
                  %1713 = sbr.rel (%p1711) target = $region870
                $region867: #{tpu_custom_call.1} parent=862 // loop_body
                  %v1717 = vld [vmem:[%s1715] sm:%s1708]
                  %1718 = vst [vmem:[%s1716] sm:%s1708] %v1717
                $region868: #{tpu_custom_call.1} parent=862 // loop_footer
                  %s1714 = sadd.s32 1, %s1710
                $region869: #{tpu_custom_call.1} parent=862 // loop_footer_branch
                  %1709 = sbr.rel target = $region865
                $region870: #{tpu_custom_call.1} parent=862 // loop_exit
                  _
              $region863: #{tpu_custom_call.1} parent=847 // pred_fallthru
                _
            $region848: #{tpu_custom_call.1} parent=783 // pred_fallthru
              _
            // Predicated region
            $region849: #{tpu_custom_call.1} parent=783 // pred_check
              %p1684 = pneg %p1680
            $region850: #{tpu_custom_call.1} parent=783 // pred_check_branch
              %1686 = sbr.rel (%p1684) target = $region852
            $region851: #{tpu_custom_call.1} parent=783 // pred_region
              %s1687 = sshllo.u32 0, 1
              loop: start=0, step=1, limit=1
              $region853: #{tpu_custom_call.1} parent=851 // loop_pre_header
                _
              $region854: #{tpu_custom_call.1} parent=851 // loop_header
                %s1689 = sphi 0, %s1693
                %p1690 = scmp.ge.s32.totalorder %s1689, 1
                %s1694 = sphi %s1677, %s1677
                %s1695 = sphi %s1678, %s1678
              $region855: #{tpu_custom_call.1} parent=851 // loop_header_branch
                %1692 = sbr.rel (%p1690) target = $region859
              $region856: #{tpu_custom_call.1} parent=851 // loop_body
                %v1696 = vld [vmem:[%s1694] sm:%s1687]
                %1697 = vst [vmem:[%s1695] sm:%s1687] %v1696
              $region857: #{tpu_custom_call.1} parent=851 // loop_footer
                %s1693 = sadd.s32 1, %s1689
              $region858: #{tpu_custom_call.1} parent=851 // loop_footer_branch
                %1688 = sbr.rel target = $region854
              $region859: #{tpu_custom_call.1} parent=851 // loop_exit
                _
            $region852: #{tpu_custom_call.1} parent=783 // pred_fallthru
              _
            // Predicated region
            $region871: #{tpu_custom_call.1} parent=783 // pred_check
              _
            $region872: #{tpu_custom_call.1} parent=783 // pred_check_branch
              %1721 = sbr.rel (0) target = $region874
            $region873: #{tpu_custom_call.1} parent=783 // pred_region
              %1722 = vsyncadd %s1578, 16
            $region874: #{tpu_custom_call.1} parent=783 // pred_fallthru
              _
            %s1723 = sadd.s32 0, 3
            %s1724 = sadd.s32 %s1163, %s1723
            %s1725 = sld [smem:[#allocation5 + %s1724]]
            %s1726 = sadd.s32 %s1164, %s1723
            %s1727 = scalar_lea.vmem %s3, %s1725
            %s1728 = scalar_lea.vmem [#allocation2], %s1726
            %p1730 = scmp.lt.u32.totalorder 1, 8
            %p1731 = pneg %p1730
            // Predicated region
            $region875: #{tpu_custom_call.1} parent=783 // pred_check
              _
            $region876: #{tpu_custom_call.1} parent=783 // pred_check_branch
              %1733 = sbr.rel (%p1730) target = $region878
            $region877: #{tpu_custom_call.1} parent=783 // pred_region
              %s1748 = sand.u32 1, 7
              %p1749 = scmp.eq.s32.totalorder %s1748, 0
              %p1750 = pneg %p1749
              // Predicated region
              $region890: #{tpu_custom_call.1} parent=877 // pred_check
                _
              $region891: #{tpu_custom_call.1} parent=877 // pred_check_branch
                %1752 = sbr.rel (%p1749) target = $region893
              $region892: #{tpu_custom_call.1} parent=877 // pred_region
                %s1753 = sand.u32 1, 7
                %s1754 = ssub.s32 1, %s1753
                %s1755 = scalar_lea.vmem %s1727, %s1754
                %s1756 = ssub.s32 1, %s1753
                %s1757 = scalar_lea.vmem %s1728, %s1756 [#allocation2]
                %s1758 = sshllo.u32 0, %s1753
                loop: start=0, step=1, limit=1
                $region894: #{tpu_custom_call.1} parent=892 // loop_pre_header
                  _
                $region895: #{tpu_custom_call.1} parent=892 // loop_header
                  %s1760 = sphi 0, %s1764
                  %p1761 = scmp.ge.s32.totalorder %s1760, 1
                  %s1765 = sphi %s1755, %s1755
                  %s1766 = sphi %s1757, %s1757
                $region896: #{tpu_custom_call.1} parent=892 // loop_header_branch
                  %1763 = sbr.rel (%p1761) target = $region900
                $region897: #{tpu_custom_call.1} parent=892 // loop_body
                  %v1767 = vld [vmem:[%s1765] sm:%s1758]
                  %1768 = vst [vmem:[%s1766] sm:%s1758] %v1767
                $region898: #{tpu_custom_call.1} parent=892 // loop_footer
                  %s1764 = sadd.s32 1, %s1760
                $region899: #{tpu_custom_call.1} parent=892 // loop_footer_branch
                  %1759 = sbr.rel target = $region895
                $region900: #{tpu_custom_call.1} parent=892 // loop_exit
                  _
              $region893: #{tpu_custom_call.1} parent=877 // pred_fallthru
                _
            $region878: #{tpu_custom_call.1} parent=783 // pred_fallthru
              _
            // Predicated region
            $region879: #{tpu_custom_call.1} parent=783 // pred_check
              %p1734 = pneg %p1730
            $region880: #{tpu_custom_call.1} parent=783 // pred_check_branch
              %1736 = sbr.rel (%p1734) target = $region882
            $region881: #{tpu_custom_call.1} parent=783 // pred_region
              %s1737 = sshllo.u32 0, 1
              loop: start=0, step=1, limit=1
              $region883: #{tpu_custom_call.1} parent=881 // loop_pre_header
                _
              $region884: #{tpu_custom_call.1} parent=881 // loop_header
                %s1739 = sphi 0, %s1743
                %p1740 = scmp.ge.s32.totalorder %s1739, 1
                %s1744 = sphi %s1727, %s1727
                %s1745 = sphi %s1728, %s1728
              $region885: #{tpu_custom_call.1} parent=881 // loop_header_branch
                %1742 = sbr.rel (%p1740) target = $region889
              $region886: #{tpu_custom_call.1} parent=881 // loop_body
                %v1746 = vld [vmem:[%s1744] sm:%s1737]
                %1747 = vst [vmem:[%s1745] sm:%s1737] %v1746
              $region887: #{tpu_custom_call.1} parent=881 // loop_footer
                %s1743 = sadd.s32 1, %s1739
              $region888: #{tpu_custom_call.1} parent=881 // loop_footer_branch
                %1738 = sbr.rel target = $region884
              $region889: #{tpu_custom_call.1} parent=881 // loop_exit
                _
            $region882: #{tpu_custom_call.1} parent=783 // pred_fallthru
              _
            // Predicated region
            $region901: #{tpu_custom_call.1} parent=783 // pred_check
              _
            $region902: #{tpu_custom_call.1} parent=783 // pred_check_branch
              %1771 = sbr.rel (0) target = $region904
            $region903: #{tpu_custom_call.1} parent=783 // pred_region
              %1772 = vsyncadd %s1578, 16
            $region904: #{tpu_custom_call.1} parent=783 // pred_fallthru
              _
            %s1773 = sadd.s32 0, 4
            %s1774 = sadd.s32 %s1163, %s1773
            %s1775 = sld [smem:[#allocation5 + %s1774]]
            %s1776 = sadd.s32 %s1164, %s1773
            %s1777 = scalar_lea.vmem %s3, %s1775
            %s1778 = scalar_lea.vmem [#allocation2], %s1776
            %p1780 = scmp.lt.u32.totalorder 1, 8
            %p1781 = pneg %p1780
            // Predicated region
            $region905: #{tpu_custom_call.1} parent=783 // pred_check
              _
            $region906: #{tpu_custom_call.1} parent=783 // pred_check_branch
              %1783 = sbr.rel (%p1780) target = $region908
            $region907: #{tpu_custom_call.1} parent=783 // pred_region
              %s1798 = sand.u32 1, 7
              %p1799 = scmp.eq.s32.totalorder %s1798, 0
              %p1800 = pneg %p1799
              // Predicated region
              $region920: #{tpu_custom_call.1} parent=907 // pred_check
                _
              $region921: #{tpu_custom_call.1} parent=907 // pred_check_branch
                %1802 = sbr.rel (%p1799) target = $region923
              $region922: #{tpu_custom_call.1} parent=907 // pred_region
                %s1803 = sand.u32 1, 7
                %s1804 = ssub.s32 1, %s1803
                %s1805 = scalar_lea.vmem %s1777, %s1804
                %s1806 = ssub.s32 1, %s1803
                %s1807 = scalar_lea.vmem %s1778, %s1806 [#allocation2]
                %s1808 = sshllo.u32 0, %s1803
                loop: start=0, step=1, limit=1
                $region924: #{tpu_custom_call.1} parent=922 // loop_pre_header
                  _
                $region925: #{tpu_custom_call.1} parent=922 // loop_header
                  %s1810 = sphi 0, %s1814
                  %p1811 = scmp.ge.s32.totalorder %s1810, 1
                  %s1815 = sphi %s1805, %s1805
                  %s1816 = sphi %s1807, %s1807
                $region926: #{tpu_custom_call.1} parent=922 // loop_header_branch
                  %1813 = sbr.rel (%p1811) target = $region930
                $region927: #{tpu_custom_call.1} parent=922 // loop_body
                  %v1817 = vld [vmem:[%s1815] sm:%s1808]
                  %1818 = vst [vmem:[%s1816] sm:%s1808] %v1817
                $region928: #{tpu_custom_call.1} parent=922 // loop_footer
                  %s1814 = sadd.s32 1, %s1810
                $region929: #{tpu_custom_call.1} parent=922 // loop_footer_branch
                  %1809 = sbr.rel target = $region925
                $region930: #{tpu_custom_call.1} parent=922 // loop_exit
                  _
              $region923: #{tpu_custom_call.1} parent=907 // pred_fallthru
                _
            $region908: #{tpu_custom_call.1} parent=783 // pred_fallthru
              _
            // Predicated region
            $region909: #{tpu_custom_call.1} parent=783 // pred_check
              %p1784 = pneg %p1780
            $region910: #{tpu_custom_call.1} parent=783 // pred_check_branch
              %1786 = sbr.rel (%p1784) target = $region912
            $region911: #{tpu_custom_call.1} parent=783 // pred_region
              %s1787 = sshllo.u32 0, 1
              loop: start=0, step=1, limit=1
              $region913: #{tpu_custom_call.1} parent=911 // loop_pre_header
                _
              $region914: #{tpu_custom_call.1} parent=911 // loop_header
                %s1789 = sphi 0, %s1793
                %p1790 = scmp.ge.s32.totalorder %s1789, 1
                %s1794 = sphi %s1777, %s1777
                %s1795 = sphi %s1778, %s1778
              $region915: #{tpu_custom_call.1} parent=911 // loop_header_branch
                %1792 = sbr.rel (%p1790) target = $region919
              $region916: #{tpu_custom_call.1} parent=911 // loop_body
                %v1796 = vld [vmem:[%s1794] sm:%s1787]
                %1797 = vst [vmem:[%s1795] sm:%s1787] %v1796
              $region917: #{tpu_custom_call.1} parent=911 // loop_footer
                %s1793 = sadd.s32 1, %s1789
              $region918: #{tpu_custom_call.1} parent=911 // loop_footer_branch
                %1788 = sbr.rel target = $region914
              $region919: #{tpu_custom_call.1} parent=911 // loop_exit
                _
            $region912: #{tpu_custom_call.1} parent=783 // pred_fallthru
              _
            // Predicated region
            $region931: #{tpu_custom_call.1} parent=783 // pred_check
              _
            $region932: #{tpu_custom_call.1} parent=783 // pred_check_branch
              %1821 = sbr.rel (0) target = $region934
            $region933: #{tpu_custom_call.1} parent=783 // pred_region
              %1822 = vsyncadd %s1578, 16
            $region934: #{tpu_custom_call.1} parent=783 // pred_fallthru
              _
            %s1823 = sadd.s32 0, 5
            %s1824 = sadd.s32 %s1163, %s1823
            %s1825 = sld [smem:[#allocation5 + %s1824]]
            %s1826 = sadd.s32 %s1164, %s1823
            %s1827 = scalar_lea.vmem %s3, %s1825
            %s1828 = scalar_lea.vmem [#allocation2], %s1826
            %p1830 = scmp.lt.u32.totalorder 1, 8
            %p1831 = pneg %p1830
            // Predicated region
            $region935: #{tpu_custom_call.1} parent=783 // pred_check
              _
            $region936: #{tpu_custom_call.1} parent=783 // pred_check_branch
              %1833 = sbr.rel (%p1830) target = $region938
            $region937: #{tpu_custom_call.1} parent=783 // pred_region
              %s1848 = sand.u32 1, 7
              %p1849 = scmp.eq.s32.totalorder %s1848, 0
              %p1850 = pneg %p1849
              // Predicated region
              $region950: #{tpu_custom_call.1} parent=937 // pred_check
                _
              $region951: #{tpu_custom_call.1} parent=937 // pred_check_branch
                %1852 = sbr.rel (%p1849) target = $region953
              $region952: #{tpu_custom_call.1} parent=937 // pred_region
                %s1853 = sand.u32 1, 7
                %s1854 = ssub.s32 1, %s1853
                %s1855 = scalar_lea.vmem %s1827, %s1854
                %s1856 = ssub.s32 1, %s1853
                %s1857 = scalar_lea.vmem %s1828, %s1856 [#allocation2]
                %s1858 = sshllo.u32 0, %s1853
                loop: start=0, step=1, limit=1
                $region954: #{tpu_custom_call.1} parent=952 // loop_pre_header
                  _
                $region955: #{tpu_custom_call.1} parent=952 // loop_header
                  %s1860 = sphi 0, %s1864
                  %p1861 = scmp.ge.s32.totalorder %s1860, 1
                  %s1865 = sphi %s1855, %s1855
                  %s1866 = sphi %s1857, %s1857
                $region956: #{tpu_custom_call.1} parent=952 // loop_header_branch
                  %1863 = sbr.rel (%p1861) target = $region960
                $region957: #{tpu_custom_call.1} parent=952 // loop_body
                  %v1867 = vld [vmem:[%s1865] sm:%s1858]
                  %1868 = vst [vmem:[%s1866] sm:%s1858] %v1867
                $region958: #{tpu_custom_call.1} parent=952 // loop_footer
                  %s1864 = sadd.s32 1, %s1860
                $region959: #{tpu_custom_call.1} parent=952 // loop_footer_branch
                  %1859 = sbr.rel target = $region955
                $region960: #{tpu_custom_call.1} parent=952 // loop_exit
                  _
              $region953: #{tpu_custom_call.1} parent=937 // pred_fallthru
                _
            $region938: #{tpu_custom_call.1} parent=783 // pred_fallthru
              _
            // Predicated region
            $region939: #{tpu_custom_call.1} parent=783 // pred_check
              %p1834 = pneg %p1830
            $region940: #{tpu_custom_call.1} parent=783 // pred_check_branch
              %1836 = sbr.rel (%p1834) target = $region942
            $region941: #{tpu_custom_call.1} parent=783 // pred_region
              %s1837 = sshllo.u32 0, 1
              loop: start=0, step=1, limit=1
              $region943: #{tpu_custom_call.1} parent=941 // loop_pre_header
                _
              $region944: #{tpu_custom_call.1} parent=941 // loop_header
                %s1839 = sphi 0, %s1843
                %p1840 = scmp.ge.s32.totalorder %s1839, 1
                %s1844 = sphi %s1827, %s1827
                %s1845 = sphi %s1828, %s1828
              $region945: #{tpu_custom_call.1} parent=941 // loop_header_branch
                %1842 = sbr.rel (%p1840) target = $region949
              $region946: #{tpu_custom_call.1} parent=941 // loop_body
                %v1846 = vld [vmem:[%s1844] sm:%s1837]
                %1847 = vst [vmem:[%s1845] sm:%s1837] %v1846
              $region947: #{tpu_custom_call.1} parent=941 // loop_footer
                %s1843 = sadd.s32 1, %s1839
              $region948: #{tpu_custom_call.1} parent=941 // loop_footer_branch
                %1838 = sbr.rel target = $region944
              $region949: #{tpu_custom_call.1} parent=941 // loop_exit
                _
            $region942: #{tpu_custom_call.1} parent=783 // pred_fallthru
              _
            // Predicated region
            $region961: #{tpu_custom_call.1} parent=783 // pred_check
              _
            $region962: #{tpu_custom_call.1} parent=783 // pred_check_branch
              %1871 = sbr.rel (0) target = $region964
            $region963: #{tpu_custom_call.1} parent=783 // pred_region
              %1872 = vsyncadd %s1578, 16
            $region964: #{tpu_custom_call.1} parent=783 // pred_fallthru
              _
            %s1873 = sadd.s32 0, 6
            %s1874 = sadd.s32 %s1163, %s1873
            %s1875 = sld [smem:[#allocation5 + %s1874]]
            %s1876 = sadd.s32 %s1164, %s1873
            %s1877 = scalar_lea.vmem %s3, %s1875
            %s1878 = scalar_lea.vmem [#allocation2], %s1876
            %p1880 = scmp.lt.u32.totalorder 1, 8
            %p1881 = pneg %p1880
            // Predicated region
            $region965: #{tpu_custom_call.1} parent=783 // pred_check
              _
            $region966: #{tpu_custom_call.1} parent=783 // pred_check_branch
              %1883 = sbr.rel (%p1880) target = $region968
            $region967: #{tpu_custom_call.1} parent=783 // pred_region
              %s1898 = sand.u32 1, 7
              %p1899 = scmp.eq.s32.totalorder %s1898, 0
              %p1900 = pneg %p1899
              // Predicated region
              $region980: #{tpu_custom_call.1} parent=967 // pred_check
                _
              $region981: #{tpu_custom_call.1} parent=967 // pred_check_branch
                %1902 = sbr.rel (%p1899) target = $region983
              $region982: #{tpu_custom_call.1} parent=967 // pred_region
                %s1903 = sand.u32 1, 7
                %s1904 = ssub.s32 1, %s1903
                %s1905 = scalar_lea.vmem %s1877, %s1904
                %s1906 = ssub.s32 1, %s1903
                %s1907 = scalar_lea.vmem %s1878, %s1906 [#allocation2]
                %s1908 = sshllo.u32 0, %s1903
                loop: start=0, step=1, limit=1
                $region984: #{tpu_custom_call.1} parent=982 // loop_pre_header
                  _
                $region985: #{tpu_custom_call.1} parent=982 // loop_header
                  %s1910 = sphi 0, %s1914
                  %p1911 = scmp.ge.s32.totalorder %s1910, 1
                  %s1915 = sphi %s1905, %s1905
                  %s1916 = sphi %s1907, %s1907
                $region986: #{tpu_custom_call.1} parent=982 // loop_header_branch
                  %1913 = sbr.rel (%p1911) target = $region990
                $region987: #{tpu_custom_call.1} parent=982 // loop_body
                  %v1917 = vld [vmem:[%s1915] sm:%s1908]
                  %1918 = vst [vmem:[%s1916] sm:%s1908] %v1917
                $region988: #{tpu_custom_call.1} parent=982 // loop_footer
                  %s1914 = sadd.s32 1, %s1910
                $region989: #{tpu_custom_call.1} parent=982 // loop_footer_branch
                  %1909 = sbr.rel target = $region985
                $region990: #{tpu_custom_call.1} parent=982 // loop_exit
                  _
              $region983: #{tpu_custom_call.1} parent=967 // pred_fallthru
                _
            $region968: #{tpu_custom_call.1} parent=783 // pred_fallthru
              _
            // Predicated region
            $region969: #{tpu_custom_call.1} parent=783 // pred_check
              %p1884 = pneg %p1880
            $region970: #{tpu_custom_call.1} parent=783 // pred_check_branch
              %1886 = sbr.rel (%p1884) target = $region972
            $region971: #{tpu_custom_call.1} parent=783 // pred_region
              %s1887 = sshllo.u32 0, 1
              loop: start=0, step=1, limit=1
              $region973: #{tpu_custom_call.1} parent=971 // loop_pre_header
                _
              $region974: #{tpu_custom_call.1} parent=971 // loop_header
                %s1889 = sphi 0, %s1893
                %p1890 = scmp.ge.s32.totalorder %s1889, 1
                %s1894 = sphi %s1877, %s1877
                %s1895 = sphi %s1878, %s1878
              $region975: #{tpu_custom_call.1} parent=971 // loop_header_branch
                %1892 = sbr.rel (%p1890) target = $region979
              $region976: #{tpu_custom_call.1} parent=971 // loop_body
                %v1896 = vld [vmem:[%s1894] sm:%s1887]
                %1897 = vst [vmem:[%s1895] sm:%s1887] %v1896
              $region977: #{tpu_custom_call.1} parent=971 // loop_footer
                %s1893 = sadd.s32 1, %s1889
              $region978: #{tpu_custom_call.1} parent=971 // loop_footer_branch
                %1888 = sbr.rel target = $region974
              $region979: #{tpu_custom_call.1} parent=971 // loop_exit
                _
            $region972: #{tpu_custom_call.1} parent=783 // pred_fallthru
              _
            // Predicated region
            $region991: #{tpu_custom_call.1} parent=783 // pred_check
              _
            $region992: #{tpu_custom_call.1} parent=783 // pred_check_branch
              %1921 = sbr.rel (0) target = $region994
            $region993: #{tpu_custom_call.1} parent=783 // pred_region
              %1922 = vsyncadd %s1578, 16
            $region994: #{tpu_custom_call.1} parent=783 // pred_fallthru
              _
            %s1923 = sadd.s32 0, 7
            %s1924 = sadd.s32 %s1163, %s1923
            %s1925 = sld [smem:[#allocation5 + %s1924]]
            %s1926 = sadd.s32 %s1164, %s1923
            %s1927 = scalar_lea.vmem %s3, %s1925
            %s1928 = scalar_lea.vmem [#allocation2], %s1926
            %p1930 = scmp.lt.u32.totalorder 1, 8
            %p1931 = pneg %p1930
            // Predicated region
            $region995: #{tpu_custom_call.1} parent=783 // pred_check
              _
            $region996: #{tpu_custom_call.1} parent=783 // pred_check_branch
              %1933 = sbr.rel (%p1930) target = $region998
            $region997: #{tpu_custom_call.1} parent=783 // pred_region
              %s1948 = sand.u32 1, 7
              %p1949 = scmp.eq.s32.totalorder %s1948, 0
              %p1950 = pneg %p1949
              // Predicated region
              $region1010: #{tpu_custom_call.1} parent=997 // pred_check
                _
              $region1011: #{tpu_custom_call.1} parent=997 // pred_check_branch
                %1952 = sbr.rel (%p1949) target = $region1013
              $region1012: #{tpu_custom_call.1} parent=997 // pred_region
                %s1953 = sand.u32 1, 7
                %s1954 = ssub.s32 1, %s1953
                %s1955 = scalar_lea.vmem %s1927, %s1954
                %s1956 = ssub.s32 1, %s1953
                %s1957 = scalar_lea.vmem %s1928, %s1956 [#allocation2]
                %s1958 = sshllo.u32 0, %s1953
                loop: start=0, step=1, limit=1
                $region1014: #{tpu_custom_call.1} parent=1012 // loop_pre_header
                  _
                $region1015: #{tpu_custom_call.1} parent=1012 // loop_header
                  %s1960 = sphi 0, %s1964
                  %p1961 = scmp.ge.s32.totalorder %s1960, 1
                  %s1965 = sphi %s1955, %s1955
                  %s1966 = sphi %s1957, %s1957
                $region1016: #{tpu_custom_call.1} parent=1012 // loop_header_branch
                  %1963 = sbr.rel (%p1961) target = $region1020
                $region1017: #{tpu_custom_call.1} parent=1012 // loop_body
                  %v1967 = vld [vmem:[%s1965] sm:%s1958]
                  %1968 = vst [vmem:[%s1966] sm:%s1958] %v1967
                $region1018: #{tpu_custom_call.1} parent=1012 // loop_footer
                  %s1964 = sadd.s32 1, %s1960
                $region1019: #{tpu_custom_call.1} parent=1012 // loop_footer_branch
                  %1959 = sbr.rel target = $region1015
                $region1020: #{tpu_custom_call.1} parent=1012 // loop_exit
                  _
              $region1013: #{tpu_custom_call.1} parent=997 // pred_fallthru
                _
            $region998: #{tpu_custom_call.1} parent=783 // pred_fallthru
              _
            // Predicated region
            $region999: #{tpu_custom_call.1} parent=783 // pred_check
              %p1934 = pneg %p1930
            $region1000: #{tpu_custom_call.1} parent=783 // pred_check_branch
              %1936 = sbr.rel (%p1934) target = $region1002
            $region1001: #{tpu_custom_call.1} parent=783 // pred_region
              %s1937 = sshllo.u32 0, 1
              loop: start=0, step=1, limit=1
              $region1003: #{tpu_custom_call.1} parent=1001 // loop_pre_header
                _
              $region1004: #{tpu_custom_call.1} parent=1001 // loop_header
                %s1939 = sphi 0, %s1943
                %p1940 = scmp.ge.s32.totalorder %s1939, 1
                %s1944 = sphi %s1927, %s1927
                %s1945 = sphi %s1928, %s1928
              $region1005: #{tpu_custom_call.1} parent=1001 // loop_header_branch
                %1942 = sbr.rel (%p1940) target = $region1009
              $region1006: #{tpu_custom_call.1} parent=1001 // loop_body
                %v1946 = vld [vmem:[%s1944] sm:%s1937]
                %1947 = vst [vmem:[%s1945] sm:%s1937] %v1946
              $region1007: #{tpu_custom_call.1} parent=1001 // loop_footer
                %s1943 = sadd.s32 1, %s1939
              $region1008: #{tpu_custom_call.1} parent=1001 // loop_footer_branch
                %1938 = sbr.rel target = $region1004
              $region1009: #{tpu_custom_call.1} parent=1001 // loop_exit
                _
            $region1002: #{tpu_custom_call.1} parent=783 // pred_fallthru
              _
            // Predicated region
            $region1021: #{tpu_custom_call.1} parent=783 // pred_check
              _
            $region1022: #{tpu_custom_call.1} parent=783 // pred_check_branch
              %1971 = sbr.rel (0) target = $region1024
            $region1023: #{tpu_custom_call.1} parent=783 // pred_region
              %1972 = vsyncadd %s1578, 16
            $region1024: #{tpu_custom_call.1} parent=783 // pred_fallthru
              _
          $region784: #{tpu_custom_call.1} parent=535 // pred_fallthru
            _
        $region536: #{tpu_custom_call.1} parent=39 // pred_fallthru
          _
        %s1973 = smul.u32 %s35, 8
        %s1974 = scalar_lea.vmem %s328, %s1973
        %v1975 = vld [vmem:[%s1974] sm:$0xff]
        %v1976 = vld [vmem:[%s324] sm:$0xff]
        %vm1977 = vcmp.eq.s32.totalorder %v1976, 0
        %v1978 = vld [vmem:[%s332] sm:$0x1]
        %v1979 = vlaneseq
        %v1980 = vshrl.u32 %v1979, 7
        %v1981 = vsub.s32 0, %v1980
        %v1982 = vrot.slane %v1978, %v1981
        %v1983 = vadd.f32 %v1975, %v1982
        %v1984 = vsel %vm1977, 1, 0
        %1985 = vset.pattern.permute.xlu0 0
        %1986 = vperm.xlu0 %1985, %v1984
        %v1987 = vpop.permute.xlu0 %1986
        %vm1988 = vcmp.eq.s32.totalorder %v1987, 1
        %v1989 = vsel %vm1988, %v1983, %v1975
        %vm1990 = vcmp.eq.s32.totalorder %v1976, 1
        %v1991 = vld [vmem:[%s332 + $0x1] sm:$0x1]
        %v1992 = vlaneseq
        %v1993 = vshrl.u32 %v1992, 7
        %v1994 = vsub.s32 0, %v1993
        %v1995 = vrot.slane %v1991, %v1994
        %v1996 = vadd.f32 %v1989, %v1995
        %v1997 = vsel %vm1990, 1, 0
        %1998 = vset.pattern.permute.xlu0 0
        %1999 = vperm.xlu0 %1998, %v1997
        %v2000 = vpop.permute.xlu0 %1999
        %vm2001 = vcmp.eq.s32.totalorder %v2000, 1
        %v2002 = vsel %vm2001, %v1996, %v1989
        %vm2003 = vcmp.eq.s32.totalorder %v1976, 2
        %v2004 = vld [vmem:[%s332 + $0x2] sm:$0x1]
        %v2005 = vlaneseq
        %v2006 = vshrl.u32 %v2005, 7
        %v2007 = vsub.s32 0, %v2006
        %v2008 = vrot.slane %v2004, %v2007
        %v2009 = vadd.f32 %v2002, %v2008
        %v2010 = vsel %vm2003, 1, 0
        %2011 = vset.pattern.permute.xlu0 0
        %2012 = vperm.xlu0 %2011, %v2010
        %v2013 = vpop.permute.xlu0 %2012
        %vm2014 = vcmp.eq.s32.totalorder %v2013, 1
        %v2015 = vsel %vm2014, %v2009, %v2002
        %vm2016 = vcmp.eq.s32.totalorder %v1976, 3
        %v2017 = vld [vmem:[%s332 + $0x3] sm:$0x1]
        %v2018 = vlaneseq
        %v2019 = vshrl.u32 %v2018, 7
        %v2020 = vsub.s32 0, %v2019
        %v2021 = vrot.slane %v2017, %v2020
        %v2022 = vadd.f32 %v2015, %v2021
        %v2023 = vsel %vm2016, 1, 0
        %2024 = vset.pattern.permute.xlu0 0
        %2025 = vperm.xlu0 %2024, %v2023
        %v2026 = vpop.permute.xlu0 %2025
        %vm2027 = vcmp.eq.s32.totalorder %v2026, 1
        %v2028 = vsel %vm2027, %v2022, %v2015
        %vm2029 = vcmp.eq.s32.totalorder %v1976, 4
        %v2030 = vld [vmem:[%s332 + $0x4] sm:$0x1]
        %v2031 = vlaneseq
        %v2032 = vshrl.u32 %v2031, 7
        %v2033 = vsub.s32 0, %v2032
        %v2034 = vrot.slane %v2030, %v2033
        %v2035 = vadd.f32 %v2028, %v2034
        %v2036 = vsel %vm2029, 1, 0
        %2037 = vset.pattern.permute.xlu0 0
        %2038 = vperm.xlu0 %2037, %v2036
        %v2039 = vpop.permute.xlu0 %2038
        %vm2040 = vcmp.eq.s32.totalorder %v2039, 1
        %v2041 = vsel %vm2040, %v2035, %v2028
        %vm2042 = vcmp.eq.s32.totalorder %v1976, 5
        %v2043 = vld [vmem:[%s332 + $0x5] sm:$0x1]
        %v2044 = vlaneseq
        %v2045 = vshrl.u32 %v2044, 7
        %v2046 = vsub.s32 0, %v2045
        %v2047 = vrot.slane %v2043, %v2046
        %v2048 = vadd.f32 %v2041, %v2047
        %v2049 = vsel %vm2042, 1, 0
        %2050 = vset.pattern.permute.xlu0 0
        %2051 = vperm.xlu0 %2050, %v2049
        %v2052 = vpop.permute.xlu0 %2051
        %vm2053 = vcmp.eq.s32.totalorder %v2052, 1
        %v2054 = vsel %vm2053, %v2048, %v2041
        %vm2055 = vcmp.eq.s32.totalorder %v1976, 6
        %v2056 = vld [vmem:[%s332 + $0x6] sm:$0x1]
        %v2057 = vlaneseq
        %v2058 = vshrl.u32 %v2057, 7
        %v2059 = vsub.s32 0, %v2058
        %v2060 = vrot.slane %v2056, %v2059
        %v2061 = vadd.f32 %v2054, %v2060
        %v2062 = vsel %vm2055, 1, 0
        %2063 = vset.pattern.permute.xlu0 0
        %2064 = vperm.xlu0 %2063, %v2062
        %v2065 = vpop.permute.xlu0 %2064
        %vm2066 = vcmp.eq.s32.totalorder %v2065, 1
        %v2067 = vsel %vm2066, %v2061, %v2054
        %vm2068 = vcmp.eq.s32.totalorder %v1976, 7
        %v2069 = vld [vmem:[%s332 + $0x7] sm:$0x1]
        %v2070 = vlaneseq
        %v2071 = vshrl.u32 %v2070, 7
        %v2072 = vsub.s32 0, %v2071
        %v2073 = vrot.slane %v2069, %v2072
        %v2074 = vadd.f32 %v2067, %v2073
        %v2075 = vsel %vm2068, 1, 0
        %2076 = vset.pattern.permute.xlu0 0
        %2077 = vperm.xlu0 %2076, %v2075
        %v2078 = vpop.permute.xlu0 %2077
        %vm2079 = vcmp.eq.s32.totalorder %v2078, 1
        %v2080 = vsel %vm2079, %v2074, %v2067
        %s2081 = smul.u32 %s339, 8
        %s2082 = scalar_lea.sflag [#allocation3], %s339
        %s2083 = smul.u32 8, 1
        %s2084 = sshll.u32 %s2083, 4
        %2085 = dma.done %s2082, %s2084
        %s2086 = scalar_lea.vmem [#allocation2], %s2081
        %v2087 = vld [vmem:[%s2086] sm:$0xff]
        %v2088 = vadd.f32 %v2080, %v2087
        %vm2089 = vcmask 261120
        %v2090 = vsel %vm2089, %v2088, 0.0
        %2091 = vadd.xlane.f32.xlu0 %v2090
        %v2092 = vpop.xlane.xlu0 %2091
        %v2093 = vrcp.pop 32.0
        %v2094 = vmul.f32 %v2092, %v2093
        %v2095 = vsub.f32 %v2088, %v2094
        %v2096 = vmul.f32 %v2095, %v2095
        %v2097 = vsel %vm2089, %v2096, 0.0
        %2098 = vadd.xlane.f32.xlu0 %v2097
        %v2099 = vpop.xlane.xlu0 %2098
        %v2100 = vmul.f32 %v2099, %v2093
        %v2101 = vadd.f32 %v2100, 1e-06
        %v2102 = vrsqrt.pop %v2101
        %v2103 = vmul.f32 %v2095, %v2102
        %v2104 = vld [vmem:[%s335] sm:$0x1]
        %v2106 = vlaneseq
        %v2107 = vshrl.u32 %v2106, 7
        %v2108 = vsub.s32 0, %v2107
        %v2109 = vrot.slane %v2104, %v2108
        %v2111 = vmul.f32 %v2103, %v2109
        %v2112 = vld [vmem:[%s338] sm:$0x1]
        %v2114 = vlaneseq
        %v2115 = vshrl.u32 %v2114, 7
        %v2116 = vsub.s32 0, %v2115
        %v2117 = vrot.slane %v2112, %v2116
        %v2119 = vadd.f32 %v2111, %v2117
        %2120 = vst.msk [vmem:[%s313] sm:$0xff] %vm2089, %v2119
        %s2121 = sand.u32 %s193, 1
        %s2122 = scalar_lea.sflag [#allocation7], %s2121
        %s2123 = sand.u32 %s193, 1
        %s2124 = smul.addr %s2123, 8
        %s2125 = scalar_lea.vmem [#allocation6], %s2124
        // Predicated region
        $region1025: #{tpu_custom_call.1} parent=39 // pred_check
          %p2126 = pneg %p203
        $region1026: #{tpu_custom_call.1} parent=39 // pred_check_branch
          %2128 = sbr.rel (%p2126) target = $region1028
        $region1027: #{tpu_custom_call.1} parent=39 // pred_region
          %s2130 = ssub.s32 128, 128
          %2131 = vsyncadd %s2122, %s2130
          %s2132 = sadd.s32 %s35, %s34
          %s2133 = smul.addr %s33, 2
          %s2134 = sadd.s32 %s2132, %s2133
          %s2135 = smul.addr %s2134, 128
          %s2136 = scalar_lea.hbm %s8, %s2135
          %s2138 = sshll.u32 %s2125, 4
          %s2139 = int_to_ptr.vmem [resolvable:$true] %s2138
          %2141 = dma.vmem_to_hbm [thread:$0]  %s2139, 128, %s2136, %s2122
        $region1028: #{tpu_custom_call.1} parent=39 // pred_fallthru
          _
      $region40: #{tpu_custom_call.1} parent=5 // pred_fallthru
        _
      %p2142 = scmp.le.s32.totalorder 2, %s23
      // Predicated region
      $region1029: #{tpu_custom_call.1} parent=5 // pred_check
        %p2143 = pneg %p2142
      $region1030: #{tpu_custom_call.1} parent=5 // pred_check_branch
        %2145 = sbr.rel (%p2143) target = $region1032
      $region1031: #{tpu_custom_call.1} parent=5 // pred_region
        %s2146 = ssub.s32 %s23, 2
        // Predicated region
        $region1033: #{tpu_custom_call.1} parent=1031 // pred_check
          %p2147 = pneg %p209
        $region1034: #{tpu_custom_call.1} parent=1031 // pred_check_branch
          %2149 = sbr.rel (%p2147) target = $region1036
        $region1035: #{tpu_custom_call.1} parent=1031 // pred_region
          %s2150 = sand.u32 %s194, 1
          %s2151 = scalar_lea.sflag [#allocation7], %s2150
          %s2152 = sand.u32 %s194, 1
          %s2153 = smul.addr %s2152, 8
          %s2154 = scalar_lea.vmem [#allocation6], %s2153
          %2155 = dma.done %s2151, 128
        $region1036: #{tpu_custom_call.1} parent=1031 // pred_fallthru
          _
      $region1032: #{tpu_custom_call.1} parent=5 // pred_fallthru
        _
    $region6: #{tpu_custom_call.1} parent=1 // loop_footer
      %s27 = sadd.s32 1, %s23
    $region7: #{tpu_custom_call.1} parent=1 // loop_footer_branch
      %22 = sbr.rel target = $region3
    $region8: #{tpu_custom_call.1} parent=1 // loop_exit
      _
    %2156 = vsyncpa [#allocation7], 1
    %s2157 = scalar_lea.sflag [#allocation7], 1
    %2158 = vsyncpa %s2157, 1
  %2159 = vsyncmov [#allocation3]
  %s2160 = vpop.sfrf %2159
  %p2161 = scmp.eq.s32.totalorder %s2160, 0
  %p2162 = pneg %p2161
  %2164 = shalt.err (%p2162)
  %s2165 = scalar_lea.sflag [#allocation3], 1
  %2166 = vsyncmov %s2165
  %s2167 = vpop.sfrf %2166
  %p2168 = scmp.eq.s32.totalorder %s2167, 0
  %p2169 = pneg %p2168
  %2171 = shalt.err (%p2169)

</llo_original>
